<compile_context>
chip_gen: v6e
topology: v6e:2x2x1
jax: 0.10.0
libtpu: 0.0.40
codegen_flags: <defaults>
</compile_context>

<pallas_src>
import numpy as np
import jax
import jax.numpy as jnp
from jax import lax
from jax.experimental import pallas as pl
from jax.experimental.pallas import tpu as pltpu

BN_EPS = 1e-5


# ----------------------------------------------------------------------------
# Fused kernel: conv1 + BN + ReLU -> conv2 (single K=2048 matmul) + BN + ReLU
#               -> collapsed FC head
# ----------------------------------------------------------------------------
def fused_decoder_kernel(p1_ref, w1_ref, b1_ref, w2_ref, b2_ref,
                         weff_ref, beff_ref, o_ref, hpad_ref, p2_ref):
    n_batch = o_ref.shape[0]
    rows2 = n_batch * 16              # conv2 output pixels (N * 4 * 4)
    rows1 = p1_ref.shape[0]           # conv1 output pixels (N * 64), polyphase order

    # ---- conv1 (1->128, k4 s2 p1) as im2col matmul + BatchNorm(batch) + ReLU ----
    h1 = jnp.dot(p1_ref[...], w1_ref[...],
                 preferred_element_type=jnp.float32) + b1_ref[...]
    m1 = jnp.mean(h1, axis=0, keepdims=True)
    v1 = jnp.mean(h1 * h1, axis=0, keepdims=True) - m1 * m1        # one-pass stats
    h1 = jnp.maximum((h1 - m1) * lax.rsqrt(v1 + BN_EPS), 0.0)      # (N*64, 128)

    # ---- conv2 (128->256, k4 s2 p1) as ONE im2col matmul (K = 16*128 = 2048) ----
    # h1 rows are grouped by polyphase (parity of the conv1-output (y,x)), so a
    # (kh, kw) tap is a uniform row shift of one contiguous phase block plus a
    # 0/1 validity mask for the padded border.  Build the patch matrix with 16
    # static slices of a zero-padded VMEM scratch, stored lane-dense into p2.
    hpad_ref[...] = jnp.zeros_like(hpad_ref)
    hpad_ref[8:8 + rows1, :] = h1                                   # h1 at offset 8

    ridx = lax.broadcasted_iota(jnp.int32, (rows2, 1), 0)
    oy = (ridx >> 2) & 3                                            # output row
    ox = ridx & 3                                                   # output col
    for kh in range(4):
        for kw in range(4):
            i, j = kh % 2, kw % 2
            dy, dx = kh // 2 - (1 - i), kw // 2 - (1 - j)           # each in {-1,0,1}
            phase = i * 2 + j
            start = 8 + phase * rows2 + 4 * dy + dx
            sl = hpad_ref[start:start + rows2, :]                   # (N*16, 128) f32
            valid = ((oy + dy >= 0) & (oy + dy <= 3) &
                     (ox + dx >= 0) & (ox + dx <= 3))
            tap = jnp.where(valid, sl, 0.0).astype(jnp.bfloat16)
            t = kh * 4 + kw
            p2_ref[:, t * 128:(t + 1) * 128] = tap

    h2 = jnp.dot(p2_ref[...], w2_ref[...],
                 preferred_element_type=jnp.float32) + b2_ref[...]  # (N*16, 256)
    m2 = jnp.mean(h2, axis=0, keepdims=True)
    v2 = jnp.mean(h2 * h2, axis=0, keepdims=True) - m2 * m2
    h2 = jnp.maximum((h2 - m2) * lax.rsqrt(v2 + BN_EPS), 0.0)       # (N*16, 256)

    # ---- collapsed FC head: out[n] = sum_{pixel, channel} h2 * W_eff + b_eff ----
    z = h2.reshape(n_batch, 16, h2.shape[1]) * weff_ref[...]        # weff (16,256)
    s = jnp.sum(z, axis=1)                                          # (N, 256)
    o_ref[...] = jnp.sum(s, axis=1, keepdims=True) + beff_ref[...]  # (N, 1)


def _full_spec(shape):
    nd = len(shape)
    return pl.BlockSpec(shape, lambda i, _nd=nd: (0,) * _nd)


def pressure_decoder(x, kp):
    x = x.astype(jnp.float32)
    if x.ndim == 2:
        x = x.reshape(1, 1, x.shape[0], x.shape[1])
    N, C, H, W = x.shape
    x_nhwc = x.reshape(N, H, W, C) if C == 1 else jnp.transpose(x, (0, 2, 3, 1))

    # conv1 im2col (exact value gather, ~8 KiB intermediate).
    # TODO(synk): fold this patch gather into the Pallas kernel as well (review
    # opt 5); doing it in-kernel needs lane-strided gathers that don't lower
    # cleanly, so this one tiny XLA op stays in the (jitted) wrapper.
    patches = lax.conv_general_dilated_patches(
        x_nhwc, filter_shape=(4, 4), window_strides=(2, 2),
        padding=((1, 1), (1, 1)),
        dimension_numbers=("NHWC", "HWIO", "NHWC"),
        precision=lax.Precision.HIGHEST)                            # (N, 8, 8, C*16)
    oh, ow = patches.shape[1], patches.shape[2]

    # Polyphase row ordering of the conv1 patch rows (pure permutation; conv1,
    # bias and BN are row-order agnostic).  Block (i, j) holds conv1-output
    # pixels with (y+1)%2 == i and (x+1)%2 == j, rows ordered (n, qy, qx).
    p4 = patches.reshape(N, oh, ow, C * 16)
    blocks = []
    for i in (0, 1):
        for j in (0, 1):
            blk = p4[:, (1 - i)::2, (1 - j)::2, :]                  # (N, 4, 4, 16)
            blocks.append(blk.reshape(N * (oh // 2) * (ow // 2), C * 16))
    patches_poly = jnp.concatenate(blocks, axis=0)                  # (N*64, 16)

    args = (patches_poly, kp["w1c"], kp["b1c"], kp["w2m"], kp["b2c"],
            kp["weff"], kp["beff"])
    out = pl.pallas_call(
        fused_decoder_kernel,
        out_shape=jax.ShapeDtypeStruct((N, 1), jnp.float32),
        grid=(1,),
        in_specs=[_full_spec(a.shape) for a in args],
        out_specs=_full_spec((N, 1)),
        scratch_shapes=[
            pltpu.VMEM((N * 64 + 16, 128), jnp.float32),    # zero-padded h1
            pltpu.VMEM((N * 16, 2048), jnp.bfloat16),       # conv2 im2col matrix
        ],
        compiler_params=pltpu.CompilerParams(dimension_semantics=("arbitrary",)),
    )(*args)
    return jnp.squeeze(out)


# ----------------------------------------------------------------------------
# One-time parameter preparation (batch-size independent):
#   * fold w1..w7 / b1..b7 into W_eff (16,256 slab) and scalar b_eff,
#   * re-layout conv2 weights as a single (2048, 256) bf16 matrix whose rows
#     are ordered (kh, kw, c_in) to match the in-kernel patch-matrix lanes.
# ----------------------------------------------------------------------------
def prepare_params(p):
    hp = lax.Precision.HIGHEST

    w_eff = p["w1"]
    b_eff = p["b1"]
    for i in range(2, 7):
        w_eff = jnp.dot(w_eff, p[f"w{i}"], precision=hp)
        b_eff = jnp.dot(b_eff, p[f"w{i}"], precision=hp) + p[f"b{i}"]
    w_eff = jnp.dot(w_eff, p["w7t"].T, precision=hp)                # (4096, 1)
    b_eff = jnp.dot(b_eff, p["w7t"].T, precision=hp) + p["b7"]      # (1, 1)

    # torch flatten order is (c, pixel): row index = c*16 + pixel.  Kernel h2 is
    # (pixel rows, channel lanes) -> reshape to (pixel, channel).
    weff2d = jnp.transpose(w_eff.reshape(256, 16))                  # (16, 256)

    # conv2 weight matrix: rows (kh, kw, c_in) to match P2 lane order; bf16.
    w2m = jnp.transpose(p["w2c"].reshape(128, 4, 4, 256),
                        (1, 2, 0, 3)).reshape(2048, 256)

    return {
        "w1c": p["w1c"], "b1c": p["b1c"],
        "w2m": w2m.astype(jnp.bfloat16), "b2c": p["b2c"],
        "weff": weff2d, "beff": b_eff,
    }


# ----------------------------------------------------------------------------
# Deterministic parameter init (PyTorch-style uniform fan-in bounds)
# ----------------------------------------------------------------------------
def init_params(key):
    def uinit(k, shape, fan_in):
        bound = 1.0 / float(np.sqrt(fan_in))
        return jax.random.uniform(k, shape, jnp.float32, -bound, bound)

    keys = iter(jax.random.split(key, 20))
    p = {}
    # conv weights stored as (C_in*kh*kw, C_out); biases as (1, C_out)
    p["w1c"] = uinit(next(keys), (1 * 4 * 4, 128), 16)
    p["b1c"] = uinit(next(keys), (1, 128), 16)
    p["w2c"] = uinit(next(keys), (128 * 4 * 4, 256), 2048)
    p["b2c"] = uinit(next(keys), (1, 256), 2048)
    dims = [4096, 2048, 1024, 512, 256, 128, 64, 1]
    for i in range(1, 7):
        fi, fo = dims[i - 1], dims[i]
        p[f"w{i}"] = uinit(next(keys), (fi, fo), fi)
        p[f"b{i}"] = uinit(next(keys), (1, fo), fi)
    # p7 weight stored transposed (1, 64)
    p["w7t"] = uinit(next(keys), (1, 64), 64)
    p["b7"] = uinit(next(keys), (1, 1), 64)
    return p


# ----------------------------------------------------------------------------
# Pure-JAX reference (mirrors the torch forward) for validation
# ----------------------------------------------------------------------------
def reference(x, p):
    x = x.astype(jnp.float32)
    if x.ndim == 2:
        x = x.reshape(1, 1, x.shape[0], x.shape[1])

    def bn_relu(h):
        mean = jnp.mean(h, axis=(0, 2, 3), keepdims=True)
        var = jnp.mean((h - mean) ** 2, axis=(0, 2, 3), keepdims=True)
        return jnp.maximum((h - mean) * lax.rsqrt(var + BN_EPS), 0.0)

    w1 = p["w1c"].T.reshape(128, 1, 4, 4)
    h = lax.conv_general_dilated(x, w1, (2, 2), ((1, 1), (1, 1)),
                                 dimension_numbers=("NCHW", "OIHW", "NCHW"),
                                 precision=lax.Precision.HIGHEST)
    h = bn_relu(h + p["b1c"].reshape(1, 128, 1, 1))

    w2 = p["w2c"].T.reshape(256, 128, 4, 4)
    h = lax.conv_general_dilated(h, w2, (2, 2), ((1, 1), (1, 1)),
                                 dimension_numbers=("NCHW", "OIHW", "NCHW"),
                                 precision=lax.Precision.HIGHEST)
    h = bn_relu(h + p["b2c"].reshape(1, 256, 1, 1))

    h = h.reshape(h.shape[0], -1)
    for i in range(1, 7):
        h = jnp.dot(h, p[f"w{i}"], precision=lax.Precision.HIGHEST) + p[f"b{i}"]
    h = jnp.dot(h, p["w7t"].T, precision=lax.Precision.HIGHEST) + p["b7"]
    return jnp.squeeze(h)


if __name__ == "__main__":
    key = jax.random.PRNGKey(0)
    kx, kparam = jax.random.split(key)
    # 16x16 single-channel input is implied by p1's 4096-dim FC input.
    x = jax.random.normal(kx, (2, 1, 16, 16), jnp.float32)

    raw = init_params(kparam)
    kp = prepare_params(raw)               # one-time, batch-size independent

    out = jax.jit(pressure_decoder)(x, kp)
    out = jax.block_until_ready(out)

    ref = reference(x, raw)
    np.testing.assert_allclose(np.asarray(out), np.asarray(ref),
                               rtol=5e-3, atol=5e-3)
    print("KERNEL_OK")
</pallas_src>

<mosaic_0001>
module attributes {stable_mosaic.version = 11 : i64} {
  func.func @fused_decoder_kernel(%arg0: i32, %arg1: memref<128x16xf32, #tpu.memory_space<vmem>>, %arg2: memref<16x128xf32, #tpu.memory_space<vmem>>, %arg3: memref<1x128xf32, #tpu.memory_space<vmem>>, %arg4: memref<2048x256xbf16, #tpu.memory_space<vmem>>, %arg5: memref<1x256xf32, #tpu.memory_space<vmem>>, %arg6: memref<16x256xf32, #tpu.memory_space<vmem>>, %arg7: memref<1x1xf32, #tpu.memory_space<vmem>>, %arg8: memref<2x1xf32, #tpu.memory_space<vmem>>, %arg9: memref<144x128xf32, #tpu.memory_space<vmem>>, %arg10: memref<32x2048xbf16, #tpu.memory_space<vmem>>) attributes {dimension_semantics = [#tpu.dimension_semantics<arbitrary>], iteration_bounds = array<i64: 1>, scalar_prefetch = 0 : i64, scratch_operands = 2 : i64, tpu.core_type = #tpu.core_type<tc>, window_params = [{pipeline_mode = #tpu.pipeline_mode<synchronous>, transform_indices = @transform_0, window_bounds = array<i64: 128, 16>}, {pipeline_mode = #tpu.pipeline_mode<synchronous>, transform_indices = @transform_1, window_bounds = array<i64: 16, 128>}, {pipeline_mode = #tpu.pipeline_mode<synchronous>, transform_indices = @transform_2, window_bounds = array<i64: 1, 128>}, {pipeline_mode = #tpu.pipeline_mode<synchronous>, transform_indices = @transform_3, window_bounds = array<i64: 2048, 256>}, {pipeline_mode = #tpu.pipeline_mode<synchronous>, transform_indices = @transform_4, window_bounds = array<i64: 1, 256>}, {pipeline_mode = #tpu.pipeline_mode<synchronous>, transform_indices = @transform_5, window_bounds = array<i64: 16, 256>}, {pipeline_mode = #tpu.pipeline_mode<synchronous>, transform_indices = @transform_6, window_bounds = array<i64: 1, 1>}, {pipeline_mode = #tpu.pipeline_mode<synchronous>, transform_indices = @transform_7, window_bounds = array<i64: 2, 1>}]} {
    %c0 = arith.constant 0 : index
    %c0_0 = arith.constant 0 : index
    %0 = vector.load %arg1[%c0, %c0_0] : memref<128x16xf32, #tpu.memory_space<vmem>>, vector<128x16xf32>
    %c0_1 = arith.constant 0 : index
    %c0_2 = arith.constant 0 : index
    %1 = vector.load %arg2[%c0_1, %c0_2] : memref<16x128xf32, #tpu.memory_space<vmem>>, vector<16x128xf32>
    %cst = arith.constant dense<0.000000e+00> : vector<128x128xf32>
    %2 = tpu.matmul %0, %1, %cst {dimension_numbers = #tpu.dot_dimension_numbers<[1], [0], [0], [1], [0, 0, 1, 1], [], []>} : vector<128x16xf32>, vector<16x128xf32>, vector<128x128xf32> -> vector<128x128xf32>
    %c0_3 = arith.constant 0 : index
    %c0_4 = arith.constant 0 : index
    %3 = vector.load %arg3[%c0_3, %c0_4] : memref<1x128xf32, #tpu.memory_space<vmem>>, vector<1x128xf32>
    %4 = vector.broadcast %3 : vector<1x128xf32> to vector<128x128xf32>
    %5 = arith.addf %2, %4 : vector<128x128xf32>
    %cst_5 = arith.constant dense<0.000000e+00> : vector<128xf32>
    %6 = vector.multi_reduction <add>, %5, %cst_5 [0] : vector<128x128xf32> to vector<128xf32>
    %7 = vector.shape_cast %6 : vector<128xf32> to vector<1x128xf32>
    %cst_6 = arith.constant 1.280000e+02 : f32
    %8 = vector.broadcast %cst_6 : f32 to vector<1x128xf32>
    %9 = arith.divf %7, %8 : vector<1x128xf32>
    %10 = arith.mulf %5, %5 : vector<128x128xf32>
    %cst_7 = arith.constant dense<0.000000e+00> : vector<128xf32>
    %11 = vector.multi_reduction <add>, %10, %cst_7 [0] : vector<128x128xf32> to vector<128xf32>
    %12 = vector.shape_cast %11 : vector<128xf32> to vector<1x128xf32>
    %cst_8 = arith.constant 1.280000e+02 : f32
    %13 = vector.broadcast %cst_8 : f32 to vector<1x128xf32>
    %14 = arith.divf %12, %13 : vector<1x128xf32>
    %15 = arith.mulf %9, %9 : vector<1x128xf32>
    %16 = arith.subf %14, %15 : vector<1x128xf32>
    %17 = vector.broadcast %9 : vector<1x128xf32> to vector<128x128xf32>
    %18 = arith.subf %5, %17 : vector<128x128xf32>
    %cst_9 = arith.constant 9.99999974E-6 : f32
    %19 = vector.broadcast %cst_9 : f32 to vector<1x128xf32>
    %20 = arith.addf %16, %19 : vector<1x128xf32>
    %21 = math.rsqrt %20 : vector<1x128xf32>
    %22 = vector.broadcast %21 : vector<1x128xf32> to vector<128x128xf32>
    %23 = arith.mulf %18, %22 : vector<128x128xf32>
    %cst_10 = arith.constant 0.000000e+00 : f32
    %24 = vector.broadcast %cst_10 : f32 to vector<128x128xf32>
    %25 = arith.maximumf %23, %24 : vector<128x128xf32>
    %cst_11 = arith.constant 0.000000e+00 : f32
    %26 = vector.broadcast %cst_11 : f32 to vector<144x128xf32>
    %c0_12 = arith.constant 0 : index
    %c0_13 = arith.constant 0 : index
    %27 = vector.load %arg9[%c0_12, %c0_13] : memref<144x128xf32, #tpu.memory_space<vmem>>, vector<144x128xf32>
    tpu.vector_store %arg9[%c0_12, %c0_13], %26 {strides = array<i32>} : memref<144x128xf32, #tpu.memory_space<vmem>>, vector<144x128xf32>,
    %c8 = arith.constant 8 : index
    %c0_14 = arith.constant 0 : index
    %28 = vector.load %arg9[%c8, %c0_14] : memref<144x128xf32, #tpu.memory_space<vmem>>, vector<128x128xf32>
    tpu.vector_store %arg9[%c8, %c0_14], %25 {strides = array<i32>} : memref<144x128xf32, #tpu.memory_space<vmem>>, vector<128x128xf32>,
    %29 = tpu.iota {dimensions = array<i32: 0>} : vector<32x1xi32>
    %c2_i32 = arith.constant 2 : i32
    %30 = vector.broadcast %c2_i32 : i32 to vector<32x1xi32>
    %31 = arith.shrsi %29, %30 : vector<32x1xi32>
    %c3_i32 = arith.constant 3 : i32
    %32 = vector.broadcast %c3_i32 : i32 to vector<32x1xi32>
    %33 = arith.andi %31, %32 : vector<32x1xi32>
    %c3_i32_15 = arith.constant 3 : i32
    %34 = vector.broadcast %c3_i32_15 : i32 to vector<32x1xi32>
    %35 = arith.andi %29, %34 : vector<32x1xi32>
    %c3 = arith.constant 3 : index
    %c0_16 = arith.constant 0 : index
    %36 = vector.load %arg9[%c3, %c0_16] : memref<144x128xf32, #tpu.memory_space<vmem>>, vector<32x128xf32>
    %c-1_i32 = arith.constant -1 : i32
    %37 = vector.broadcast %c-1_i32 : i32 to vector<32x1xi32>
    %38 = arith.addi %33, %37 : vector<32x1xi32>
    %c0_i32 = arith.constant 0 : i32
    %39 = vector.broadcast %c0_i32 : i32 to vector<32x1xi32>
    %40 = arith.cmpi sge, %38, %39 : vector<32x1xi32>
    %c-1_i32_17 = arith.constant -1 : i32
    %41 = vector.broadcast %c-1_i32_17 : i32 to vector<32x1xi32>
    %42 = arith.addi %33, %41 : vector<32x1xi32>
    %c3_i32_18 = arith.constant 3 : i32
    %43 = vector.broadcast %c3_i32_18 : i32 to vector<32x1xi32>
    %44 = arith.cmpi sle, %42, %43 : vector<32x1xi32>
    %45 = arith.andi %40, %44 : vector<32x1xi1>
    %c-1_i32_19 = arith.constant -1 : i32
    %46 = vector.broadcast %c-1_i32_19 : i32 to vector<32x1xi32>
    %47 = arith.addi %35, %46 : vector<32x1xi32>
    %c0_i32_20 = arith.constant 0 : i32
    %48 = vector.broadcast %c0_i32_20 : i32 to vector<32x1xi32>
    %49 = arith.cmpi sge, %47, %48 : vector<32x1xi32>
    %50 = arith.andi %45, %49 : vector<32x1xi1>
    %c-1_i32_21 = arith.constant -1 : i32
    %51 = vector.broadcast %c-1_i32_21 : i32 to vector<32x1xi32>
    %52 = arith.addi %35, %51 : vector<32x1xi32>
    %c3_i32_22 = arith.constant 3 : i32
    %53 = vector.broadcast %c3_i32_22 : i32 to vector<32x1xi32>
    %54 = arith.cmpi sle, %52, %53 : vector<32x1xi32>
    %55 = arith.andi %50, %54 : vector<32x1xi1>
    %cst_23 = arith.constant 0.000000e+00 : f32
    %56 = vector.shape_cast %55 : vector<32x1xi1> to vector<32x1xi1>
    %57 = vector.broadcast %56 : vector<32x1xi1> to vector<32x128xi1>
    %58 = vector.broadcast %cst_23 : f32 to vector<32x128xf32>
    %59 = arith.select %57, %36, %58 : vector<32x128xi1>, vector<32x128xf32>
    %60 = arith.truncf %59 : vector<32x128xf32> to vector<32x128xbf16>
    %c0_24 = arith.constant 0 : index
    %c0_25 = arith.constant 0 : index
    %61 = vector.load %arg10[%c0_24, %c0_25] : memref<32x2048xbf16, #tpu.memory_space<vmem>>, vector<32x128xbf16>
    tpu.vector_store %arg10[%c0_24, %c0_25], %60 {strides = array<i32>} : memref<32x2048xbf16, #tpu.memory_space<vmem>>, vector<32x128xbf16>,
    %c36 = arith.constant 36 : index
    %c0_26 = arith.constant 0 : index
    %62 = vector.load %arg9[%c36, %c0_26] : memref<144x128xf32, #tpu.memory_space<vmem>>, vector<32x128xf32>
    %c-1_i32_27 = arith.constant -1 : i32
    %63 = vector.broadcast %c-1_i32_27 : i32 to vector<32x1xi32>
    %64 = arith.addi %33, %63 : vector<32x1xi32>
    %c0_i32_28 = arith.constant 0 : i32
    %65 = vector.broadcast %c0_i32_28 : i32 to vector<32x1xi32>
    %66 = arith.cmpi sge, %64, %65 : vector<32x1xi32>
    %c-1_i32_29 = arith.constant -1 : i32
    %67 = vector.broadcast %c-1_i32_29 : i32 to vector<32x1xi32>
    %68 = arith.addi %33, %67 : vector<32x1xi32>
    %c3_i32_30 = arith.constant 3 : i32
    %69 = vector.broadcast %c3_i32_30 : i32 to vector<32x1xi32>
    %70 = arith.cmpi sle, %68, %69 : vector<32x1xi32>
    %71 = arith.andi %66, %70 : vector<32x1xi1>
    %c0_i32_31 = arith.constant 0 : i32
    %72 = vector.broadcast %c0_i32_31 : i32 to vector<32x1xi32>
    %73 = arith.addi %35, %72 : vector<32x1xi32>
    %c0_i32_32 = arith.constant 0 : i32
    %74 = vector.broadcast %c0_i32_32 : i32 to vector<32x1xi32>
    %75 = arith.cmpi sge, %73, %74 : vector<32x1xi32>
    %76 = arith.andi %71, %75 : vector<32x1xi1>
    %c0_i32_33 = arith.constant 0 : i32
    %77 = vector.broadcast %c0_i32_33 : i32 to vector<32x1xi32>
    %78 = arith.addi %35, %77 : vector<32x1xi32>
    %c3_i32_34 = arith.constant 3 : i32
    %79 = vector.broadcast %c3_i32_34 : i32 to vector<32x1xi32>
    %80 = arith.cmpi sle, %78, %79 : vector<32x1xi32>
    %81 = arith.andi %76, %80 : vector<32x1xi1>
    %cst_35 = arith.constant 0.000000e+00 : f32
    %82 = vector.shape_cast %81 : vector<32x1xi1> to vector<32x1xi1>
    %83 = vector.broadcast %82 : vector<32x1xi1> to vector<32x128xi1>
    %84 = vector.broadcast %cst_35 : f32 to vector<32x128xf32>
    %85 = arith.select %83, %62, %84 : vector<32x128xi1>, vector<32x128xf32>
    %86 = arith.truncf %85 : vector<32x128xf32> to vector<32x128xbf16>
    %c0_36 = arith.constant 0 : index
    %c128 = arith.constant 128 : index
    %87 = vector.load %arg10[%c0_36, %c128] : memref<32x2048xbf16, #tpu.memory_space<vmem>>, vector<32x128xbf16>
    tpu.vector_store %arg10[%c0_36, %c128], %86 {strides = array<i32>} : memref<32x2048xbf16, #tpu.memory_space<vmem>>, vector<32x128xbf16>,
    %c4 = arith.constant 4 : index
    %c0_37 = arith.constant 0 : index
    %88 = vector.load %arg9[%c4, %c0_37] : memref<144x128xf32, #tpu.memory_space<vmem>>, vector<32x128xf32>
    %c-1_i32_38 = arith.constant -1 : i32
    %89 = vector.broadcast %c-1_i32_38 : i32 to vector<32x1xi32>
    %90 = arith.addi %33, %89 : vector<32x1xi32>
    %c0_i32_39 = arith.constant 0 : i32
    %91 = vector.broadcast %c0_i32_39 : i32 to vector<32x1xi32>
    %92 = arith.cmpi sge, %90, %91 : vector<32x1xi32>
    %c-1_i32_40 = arith.constant -1 : i32
    %93 = vector.broadcast %c-1_i32_40 : i32 to vector<32x1xi32>
    %94 = arith.addi %33, %93 : vector<32x1xi32>
    %c3_i32_41 = arith.constant 3 : i32
    %95 = vector.broadcast %c3_i32_41 : i32 to vector<32x1xi32>
    %96 = arith.cmpi sle, %94, %95 : vector<32x1xi32>
    %97 = arith.andi %92, %96 : vector<32x1xi1>
    %c0_i32_42 = arith.constant 0 : i32
    %98 = vector.broadcast %c0_i32_42 : i32 to vector<32x1xi32>
    %99 = arith.addi %35, %98 : vector<32x1xi32>
    %c0_i32_43 = arith.constant 0 : i32
    %100 = vector.broadcast %c0_i32_43 : i32 to vector<32x1xi32>
    %101 = arith.cmpi sge, %99, %100 : vector<32x1xi32>
    %102 = arith.andi %97, %101 : vector<32x1xi1>
    %c0_i32_44 = arith.constant 0 : i32
    %103 = vector.broadcast %c0_i32_44 : i32 to vector<32x1xi32>
    %104 = arith.addi %35, %103 : vector<32x1xi32>
    %c3_i32_45 = arith.constant 3 : i32
    %105 = vector.broadcast %c3_i32_45 : i32 to vector<32x1xi32>
    %106 = arith.cmpi sle, %104, %105 : vector<32x1xi32>
    %107 = arith.andi %102, %106 : vector<32x1xi1>
    %cst_46 = arith.constant 0.000000e+00 : f32
    %108 = vector.shape_cast %107 : vector<32x1xi1> to vector<32x1xi1>
    %109 = vector.broadcast %108 : vector<32x1xi1> to vector<32x128xi1>
    %110 = vector.broadcast %cst_46 : f32 to vector<32x128xf32>
    %111 = arith.select %109, %88, %110 : vector<32x128xi1>, vector<32x128xf32>
    %112 = arith.truncf %111 : vector<32x128xf32> to vector<32x128xbf16>
    %c0_47 = arith.constant 0 : index
    %c256 = arith.constant 256 : index
    %113 = vector.load %arg10[%c0_47, %c256] : memref<32x2048xbf16, #tpu.memory_space<vmem>>, vector<32x128xbf16>
    tpu.vector_store %arg10[%c0_47, %c256], %112 {strides = array<i32>} : memref<32x2048xbf16, #tpu.memory_space<vmem>>, vector<32x128xbf16>,
    %c37 = arith.constant 37 : index
    %c0_48 = arith.constant 0 : index
    %114 = vector.load %arg9[%c37, %c0_48] : memref<144x128xf32, #tpu.memory_space<vmem>>, vector<32x128xf32>
    %c-1_i32_49 = arith.constant -1 : i32
    %115 = vector.broadcast %c-1_i32_49 : i32 to vector<32x1xi32>
    %116 = arith.addi %33, %115 : vector<32x1xi32>
    %c0_i32_50 = arith.constant 0 : i32
    %117 = vector.broadcast %c0_i32_50 : i32 to vector<32x1xi32>
    %118 = arith.cmpi sge, %116, %117 : vector<32x1xi32>
    %c-1_i32_51 = arith.constant -1 : i32
    %119 = vector.broadcast %c-1_i32_51 : i32 to vector<32x1xi32>
    %120 = arith.addi %33, %119 : vector<32x1xi32>
    %c3_i32_52 = arith.constant 3 : i32
    %121 = vector.broadcast %c3_i32_52 : i32 to vector<32x1xi32>
    %122 = arith.cmpi sle, %120, %121 : vector<32x1xi32>
    %123 = arith.andi %118, %122 : vector<32x1xi1>
    %c1_i32 = arith.constant 1 : i32
    %124 = vector.broadcast %c1_i32 : i32 to vector<32x1xi32>
    %125 = arith.addi %35, %124 : vector<32x1xi32>
    %c0_i32_53 = arith.constant 0 : i32
    %126 = vector.broadcast %c0_i32_53 : i32 to vector<32x1xi32>
    %127 = arith.cmpi sge, %125, %126 : vector<32x1xi32>
    %128 = arith.andi %123, %127 : vector<32x1xi1>
    %c1_i32_54 = arith.constant 1 : i32
    %129 = vector.broadcast %c1_i32_54 : i32 to vector<32x1xi32>
    %130 = arith.addi %35, %129 : vector<32x1xi32>
    %c3_i32_55 = arith.constant 3 : i32
    %131 = vector.broadcast %c3_i32_55 : i32 to vector<32x1xi32>
    %132 = arith.cmpi sle, %130, %131 : vector<32x1xi32>
    %133 = arith.andi %128, %132 : vector<32x1xi1>
    %cst_56 = arith.constant 0.000000e+00 : f32
    %134 = vector.shape_cast %133 : vector<32x1xi1> to vector<32x1xi1>
    %135 = vector.broadcast %134 : vector<32x1xi1> to vector<32x128xi1>
    %136 = vector.broadcast %cst_56 : f32 to vector<32x128xf32>
    %137 = arith.select %135, %114, %136 : vector<32x128xi1>, vector<32x128xf32>
    %138 = arith.truncf %137 : vector<32x128xf32> to vector<32x128xbf16>
    %c0_57 = arith.constant 0 : index
    %c384 = arith.constant 384 : index
    %139 = vector.load %arg10[%c0_57, %c384] : memref<32x2048xbf16, #tpu.memory_space<vmem>>, vector<32x128xbf16>
    tpu.vector_store %arg10[%c0_57, %c384], %138 {strides = array<i32>} : memref<32x2048xbf16, #tpu.memory_space<vmem>>, vector<32x128xbf16>,
    %c71 = arith.constant 71 : index
    %c0_58 = arith.constant 0 : index
    %140 = vector.load %arg9[%c71, %c0_58] : memref<144x128xf32, #tpu.memory_space<vmem>>, vector<32x128xf32>
    %c0_i32_59 = arith.constant 0 : i32
    %141 = vector.broadcast %c0_i32_59 : i32 to vector<32x1xi32>
    %142 = arith.addi %33, %141 : vector<32x1xi32>
    %c0_i32_60 = arith.constant 0 : i32
    %143 = vector.broadcast %c0_i32_60 : i32 to vector<32x1xi32>
    %144 = arith.cmpi sge, %142, %143 : vector<32x1xi32>
    %c0_i32_61 = arith.constant 0 : i32
    %145 = vector.broadcast %c0_i32_61 : i32 to vector<32x1xi32>
    %146 = arith.addi %33, %145 : vector<32x1xi32>
    %c3_i32_62 = arith.constant 3 : i32
    %147 = vector.broadcast %c3_i32_62 : i32 to vector<32x1xi32>
    %148 = arith.cmpi sle, %146, %147 : vector<32x1xi32>
    %149 = arith.andi %144, %148 : vector<32x1xi1>
    %c-1_i32_63 = arith.constant -1 : i32
    %150 = vector.broadcast %c-1_i32_63 : i32 to vector<32x1xi32>
    %151 = arith.addi %35, %150 : vector<32x1xi32>
    %c0_i32_64 = arith.constant 0 : i32
    %152 = vector.broadcast %c0_i32_64 : i32 to vector<32x1xi32>
    %153 = arith.cmpi sge, %151, %152 : vector<32x1xi32>
    %154 = arith.andi %149, %153 : vector<32x1xi1>
    %c-1_i32_65 = arith.constant -1 : i32
    %155 = vector.broadcast %c-1_i32_65 : i32 to vector<32x1xi32>
    %156 = arith.addi %35, %155 : vector<32x1xi32>
    %c3_i32_66 = arith.constant 3 : i32
    %157 = vector.broadcast %c3_i32_66 : i32 to vector<32x1xi32>
    %158 = arith.cmpi sle, %156, %157 : vector<32x1xi32>
    %159 = arith.andi %154, %158 : vector<32x1xi1>
    %cst_67 = arith.constant 0.000000e+00 : f32
    %160 = vector.shape_cast %159 : vector<32x1xi1> to vector<32x1xi1>
    %161 = vector.broadcast %160 : vector<32x1xi1> to vector<32x128xi1>
    %162 = vector.broadcast %cst_67 : f32 to vector<32x128xf32>
    %163 = arith.select %161, %140, %162 : vector<32x128xi1>, vector<32x128xf32>
    %164 = arith.truncf %163 : vector<32x128xf32> to vector<32x128xbf16>
    %c0_68 = arith.constant 0 : index
    %c512 = arith.constant 512 : index
    %165 = vector.load %arg10[%c0_68, %c512] : memref<32x2048xbf16, #tpu.memory_space<vmem>>, vector<32x128xbf16>
    tpu.vector_store %arg10[%c0_68, %c512], %164 {strides = array<i32>} : memref<32x2048xbf16, #tpu.memory_space<vmem>>, vector<32x128xbf16>,
    %c104 = arith.constant 104 : index
    %c0_69 = arith.constant 0 : index
    %166 = vector.load %arg9[%c104, %c0_69] : memref<144x128xf32, #tpu.memory_space<vmem>>, vector<32x128xf32>
    %c0_i32_70 = arith.constant 0 : i32
    %167 = vector.broadcast %c0_i32_70 : i32 to vector<32x1xi32>
    %168 = arith.addi %33, %167 : vector<32x1xi32>
    %c0_i32_71 = arith.constant 0 : i32
    %169 = vector.broadcast %c0_i32_71 : i32 to vector<32x1xi32>
    %170 = arith.cmpi sge, %168, %169 : vector<32x1xi32>
    %c0_i32_72 = arith.constant 0 : i32
    %171 = vector.broadcast %c0_i32_72 : i32 to vector<32x1xi32>
    %172 = arith.addi %33, %171 : vector<32x1xi32>
    %c3_i32_73 = arith.constant 3 : i32
    %173 = vector.broadcast %c3_i32_73 : i32 to vector<32x1xi32>
    %174 = arith.cmpi sle, %172, %173 : vector<32x1xi32>
    %175 = arith.andi %170, %174 : vector<32x1xi1>
    %c0_i32_74 = arith.constant 0 : i32
    %176 = vector.broadcast %c0_i32_74 : i32 to vector<32x1xi32>
    %177 = arith.addi %35, %176 : vector<32x1xi32>
    %c0_i32_75 = arith.constant 0 : i32
    %178 = vector.broadcast %c0_i32_75 : i32 to vector<32x1xi32>
    %179 = arith.cmpi sge, %177, %178 : vector<32x1xi32>
    %180 = arith.andi %175, %179 : vector<32x1xi1>
    %c0_i32_76 = arith.constant 0 : i32
    %181 = vector.broadcast %c0_i32_76 : i32 to vector<32x1xi32>
    %182 = arith.addi %35, %181 : vector<32x1xi32>
    %c3_i32_77 = arith.constant 3 : i32
    %183 = vector.broadcast %c3_i32_77 : i32 to vector<32x1xi32>
    %184 = arith.cmpi sle, %182, %183 : vector<32x1xi32>
    %185 = arith.andi %180, %184 : vector<32x1xi1>
    %cst_78 = arith.constant 0.000000e+00 : f32
    %186 = vector.shape_cast %185 : vector<32x1xi1> to vector<32x1xi1>
    %187 = vector.broadcast %186 : vector<32x1xi1> to vector<32x128xi1>
    %188 = vector.broadcast %cst_78 : f32 to vector<32x128xf32>
    %189 = arith.select %187, %166, %188 : vector<32x128xi1>, vector<32x128xf32>
    %190 = arith.truncf %189 : vector<32x128xf32> to vector<32x128xbf16>
    %c0_79 = arith.constant 0 : index
    %c640 = arith.constant 640 : index
    %191 = vector.load %arg10[%c0_79, %c640] : memref<32x2048xbf16, #tpu.memory_space<vmem>>, vector<32x128xbf16>
    tpu.vector_store %arg10[%c0_79, %c640], %190 {strides = array<i32>} : memref<32x2048xbf16, #tpu.memory_space<vmem>>, vector<32x128xbf16>,
    %c72 = arith.constant 72 : index
    %c0_80 = arith.constant 0 : index
    %192 = vector.load %arg9[%c72, %c0_80] : memref<144x128xf32, #tpu.memory_space<vmem>>, vector<32x128xf32>
    %c0_i32_81 = arith.constant 0 : i32
    %193 = vector.broadcast %c0_i32_81 : i32 to vector<32x1xi32>
    %194 = arith.addi %33, %193 : vector<32x1xi32>
    %c0_i32_82 = arith.constant 0 : i32
    %195 = vector.broadcast %c0_i32_82 : i32 to vector<32x1xi32>
    %196 = arith.cmpi sge, %194, %195 : vector<32x1xi32>
    %c0_i32_83 = arith.constant 0 : i32
    %197 = vector.broadcast %c0_i32_83 : i32 to vector<32x1xi32>
    %198 = arith.addi %33, %197 : vector<32x1xi32>
    %c3_i32_84 = arith.constant 3 : i32
    %199 = vector.broadcast %c3_i32_84 : i32 to vector<32x1xi32>
    %200 = arith.cmpi sle, %198, %199 : vector<32x1xi32>
    %201 = arith.andi %196, %200 : vector<32x1xi1>
    %c0_i32_85 = arith.constant 0 : i32
    %202 = vector.broadcast %c0_i32_85 : i32 to vector<32x1xi32>
    %203 = arith.addi %35, %202 : vector<32x1xi32>
    %c0_i32_86 = arith.constant 0 : i32
    %204 = vector.broadcast %c0_i32_86 : i32 to vector<32x1xi32>
    %205 = arith.cmpi sge, %203, %204 : vector<32x1xi32>
    %206 = arith.andi %201, %205 : vector<32x1xi1>
    %c0_i32_87 = arith.constant 0 : i32
    %207 = vector.broadcast %c0_i32_87 : i32 to vector<32x1xi32>
    %208 = arith.addi %35, %207 : vector<32x1xi32>
    %c3_i32_88 = arith.constant 3 : i32
    %209 = vector.broadcast %c3_i32_88 : i32 to vector<32x1xi32>
    %210 = arith.cmpi sle, %208, %209 : vector<32x1xi32>
    %211 = arith.andi %206, %210 : vector<32x1xi1>
    %cst_89 = arith.constant 0.000000e+00 : f32
    %212 = vector.shape_cast %211 : vector<32x1xi1> to vector<32x1xi1>
    %213 = vector.broadcast %212 : vector<32x1xi1> to vector<32x128xi1>
    %214 = vector.broadcast %cst_89 : f32 to vector<32x128xf32>
    %215 = arith.select %213, %192, %214 : vector<32x128xi1>, vector<32x128xf32>
    %216 = arith.truncf %215 : vector<32x128xf32> to vector<32x128xbf16>
    %c0_90 = arith.constant 0 : index
    %c768 = arith.constant 768 : index
    %217 = vector.load %arg10[%c0_90, %c768] : memref<32x2048xbf16, #tpu.memory_space<vmem>>, vector<32x128xbf16>
    tpu.vector_store %arg10[%c0_90, %c768], %216 {strides = array<i32>} : memref<32x2048xbf16, #tpu.memory_space<vmem>>, vector<32x128xbf16>,
    %c105 = arith.constant 105 : index
    %c0_91 = arith.constant 0 : index
    %218 = vector.load %arg9[%c105, %c0_91] : memref<144x128xf32, #tpu.memory_space<vmem>>, vector<32x128xf32>
    %c0_i32_92 = arith.constant 0 : i32
    %219 = vector.broadcast %c0_i32_92 : i32 to vector<32x1xi32>
    %220 = arith.addi %33, %219 : vector<32x1xi32>
    %c0_i32_93 = arith.constant 0 : i32
    %221 = vector.broadcast %c0_i32_93 : i32 to vector<32x1xi32>
    %222 = arith.cmpi sge, %220, %221 : vector<32x1xi32>
    %c0_i32_94 = arith.constant 0 : i32
    %223 = vector.broadcast %c0_i32_94 : i32 to vector<32x1xi32>
    %224 = arith.addi %33, %223 : vector<32x1xi32>
    %c3_i32_95 = arith.constant 3 : i32
    %225 = vector.broadcast %c3_i32_95 : i32 to vector<32x1xi32>
    %226 = arith.cmpi sle, %224, %225 : vector<32x1xi32>
    %227 = arith.andi %222, %226 : vector<32x1xi1>
    %c1_i32_96 = arith.constant 1 : i32
    %228 = vector.broadcast %c1_i32_96 : i32 to vector<32x1xi32>
    %229 = arith.addi %35, %228 : vector<32x1xi32>
    %c0_i32_97 = arith.constant 0 : i32
    %230 = vector.broadcast %c0_i32_97 : i32 to vector<32x1xi32>
    %231 = arith.cmpi sge, %229, %230 : vector<32x1xi32>
    %232 = arith.andi %227, %231 : vector<32x1xi1>
    %c1_i32_98 = arith.constant 1 : i32
    %233 = vector.broadcast %c1_i32_98 : i32 to vector<32x1xi32>
    %234 = arith.addi %35, %233 : vector<32x1xi32>
    %c3_i32_99 = arith.constant 3 : i32
    %235 = vector.broadcast %c3_i32_99 : i32 to vector<32x1xi32>
    %236 = arith.cmpi sle, %234, %235 : vector<32x1xi32>
    %237 = arith.andi %232, %236 : vector<32x1xi1>
    %cst_100 = arith.constant 0.000000e+00 : f32
    %238 = vector.shape_cast %237 : vector<32x1xi1> to vector<32x1xi1>
    %239 = vector.broadcast %238 : vector<32x1xi1> to vector<32x128xi1>
    %240 = vector.broadcast %cst_100 : f32 to vector<32x128xf32>
    %241 = arith.select %239, %218, %240 : vector<32x128xi1>, vector<32x128xf32>
    %242 = arith.truncf %241 : vector<32x128xf32> to vector<32x128xbf16>
    %c0_101 = arith.constant 0 : index
    %c896 = arith.constant 896 : index
    %243 = vector.load %arg10[%c0_101, %c896] : memref<32x2048xbf16, #tpu.memory_space<vmem>>, vector<32x128xbf16>
    tpu.vector_store %arg10[%c0_101, %c896], %242 {strides = array<i32>} : memref<32x2048xbf16, #tpu.memory_space<vmem>>, vector<32x128xbf16>,
    %c7 = arith.constant 7 : index
    %c0_102 = arith.constant 0 : index
    %244 = vector.load %arg9[%c7, %c0_102] : memref<144x128xf32, #tpu.memory_space<vmem>>, vector<32x128xf32>
    %c0_i32_103 = arith.constant 0 : i32
    %245 = vector.broadcast %c0_i32_103 : i32 to vector<32x1xi32>
    %246 = arith.addi %33, %245 : vector<32x1xi32>
    %c0_i32_104 = arith.constant 0 : i32
    %247 = vector.broadcast %c0_i32_104 : i32 to vector<32x1xi32>
    %248 = arith.cmpi sge, %246, %247 : vector<32x1xi32>
    %c0_i32_105 = arith.constant 0 : i32
    %249 = vector.broadcast %c0_i32_105 : i32 to vector<32x1xi32>
    %250 = arith.addi %33, %249 : vector<32x1xi32>
    %c3_i32_106 = arith.constant 3 : i32
    %251 = vector.broadcast %c3_i32_106 : i32 to vector<32x1xi32>
    %252 = arith.cmpi sle, %250, %251 : vector<32x1xi32>
    %253 = arith.andi %248, %252 : vector<32x1xi1>
    %c-1_i32_107 = arith.constant -1 : i32
    %254 = vector.broadcast %c-1_i32_107 : i32 to vector<32x1xi32>
    %255 = arith.addi %35, %254 : vector<32x1xi32>
    %c0_i32_108 = arith.constant 0 : i32
    %256 = vector.broadcast %c0_i32_108 : i32 to vector<32x1xi32>
    %257 = arith.cmpi sge, %255, %256 : vector<32x1xi32>
    %258 = arith.andi %253, %257 : vector<32x1xi1>
    %c-1_i32_109 = arith.constant -1 : i32
    %259 = vector.broadcast %c-1_i32_109 : i32 to vector<32x1xi32>
    %260 = arith.addi %35, %259 : vector<32x1xi32>
    %c3_i32_110 = arith.constant 3 : i32
    %261 = vector.broadcast %c3_i32_110 : i32 to vector<32x1xi32>
    %262 = arith.cmpi sle, %260, %261 : vector<32x1xi32>
    %263 = arith.andi %258, %262 : vector<32x1xi1>
    %cst_111 = arith.constant 0.000000e+00 : f32
    %264 = vector.shape_cast %263 : vector<32x1xi1> to vector<32x1xi1>
    %265 = vector.broadcast %264 : vector<32x1xi1> to vector<32x128xi1>
    %266 = vector.broadcast %cst_111 : f32 to vector<32x128xf32>
    %267 = arith.select %265, %244, %266 : vector<32x128xi1>, vector<32x128xf32>
    %268 = arith.truncf %267 : vector<32x128xf32> to vector<32x128xbf16>
    %c0_112 = arith.constant 0 : index
    %c1024 = arith.constant 1024 : index
    %269 = vector.load %arg10[%c0_112, %c1024] : memref<32x2048xbf16, #tpu.memory_space<vmem>>, vector<32x128xbf16>
    tpu.vector_store %arg10[%c0_112, %c1024], %268 {strides = array<i32>} : memref<32x2048xbf16, #tpu.memory_space<vmem>>, vector<32x128xbf16>,
    %c40 = arith.constant 40 : index
    %c0_113 = arith.constant 0 : index
    %270 = vector.load %arg9[%c40, %c0_113] : memref<144x128xf32, #tpu.memory_space<vmem>>, vector<32x128xf32>
    %c0_i32_114 = arith.constant 0 : i32
    %271 = vector.broadcast %c0_i32_114 : i32 to vector<32x1xi32>
    %272 = arith.addi %33, %271 : vector<32x1xi32>
    %c0_i32_115 = arith.constant 0 : i32
    %273 = vector.broadcast %c0_i32_115 : i32 to vector<32x1xi32>
    %274 = arith.cmpi sge, %272, %273 : vector<32x1xi32>
    %c0_i32_116 = arith.constant 0 : i32
    %275 = vector.broadcast %c0_i32_116 : i32 to vector<32x1xi32>
    %276 = arith.addi %33, %275 : vector<32x1xi32>
    %c3_i32_117 = arith.constant 3 : i32
    %277 = vector.broadcast %c3_i32_117 : i32 to vector<32x1xi32>
    %278 = arith.cmpi sle, %276, %277 : vector<32x1xi32>
    %279 = arith.andi %274, %278 : vector<32x1xi1>
    %c0_i32_118 = arith.constant 0 : i32
    %280 = vector.broadcast %c0_i32_118 : i32 to vector<32x1xi32>
    %281 = arith.addi %35, %280 : vector<32x1xi32>
    %c0_i32_119 = arith.constant 0 : i32
    %282 = vector.broadcast %c0_i32_119 : i32 to vector<32x1xi32>
    %283 = arith.cmpi sge, %281, %282 : vector<32x1xi32>
    %284 = arith.andi %279, %283 : vector<32x1xi1>
    %c0_i32_120 = arith.constant 0 : i32
    %285 = vector.broadcast %c0_i32_120 : i32 to vector<32x1xi32>
    %286 = arith.addi %35, %285 : vector<32x1xi32>
    %c3_i32_121 = arith.constant 3 : i32
    %287 = vector.broadcast %c3_i32_121 : i32 to vector<32x1xi32>
    %288 = arith.cmpi sle, %286, %287 : vector<32x1xi32>
    %289 = arith.andi %284, %288 : vector<32x1xi1>
    %cst_122 = arith.constant 0.000000e+00 : f32
    %290 = vector.shape_cast %289 : vector<32x1xi1> to vector<32x1xi1>
    %291 = vector.broadcast %290 : vector<32x1xi1> to vector<32x128xi1>
    %292 = vector.broadcast %cst_122 : f32 to vector<32x128xf32>
    %293 = arith.select %291, %270, %292 : vector<32x128xi1>, vector<32x128xf32>
    %294 = arith.truncf %293 : vector<32x128xf32> to vector<32x128xbf16>
    %c0_123 = arith.constant 0 : index
    %c1152 = arith.constant 1152 : index
    %295 = vector.load %arg10[%c0_123, %c1152] : memref<32x2048xbf16, #tpu.memory_space<vmem>>, vector<32x128xbf16>
    tpu.vector_store %arg10[%c0_123, %c1152], %294 {strides = array<i32>} : memref<32x2048xbf16, #tpu.memory_space<vmem>>, vector<32x128xbf16>,
    %c8_124 = arith.constant 8 : index
    %c0_125 = arith.constant 0 : index
    %296 = vector.load %arg9[%c8_124, %c0_125] : memref<144x128xf32, #tpu.memory_space<vmem>>, vector<32x128xf32>
    %c0_i32_126 = arith.constant 0 : i32
    %297 = vector.broadcast %c0_i32_126 : i32 to vector<32x1xi32>
    %298 = arith.addi %33, %297 : vector<32x1xi32>
    %c0_i32_127 = arith.constant 0 : i32
    %299 = vector.broadcast %c0_i32_127 : i32 to vector<32x1xi32>
    %300 = arith.cmpi sge, %298, %299 : vector<32x1xi32>
    %c0_i32_128 = arith.constant 0 : i32
    %301 = vector.broadcast %c0_i32_128 : i32 to vector<32x1xi32>
    %302 = arith.addi %33, %301 : vector<32x1xi32>
    %c3_i32_129 = arith.constant 3 : i32
    %303 = vector.broadcast %c3_i32_129 : i32 to vector<32x1xi32>
    %304 = arith.cmpi sle, %302, %303 : vector<32x1xi32>
    %305 = arith.andi %300, %304 : vector<32x1xi1>
    %c0_i32_130 = arith.constant 0 : i32
    %306 = vector.broadcast %c0_i32_130 : i32 to vector<32x1xi32>
    %307 = arith.addi %35, %306 : vector<32x1xi32>
    %c0_i32_131 = arith.constant 0 : i32
    %308 = vector.broadcast %c0_i32_131 : i32 to vector<32x1xi32>
    %309 = arith.cmpi sge, %307, %308 : vector<32x1xi32>
    %310 = arith.andi %305, %309 : vector<32x1xi1>
    %c0_i32_132 = arith.constant 0 : i32
    %311 = vector.broadcast %c0_i32_132 : i32 to vector<32x1xi32>
    %312 = arith.addi %35, %311 : vector<32x1xi32>
    %c3_i32_133 = arith.constant 3 : i32
    %313 = vector.broadcast %c3_i32_133 : i32 to vector<32x1xi32>
    %314 = arith.cmpi sle, %312, %313 : vector<32x1xi32>
    %315 = arith.andi %310, %314 : vector<32x1xi1>
    %cst_134 = arith.constant 0.000000e+00 : f32
    %316 = vector.shape_cast %315 : vector<32x1xi1> to vector<32x1xi1>
    %317 = vector.broadcast %316 : vector<32x1xi1> to vector<32x128xi1>
    %318 = vector.broadcast %cst_134 : f32 to vector<32x128xf32>
    %319 = arith.select %317, %296, %318 : vector<32x128xi1>, vector<32x128xf32>
    %320 = arith.truncf %319 : vector<32x128xf32> to vector<32x128xbf16>
    %c0_135 = arith.constant 0 : index
    %c1280 = arith.constant 1280 : index
    %321 = vector.load %arg10[%c0_135, %c1280] : memref<32x2048xbf16, #tpu.memory_space<vmem>>, vector<32x128xbf16>
    tpu.vector_store %arg10[%c0_135, %c1280], %320 {strides = array<i32>} : memref<32x2048xbf16, #tpu.memory_space<vmem>>, vector<32x128xbf16>,
    %c41 = arith.constant 41 : index
    %c0_136 = arith.constant 0 : index
    %322 = vector.load %arg9[%c41, %c0_136] : memref<144x128xf32, #tpu.memory_space<vmem>>, vector<32x128xf32>
    %c0_i32_137 = arith.constant 0 : i32
    %323 = vector.broadcast %c0_i32_137 : i32 to vector<32x1xi32>
    %324 = arith.addi %33, %323 : vector<32x1xi32>
    %c0_i32_138 = arith.constant 0 : i32
    %325 = vector.broadcast %c0_i32_138 : i32 to vector<32x1xi32>
    %326 = arith.cmpi sge, %324, %325 : vector<32x1xi32>
    %c0_i32_139 = arith.constant 0 : i32
    %327 = vector.broadcast %c0_i32_139 : i32 to vector<32x1xi32>
    %328 = arith.addi %33, %327 : vector<32x1xi32>
    %c3_i32_140 = arith.constant 3 : i32
    %329 = vector.broadcast %c3_i32_140 : i32 to vector<32x1xi32>
    %330 = arith.cmpi sle, %328, %329 : vector<32x1xi32>
    %331 = arith.andi %326, %330 : vector<32x1xi1>
    %c1_i32_141 = arith.constant 1 : i32
    %332 = vector.broadcast %c1_i32_141 : i32 to vector<32x1xi32>
    %333 = arith.addi %35, %332 : vector<32x1xi32>
    %c0_i32_142 = arith.constant 0 : i32
    %334 = vector.broadcast %c0_i32_142 : i32 to vector<32x1xi32>
    %335 = arith.cmpi sge, %333, %334 : vector<32x1xi32>
    %336 = arith.andi %331, %335 : vector<32x1xi1>
    %c1_i32_143 = arith.constant 1 : i32
    %337 = vector.broadcast %c1_i32_143 : i32 to vector<32x1xi32>
    %338 = arith.addi %35, %337 : vector<32x1xi32>
    %c3_i32_144 = arith.constant 3 : i32
    %339 = vector.broadcast %c3_i32_144 : i32 to vector<32x1xi32>
    %340 = arith.cmpi sle, %338, %339 : vector<32x1xi32>
    %341 = arith.andi %336, %340 : vector<32x1xi1>
    %cst_145 = arith.constant 0.000000e+00 : f32
    %342 = vector.shape_cast %341 : vector<32x1xi1> to vector<32x1xi1>
    %343 = vector.broadcast %342 : vector<32x1xi1> to vector<32x128xi1>
    %344 = vector.broadcast %cst_145 : f32 to vector<32x128xf32>
    %345 = arith.select %343, %322, %344 : vector<32x128xi1>, vector<32x128xf32>
    %346 = arith.truncf %345 : vector<32x128xf32> to vector<32x128xbf16>
    %c0_146 = arith.constant 0 : index
    %c1408 = arith.constant 1408 : index
    %347 = vector.load %arg10[%c0_146, %c1408] : memref<32x2048xbf16, #tpu.memory_space<vmem>>, vector<32x128xbf16>
    tpu.vector_store %arg10[%c0_146, %c1408], %346 {strides = array<i32>} : memref<32x2048xbf16, #tpu.memory_space<vmem>>, vector<32x128xbf16>,
    %c75 = arith.constant 75 : index
    %c0_147 = arith.constant 0 : index
    %348 = vector.load %arg9[%c75, %c0_147] : memref<144x128xf32, #tpu.memory_space<vmem>>, vector<32x128xf32>
    %c1_i32_148 = arith.constant 1 : i32
    %349 = vector.broadcast %c1_i32_148 : i32 to vector<32x1xi32>
    %350 = arith.addi %33, %349 : vector<32x1xi32>
    %c0_i32_149 = arith.constant 0 : i32
    %351 = vector.broadcast %c0_i32_149 : i32 to vector<32x1xi32>
    %352 = arith.cmpi sge, %350, %351 : vector<32x1xi32>
    %c1_i32_150 = arith.constant 1 : i32
    %353 = vector.broadcast %c1_i32_150 : i32 to vector<32x1xi32>
    %354 = arith.addi %33, %353 : vector<32x1xi32>
    %c3_i32_151 = arith.constant 3 : i32
    %355 = vector.broadcast %c3_i32_151 : i32 to vector<32x1xi32>
    %356 = arith.cmpi sle, %354, %355 : vector<32x1xi32>
    %357 = arith.andi %352, %356 : vector<32x1xi1>
    %c-1_i32_152 = arith.constant -1 : i32
    %358 = vector.broadcast %c-1_i32_152 : i32 to vector<32x1xi32>
    %359 = arith.addi %35, %358 : vector<32x1xi32>
    %c0_i32_153 = arith.constant 0 : i32
    %360 = vector.broadcast %c0_i32_153 : i32 to vector<32x1xi32>
    %361 = arith.cmpi sge, %359, %360 : vector<32x1xi32>
    %362 = arith.andi %357, %361 : vector<32x1xi1>
    %c-1_i32_154 = arith.constant -1 : i32
    %363 = vector.broadcast %c-1_i32_154 : i32 to vector<32x1xi32>
    %364 = arith.addi %35, %363 : vector<32x1xi32>
    %c3_i32_155 = arith.constant 3 : i32
    %365 = vector.broadcast %c3_i32_155 : i32 to vector<32x1xi32>
    %366 = arith.cmpi sle, %364, %365 : vector<32x1xi32>
    %367 = arith.andi %362, %366 : vector<32x1xi1>
    %cst_156 = arith.constant 0.000000e+00 : f32
    %368 = vector.shape_cast %367 : vector<32x1xi1> to vector<32x1xi1>
    %369 = vector.broadcast %368 : vector<32x1xi1> to vector<32x128xi1>
    %370 = vector.broadcast %cst_156 : f32 to vector<32x128xf32>
    %371 = arith.select %369, %348, %370 : vector<32x128xi1>, vector<32x128xf32>
    %372 = arith.truncf %371 : vector<32x128xf32> to vector<32x128xbf16>
    %c0_157 = arith.constant 0 : index
    %c1536 = arith.constant 1536 : index
    %373 = vector.load %arg10[%c0_157, %c1536] : memref<32x2048xbf16, #tpu.memory_space<vmem>>, vector<32x128xbf16>
    tpu.vector_store %arg10[%c0_157, %c1536], %372 {strides = array<i32>} : memref<32x2048xbf16, #tpu.memory_space<vmem>>, vector<32x128xbf16>,
    %c108 = arith.constant 108 : index
    %c0_158 = arith.constant 0 : index
    %374 = vector.load %arg9[%c108, %c0_158] : memref<144x128xf32, #tpu.memory_space<vmem>>, vector<32x128xf32>
    %c1_i32_159 = arith.constant 1 : i32
    %375 = vector.broadcast %c1_i32_159 : i32 to vector<32x1xi32>
    %376 = arith.addi %33, %375 : vector<32x1xi32>
    %c0_i32_160 = arith.constant 0 : i32
    %377 = vector.broadcast %c0_i32_160 : i32 to vector<32x1xi32>
    %378 = arith.cmpi sge, %376, %377 : vector<32x1xi32>
    %c1_i32_161 = arith.constant 1 : i32
    %379 = vector.broadcast %c1_i32_161 : i32 to vector<32x1xi32>
    %380 = arith.addi %33, %379 : vector<32x1xi32>
    %c3_i32_162 = arith.constant 3 : i32
    %381 = vector.broadcast %c3_i32_162 : i32 to vector<32x1xi32>
    %382 = arith.cmpi sle, %380, %381 : vector<32x1xi32>
    %383 = arith.andi %378, %382 : vector<32x1xi1>
    %c0_i32_163 = arith.constant 0 : i32
    %384 = vector.broadcast %c0_i32_163 : i32 to vector<32x1xi32>
    %385 = arith.addi %35, %384 : vector<32x1xi32>
    %c0_i32_164 = arith.constant 0 : i32
    %386 = vector.broadcast %c0_i32_164 : i32 to vector<32x1xi32>
    %387 = arith.cmpi sge, %385, %386 : vector<32x1xi32>
    %388 = arith.andi %383, %387 : vector<32x1xi1>
    %c0_i32_165 = arith.constant 0 : i32
    %389 = vector.broadcast %c0_i32_165 : i32 to vector<32x1xi32>
    %390 = arith.addi %35, %389 : vector<32x1xi32>
    %c3_i32_166 = arith.constant 3 : i32
    %391 = vector.broadcast %c3_i32_166 : i32 to vector<32x1xi32>
    %392 = arith.cmpi sle, %390, %391 : vector<32x1xi32>
    %393 = arith.andi %388, %392 : vector<32x1xi1>
    %cst_167 = arith.constant 0.000000e+00 : f32
    %394 = vector.shape_cast %393 : vector<32x1xi1> to vector<32x1xi1>
    %395 = vector.broadcast %394 : vector<32x1xi1> to vector<32x128xi1>
    %396 = vector.broadcast %cst_167 : f32 to vector<32x128xf32>
    %397 = arith.select %395, %374, %396 : vector<32x128xi1>, vector<32x128xf32>
    %398 = arith.truncf %397 : vector<32x128xf32> to vector<32x128xbf16>
    %c0_168 = arith.constant 0 : index
    %c1664 = arith.constant 1664 : index
    %399 = vector.load %arg10[%c0_168, %c1664] : memref<32x2048xbf16, #tpu.memory_space<vmem>>, vector<32x128xbf16>
    tpu.vector_store %arg10[%c0_168, %c1664], %398 {strides = array<i32>} : memref<32x2048xbf16, #tpu.memory_space<vmem>>, vector<32x128xbf16>,
    %c76 = arith.constant 76 : index
    %c0_169 = arith.constant 0 : index
    %400 = vector.load %arg9[%c76, %c0_169] : memref<144x128xf32, #tpu.memory_space<vmem>>, vector<32x128xf32>
    %c1_i32_170 = arith.constant 1 : i32
    %401 = vector.broadcast %c1_i32_170 : i32 to vector<32x1xi32>
    %402 = arith.addi %33, %401 : vector<32x1xi32>
    %c0_i32_171 = arith.constant 0 : i32
    %403 = vector.broadcast %c0_i32_171 : i32 to vector<32x1xi32>
    %404 = arith.cmpi sge, %402, %403 : vector<32x1xi32>
    %c1_i32_172 = arith.constant 1 : i32
    %405 = vector.broadcast %c1_i32_172 : i32 to vector<32x1xi32>
    %406 = arith.addi %33, %405 : vector<32x1xi32>
    %c3_i32_173 = arith.constant 3 : i32
    %407 = vector.broadcast %c3_i32_173 : i32 to vector<32x1xi32>
    %408 = arith.cmpi sle, %406, %407 : vector<32x1xi32>
    %409 = arith.andi %404, %408 : vector<32x1xi1>
    %c0_i32_174 = arith.constant 0 : i32
    %410 = vector.broadcast %c0_i32_174 : i32 to vector<32x1xi32>
    %411 = arith.addi %35, %410 : vector<32x1xi32>
    %c0_i32_175 = arith.constant 0 : i32
    %412 = vector.broadcast %c0_i32_175 : i32 to vector<32x1xi32>
    %413 = arith.cmpi sge, %411, %412 : vector<32x1xi32>
    %414 = arith.andi %409, %413 : vector<32x1xi1>
    %c0_i32_176 = arith.constant 0 : i32
    %415 = vector.broadcast %c0_i32_176 : i32 to vector<32x1xi32>
    %416 = arith.addi %35, %415 : vector<32x1xi32>
    %c3_i32_177 = arith.constant 3 : i32
    %417 = vector.broadcast %c3_i32_177 : i32 to vector<32x1xi32>
    %418 = arith.cmpi sle, %416, %417 : vector<32x1xi32>
    %419 = arith.andi %414, %418 : vector<32x1xi1>
    %cst_178 = arith.constant 0.000000e+00 : f32
    %420 = vector.shape_cast %419 : vector<32x1xi1> to vector<32x1xi1>
    %421 = vector.broadcast %420 : vector<32x1xi1> to vector<32x128xi1>
    %422 = vector.broadcast %cst_178 : f32 to vector<32x128xf32>
    %423 = arith.select %421, %400, %422 : vector<32x128xi1>, vector<32x128xf32>
    %424 = arith.truncf %423 : vector<32x128xf32> to vector<32x128xbf16>
    %c0_179 = arith.constant 0 : index
    %c1792 = arith.constant 1792 : index
    %425 = vector.load %arg10[%c0_179, %c1792] : memref<32x2048xbf16, #tpu.memory_space<vmem>>, vector<32x128xbf16>
    tpu.vector_store %arg10[%c0_179, %c1792], %424 {strides = array<i32>} : memref<32x2048xbf16, #tpu.memory_space<vmem>>, vector<32x128xbf16>,
    %c109 = arith.constant 109 : index
    %c0_180 = arith.constant 0 : index
    %426 = vector.load %arg9[%c109, %c0_180] : memref<144x128xf32, #tpu.memory_space<vmem>>, vector<32x128xf32>
    %c1_i32_181 = arith.constant 1 : i32
    %427 = vector.broadcast %c1_i32_181 : i32 to vector<32x1xi32>
    %428 = arith.addi %33, %427 : vector<32x1xi32>
    %c0_i32_182 = arith.constant 0 : i32
    %429 = vector.broadcast %c0_i32_182 : i32 to vector<32x1xi32>
    %430 = arith.cmpi sge, %428, %429 : vector<32x1xi32>
    %c1_i32_183 = arith.constant 1 : i32
    %431 = vector.broadcast %c1_i32_183 : i32 to vector<32x1xi32>
    %432 = arith.addi %33, %431 : vector<32x1xi32>
    %c3_i32_184 = arith.constant 3 : i32
    %433 = vector.broadcast %c3_i32_184 : i32 to vector<32x1xi32>
    %434 = arith.cmpi sle, %432, %433 : vector<32x1xi32>
    %435 = arith.andi %430, %434 : vector<32x1xi1>
    %c1_i32_185 = arith.constant 1 : i32
    %436 = vector.broadcast %c1_i32_185 : i32 to vector<32x1xi32>
    %437 = arith.addi %35, %436 : vector<32x1xi32>
    %c0_i32_186 = arith.constant 0 : i32
    %438 = vector.broadcast %c0_i32_186 : i32 to vector<32x1xi32>
    %439 = arith.cmpi sge, %437, %438 : vector<32x1xi32>
    %440 = arith.andi %435, %439 : vector<32x1xi1>
    %c1_i32_187 = arith.constant 1 : i32
    %441 = vector.broadcast %c1_i32_187 : i32 to vector<32x1xi32>
    %442 = arith.addi %35, %441 : vector<32x1xi32>
    %c3_i32_188 = arith.constant 3 : i32
    %443 = vector.broadcast %c3_i32_188 : i32 to vector<32x1xi32>
    %444 = arith.cmpi sle, %442, %443 : vector<32x1xi32>
    %445 = arith.andi %440, %444 : vector<32x1xi1>
    %cst_189 = arith.constant 0.000000e+00 : f32
    %446 = vector.shape_cast %445 : vector<32x1xi1> to vector<32x1xi1>
    %447 = vector.broadcast %446 : vector<32x1xi1> to vector<32x128xi1>
    %448 = vector.broadcast %cst_189 : f32 to vector<32x128xf32>
    %449 = arith.select %447, %426, %448 : vector<32x128xi1>, vector<32x128xf32>
    %450 = arith.truncf %449 : vector<32x128xf32> to vector<32x128xbf16>
    %c0_190 = arith.constant 0 : index
    %c1920 = arith.constant 1920 : index
    %451 = vector.load %arg10[%c0_190, %c1920] : memref<32x2048xbf16, #tpu.memory_space<vmem>>, vector<32x128xbf16>
    tpu.vector_store %arg10[%c0_190, %c1920], %450 {strides = array<i32>} : memref<32x2048xbf16, #tpu.memory_space<vmem>>, vector<32x128xbf16>,
    %c0_191 = arith.constant 0 : index
    %c0_192 = arith.constant 0 : index
    %452 = vector.load %arg10[%c0_191, %c0_192] : memref<32x2048xbf16, #tpu.memory_space<vmem>>, vector<32x2048xbf16>
    %c0_193 = arith.constant 0 : index
    %c0_194 = arith.constant 0 : index
    %453 = vector.load %arg4[%c0_193, %c0_194] : memref<2048x256xbf16, #tpu.memory_space<vmem>>, vector<2048x256xbf16>
    %cst_195 = arith.constant dense<0.000000e+00> : vector<32x256xf32>
    %454 = tpu.matmul %452, %453, %cst_195 {dimension_numbers = #tpu.dot_dimension_numbers<[1], [0], [0], [1], [0, 0, 1, 1], [], []>} : vector<32x2048xbf16>, vector<2048x256xbf16>, vector<32x256xf32> -> vector<32x256xf32>
    %c0_196 = arith.constant 0 : index
    %c0_197 = arith.constant 0 : index
    %455 = vector.load %arg5[%c0_196, %c0_197] : memref<1x256xf32, #tpu.memory_space<vmem>>, vector<1x256xf32>
    %456 = vector.broadcast %455 : vector<1x256xf32> to vector<32x256xf32>
    %457 = arith.addf %454, %456 : vector<32x256xf32>
    %cst_198 = arith.constant dense<0.000000e+00> : vector<256xf32>
    %458 = vector.multi_reduction <add>, %457, %cst_198 [0] : vector<32x256xf32> to vector<256xf32>
    %459 = vector.shape_cast %458 : vector<256xf32> to vector<1x256xf32>
    %cst_199 = arith.constant 3.200000e+01 : f32
    %460 = vector.broadcast %cst_199 : f32 to vector<1x256xf32>
    %461 = arith.divf %459, %460 : vector<1x256xf32>
    %462 = arith.mulf %457, %457 : vector<32x256xf32>
    %cst_200 = arith.constant dense<0.000000e+00> : vector<256xf32>
    %463 = vector.multi_reduction <add>, %462, %cst_200 [0] : vector<32x256xf32> to vector<256xf32>
    %464 = vector.shape_cast %463 : vector<256xf32> to vector<1x256xf32>
    %cst_201 = arith.constant 3.200000e+01 : f32
    %465 = vector.broadcast %cst_201 : f32 to vector<1x256xf32>
    %466 = arith.divf %464, %465 : vector<1x256xf32>
    %467 = arith.mulf %461, %461 : vector<1x256xf32>
    %468 = arith.subf %466, %467 : vector<1x256xf32>
    %469 = vector.broadcast %461 : vector<1x256xf32> to vector<32x256xf32>
    %470 = arith.subf %457, %469 : vector<32x256xf32>
    %cst_202 = arith.constant 9.99999974E-6 : f32
    %471 = vector.broadcast %cst_202 : f32 to vector<1x256xf32>
    %472 = arith.addf %468, %471 : vector<1x256xf32>
    %473 = math.rsqrt %472 : vector<1x256xf32>
    %474 = vector.broadcast %473 : vector<1x256xf32> to vector<32x256xf32>
    %475 = arith.mulf %470, %474 : vector<32x256xf32>
    %cst_203 = arith.constant 0.000000e+00 : f32
    %476 = vector.broadcast %cst_203 : f32 to vector<32x256xf32>
    %477 = arith.maximumf %475, %476 : vector<32x256xf32>
    %478 = vector.shape_cast %477 : vector<32x256xf32> to vector<2x16x256xf32>
    %c0_204 = arith.constant 0 : index
    %c0_205 = arith.constant 0 : index
    %479 = vector.load %arg6[%c0_204, %c0_205] : memref<16x256xf32, #tpu.memory_space<vmem>>, vector<16x256xf32>
    %480 = vector.shape_cast %479 : vector<16x256xf32> to vector<1x16x256xf32>
    %481 = vector.broadcast %480 : vector<1x16x256xf32> to vector<2x16x256xf32>
    %482 = arith.mulf %478, %481 : vector<2x16x256xf32>
    %cst_206 = arith.constant dense<0.000000e+00> : vector<2x256xf32>
    %483 = vector.multi_reduction <add>, %482, %cst_206 [1] : vector<2x16x256xf32> to vector<2x256xf32>
    %cst_207 = arith.constant dense<0.000000e+00> : vector<2xf32>
    %484 = vector.multi_reduction <add>, %483, %cst_207 [1] : vector<2x256xf32> to vector<2xf32>
    %485 = vector.shape_cast %484 : vector<2xf32> to vector<2x1xf32>
    %c0_208 = arith.constant 0 : index
    %c0_209 = arith.constant 0 : index
    %486 = vector.load %arg7[%c0_208, %c0_209] : memref<1x1xf32, #tpu.memory_space<vmem>>, vector<1x1xf32>
    %487 = vector.broadcast %486 : vector<1x1xf32> to vector<2x1xf32>
    %488 = arith.addf %485, %487 : vector<2x1xf32>
    %c0_210 = arith.constant 0 : index
    %c0_211 = arith.constant 0 : index
    %489 = vector.load %arg8[%c0_210, %c0_211] : memref<2x1xf32, #tpu.memory_space<vmem>>, vector<2x1xf32>
    tpu.vector_store %arg8[%c0_210, %c0_211], %488 {strides = array<i32>} : memref<2x1xf32, #tpu.memory_space<vmem>>, vector<2x1xf32>,
    return
  }
  func.func @transform_0(%arg0: i32) -> (i32, i32) {
    %c0_i32 = arith.constant 0 : i32
    %c0_i32_0 = arith.constant 0 : i32
    %c0_i32_1 = arith.constant 0 : i32
    return %c0_i32, %c0_i32_0 : i32, i32
  }
  func.func @transform_1(%arg0: i32) -> (i32, i32) {
    %c0_i32 = arith.constant 0 : i32
    %c0_i32_0 = arith.constant 0 : i32
    %c0_i32_1 = arith.constant 0 : i32
    return %c0_i32, %c0_i32_0 : i32, i32
  }
  func.func @transform_2(%arg0: i32) -> (i32, i32) {
    %c0_i32 = arith.constant 0 : i32
    %c0_i32_0 = arith.constant 0 : i32
    %c0_i32_1 = arith.constant 0 : i32
    return %c0_i32, %c0_i32_0 : i32, i32
  }
  func.func @transform_3(%arg0: i32) -> (i32, i32) {
    %c0_i32 = arith.constant 0 : i32
    %c0_i32_0 = arith.constant 0 : i32
    %c0_i32_1 = arith.constant 0 : i32
    return %c0_i32, %c0_i32_0 : i32, i32
  }
  func.func @transform_4(%arg0: i32) -> (i32, i32) {
    %c0_i32 = arith.constant 0 : i32
    %c0_i32_0 = arith.constant 0 : i32
    %c0_i32_1 = arith.constant 0 : i32
    return %c0_i32, %c0_i32_0 : i32, i32
  }
  func.func @transform_5(%arg0: i32) -> (i32, i32) {
    %c0_i32 = arith.constant 0 : i32
    %c0_i32_0 = arith.constant 0 : i32
    %c0_i32_1 = arith.constant 0 : i32
    return %c0_i32, %c0_i32_0 : i32, i32
  }
  func.func @transform_6(%arg0: i32) -> (i32, i32) {
    %c0_i32 = arith.constant 0 : i32
    %c0_i32_0 = arith.constant 0 : i32
    %c0_i32_1 = arith.constant 0 : i32
    return %c0_i32, %c0_i32_0 : i32, i32
  }
  func.func @transform_7(%arg0: i32) -> (i32, i32) {
    %c0_i32 = arith.constant 0 : i32
    %c0_i32_0 = arith.constant 0 : i32
    %c0_i32_1 = arith.constant 0 : i32
    return %c0_i32, %c0_i32_0 : i32, i32
  }
}

</mosaic_0001>

<llo_original>
// kernel: pressure_decoder.1
$region0: #{pressure_decoder.1}
  #allocation0 [shape = 'u32[]', space=smem, size = 0x4, offset = 0x4, fixed_abs, tag = 'smem constant byte address 0x4 - core index']
  #allocation1 [shape = 'u32[144,128]{1,0:T(1,128)}', space=vmem, size = 0x12000, scoped, tag = 'internal scratch']
  #allocation2 [shape = 'f32[144,128]{1,0:T(8,128)}', space=vmem, size = 0x12000, scoped, tag = 'scratch operand']
  #allocation3 [shape = 'bf16[32,2048]{1,0:T(8,128)(2,1)}', space=vmem, size = 0x20000, scoped, tag = 'scratch operand']
  #allocation4 [shape = 'f32[1,1]{1,0:T(1,128)S(1)}', space=vmem, size = 0x200, scoped, tag = 'scoped memory for pressure_decoder.1']
  %s0 = inlined_call_operand.vmem [shape: f32[128,16], index: 0, kind: input, shape index: {}]
  %s1 = inlined_call_operand.vmem [shape: f32[16,128], index: 1, kind: input, shape index: {}]
  %s2 = inlined_call_operand.vmem [shape: f32[1,128], index: 2, kind: input, shape index: {}]
  %s3 = inlined_call_operand.hbm [shape: bf16[2048,256], index: 3, kind: input, shape index: {}]
  %s4 = inlined_call_operand.vmem [shape: f32[1,256], index: 4, kind: input, shape index: {}]
  %s5 = inlined_call_operand.vmem [shape: f32[16,256], index: 5, kind: input, shape index: {}]
  %s6 = inlined_call_operand.<no memory space> [shape: f32[1,1], index: 6, kind: input, shape index: {}]
  %s7 = inlined_call_operand.vmem [shape: f32[2,1], index: 7, kind: output, shape index: {}]
  %s8 = sld [smem:[#allocation0]]
  $region42: #{pressure_decoder.1} parent=0
    _
  %s10 = ssub.s32 1, %s8
  %s11 = scalar_select 0, %s10, %s8
  %v12 = vstv %s6
  %13 = vst [vmem:[#allocation4] sm:$0x1] %v12
  $region1: #{pressure_decoder.1} parent=0
    #allocation5 [shape = 'u8[1048576]{0}', space=vmem, size = 0x100000, scoped, tag = 'input window, operand 3, single buffered']
    #allocation6 [shape = 's32[1]{0}', space=sflag, size = 0x4, scoped, tag = 'scoped memory for pressure_decoder.1']
    %14 = vsyncpa [#allocation6], 0
    // Predicated region
    $region2: #{pressure_decoder.1} parent=1 // pred_check
      _
    $region3: #{pressure_decoder.1} parent=1 // pred_check_branch
      %16 = sbr.rel (0) target = $region5
    $region4: #{pressure_decoder.1} parent=1 // pred_region
      _
    $region5: #{pressure_decoder.1} parent=1 // pred_fallthru
      _
    // Predicated region
    $region6: #{pressure_decoder.1} parent=1 // pred_check
      _
    $region7: #{pressure_decoder.1} parent=1 // pred_check_branch
      %18 = sbr.rel (0) target = $region9
    $region8: #{pressure_decoder.1} parent=1 // pred_region
      _
    $region9: #{pressure_decoder.1} parent=1 // pred_fallthru
      _
    // Predicated region
    $region10: #{pressure_decoder.1} parent=1 // pred_check
      _
    $region11: #{pressure_decoder.1} parent=1 // pred_check_branch
      %20 = sbr.rel (0) target = $region13
    $region12: #{pressure_decoder.1} parent=1 // pred_region
      _
    $region13: #{pressure_decoder.1} parent=1 // pred_fallthru
      _
    // Predicated region
    $region14: #{pressure_decoder.1} parent=1 // pred_check
      _
    $region15: #{pressure_decoder.1} parent=1 // pred_check_branch
      %22 = sbr.rel (0) target = $region17
    $region16: #{pressure_decoder.1} parent=1 // pred_region
      %s24 = ssub.s32 32768, 32768
      %25 = vsyncadd [#allocation6], %s24
      %s26 = sshll.u32 [#allocation5], 4
      %s27 = int_to_ptr.vmem [resolvable:$true] %s26
      %32 = dma.hbm_to_vmem [thread:$0]  %s3, 32768, %s27, [#allocation6], 128, 128, 8
    $region17: #{pressure_decoder.1} parent=1 // pred_fallthru
      _
    // Predicated region
    $region18: #{pressure_decoder.1} parent=1 // pred_check
      _
    $region19: #{pressure_decoder.1} parent=1 // pred_check_branch
      %34 = sbr.rel (0) target = $region21
    $region20: #{pressure_decoder.1} parent=1 // pred_region
      _
    $region21: #{pressure_decoder.1} parent=1 // pred_fallthru
      _
    // Predicated region
    $region22: #{pressure_decoder.1} parent=1 // pred_check
      _
    $region23: #{pressure_decoder.1} parent=1 // pred_check_branch
      %36 = sbr.rel (0) target = $region25
    $region24: #{pressure_decoder.1} parent=1 // pred_region
      _
    $region25: #{pressure_decoder.1} parent=1 // pred_fallthru
      _
    // Predicated region
    $region26: #{pressure_decoder.1} parent=1 // pred_check
      _
    $region27: #{pressure_decoder.1} parent=1 // pred_check_branch
      %38 = sbr.rel (0) target = $region29
    $region28: #{pressure_decoder.1} parent=1 // pred_region
      _
    $region29: #{pressure_decoder.1} parent=1 // pred_fallthru
      _
    // Predicated region
    $region30: #{pressure_decoder.1} parent=1 // pred_check
      _
    $region31: #{pressure_decoder.1} parent=1 // pred_check_branch
      %40 = sbr.rel (0) target = $region33
    $region32: #{pressure_decoder.1} parent=1 // pred_region
      %41 = dma.done [#allocation6], 32768
    $region33: #{pressure_decoder.1} parent=1 // pred_fallthru
      _
    %v42 = vld [vmem:[%s0] sm:$0xff]
    %v43 = vld [vmem:[%s0 + $0x8] sm:$0xff]
    %v44 = vld [vmem:[%s0 + $0x10] sm:$0xff]
    %v45 = vld [vmem:[%s0 + $0x18] sm:$0xff]
    %v46 = vld [vmem:[%s0 + $0x20] sm:$0xff]
    %v47 = vld [vmem:[%s0 + $0x28] sm:$0xff]
    %v48 = vld [vmem:[%s0 + $0x30] sm:$0xff]
    %v49 = vld [vmem:[%s0 + $0x38] sm:$0xff]
    %v50 = vld [vmem:[%s0 + $0x40] sm:$0xff]
    %v51 = vld [vmem:[%s0 + $0x48] sm:$0xff]
    %v52 = vld [vmem:[%s0 + $0x50] sm:$0xff]
    %v53 = vld [vmem:[%s0 + $0x58] sm:$0xff]
    %v54 = vld [vmem:[%s0 + $0x60] sm:$0xff]
    %v55 = vld [vmem:[%s0 + $0x68] sm:$0xff]
    %v56 = vld [vmem:[%s0 + $0x70] sm:$0xff]
    %v57 = vld [vmem:[%s0 + $0x78] sm:$0xff]
    %v58 = vld [vmem:[%s1] sm:$0xff]
    %v59 = vld [vmem:[%s1 + $0x8] sm:$0xff]
    %v60 = vld [vmem:[%s2] sm:$0x1]
    %v62 = vlaneseq
    %v63 = vshrl.u32 %v62, 7
    %v64 = vsub.s32 0, %v63
    %v65 = vrot.slane %v60, %v64
    %vm67 = vcmask 130048
    %v69 = vsel %vm67, %v42, 0
    %v72 = vsel %vm67, %v43, 0
    %v75 = vsel %vm67, %v44, 0
    %v78 = vsel %vm67, %v45, 0
    %v81 = vsel %vm67, %v46, 0
    %v84 = vsel %vm67, %v47, 0
    %v87 = vsel %vm67, %v48, 0
    %v90 = vsel %vm67, %v49, 0
    %v93 = vsel %vm67, %v50, 0
    %v96 = vsel %vm67, %v51, 0
    %v99 = vsel %vm67, %v52, 0
    %v102 = vsel %vm67, %v53, 0
    %v105 = vsel %vm67, %v54, 0
    %v108 = vsel %vm67, %v55, 0
    %v111 = vsel %vm67, %v56, 0
    %v114 = vsel %vm67, %v57, 0
    %116 = vmatprep.subr.mxu0 0.0
    %117 = vmatpush1.msra.mxu0 0.0
    %118 = vmatprep.subr.mxu0 0.0
    %119 = vmatpush1.msra.mxu0 0.0
    %120 = vmatprep.subr.mxu0 0.0
    %121 = vmatpush1.msra.mxu0 0.0
    %122 = vmatprep.subr.mxu0 0.0
    %123 = vmatpush1.msra.mxu0 0.0
    %124 = vmatprep.subr.mxu0 0.0
    %125 = vmatpush1.msra.mxu0 0.0
    %126 = vmatprep.subr.mxu0 0.0
    %127 = vmatpush1.msra.mxu0 0.0
    %128 = vmatprep.subr.mxu0 0.0
    %129 = vmatpush1.msra.mxu0 0.0
    %130 = vmatprep.subr.mxu0 0.0
    %131 = vmatpush1.msra.mxu0 0.0
    %132 = vmatprep.subr.mxu0 0.0
    %133 = vmatpush1.msra.mxu0 0.0
    %134 = vmatprep.subr.mxu0 0.0
    %135 = vmatpush1.msra.mxu0 0.0
    %136 = vmatprep.subr.mxu0 0.0
    %137 = vmatpush1.msra.mxu0 0.0
    %138 = vmatprep.subr.mxu0 0.0
    %139 = vmatpush1.msra.mxu0 0.0
    %140 = vmatprep.subr.mxu0 0.0
    %141 = vmatpush1.msra.mxu0 0.0
    %142 = vmatprep.subr.mxu0 0.0
    %143 = vmatpush1.msra.mxu0 0.0
    %144 = vmatprep.subr.mxu0 0.0
    %145 = vmatpush1.msra.mxu0 %v59
    %146 = vmatprep.subr.mxu0 0.0
    %147 = vmatpush1.msra.mxu0 %v58
    %148 = vmatprep.subr.mxu0 0.0
    %149 = vmatpush2.msra.mxu0 0.0
    %150 = vmatprep.subr.mxu0 0.0
    %151 = vmatpush2.msra.mxu0 0.0
    %152 = vmatprep.subr.mxu0 0.0
    %153 = vmatpush2.msra.mxu0 0.0
    %154 = vmatprep.subr.mxu0 0.0
    %155 = vmatpush2.msra.mxu0 0.0
    %156 = vmatprep.subr.mxu0 0.0
    %157 = vmatpush2.msra.mxu0 0.0
    %158 = vmatprep.subr.mxu0 0.0
    %159 = vmatpush2.msra.mxu0 0.0
    %160 = vmatprep.subr.mxu0 0.0
    %161 = vmatpush2.msra.mxu0 0.0
    %162 = vmatprep.subr.mxu0 0.0
    %163 = vmatpush2.msra.mxu0 0.0
    %164 = vmatprep.subr.mxu0 0.0
    %165 = vmatpush2.msra.mxu0 0.0
    %166 = vmatprep.subr.mxu0 0.0
    %167 = vmatpush2.msra.mxu0 0.0
    %168 = vmatprep.subr.mxu0 0.0
    %169 = vmatpush2.msra.mxu0 0.0
    %170 = vmatprep.subr.mxu0 0.0
    %171 = vmatpush2.msra.mxu0 0.0
    %172 = vmatprep.subr.mxu0 0.0
    %173 = vmatpush2.msra.mxu0 0.0
    %174 = vmatprep.subr.mxu0 0.0
    %175 = vmatpush2.msra.mxu0 0.0
    %176 = vmatprep.subr.mxu0 0.0
    %177 = vmatpush2.msra.mxu0 0.0
    %178 = vmatprep.subr.mxu0 0.0
    %179 = vmatpush2.msra.mxu0 0.0
    %180 = vmatprep.mubr.f32.mxu0 0.0
    %181 = vmatmul.mubr.f32.gmra.mxu0 %v69
    %v182 = vpop.f32.mrf.mxu0
    %v183 = vadd.f32 %v65, %v182
    %v184 = vpop.f32.mrf.mxu0
    %185 = vmatprep.mubr.f32.mxu0 0.0
    %186 = vmatmul.mubr.f32.gmra.mxu0 %v72
    %v187 = vpop.f32.mrf.mxu0
    %v188 = vadd.f32 %v65, %v187
    %v189 = vpop.f32.mrf.mxu0
    %190 = vmatprep.mubr.f32.mxu0 0.0
    %191 = vmatmul.mubr.f32.gmra.mxu0 %v75
    %v192 = vpop.f32.mrf.mxu0
    %v193 = vadd.f32 %v65, %v192
    %v194 = vpop.f32.mrf.mxu0
    %195 = vmatprep.mubr.f32.mxu0 0.0
    %196 = vmatmul.mubr.f32.gmra.mxu0 %v78
    %v197 = vpop.f32.mrf.mxu0
    %v198 = vadd.f32 %v65, %v197
    %v199 = vpop.f32.mrf.mxu0
    %200 = vmatprep.mubr.f32.mxu0 0.0
    %201 = vmatmul.mubr.f32.gmra.mxu0 %v81
    %v202 = vpop.f32.mrf.mxu0
    %v203 = vadd.f32 %v65, %v202
    %v204 = vpop.f32.mrf.mxu0
    %205 = vmatprep.mubr.f32.mxu0 0.0
    %206 = vmatmul.mubr.f32.gmra.mxu0 %v84
    %v207 = vpop.f32.mrf.mxu0
    %v208 = vadd.f32 %v65, %v207
    %v209 = vpop.f32.mrf.mxu0
    %210 = vmatprep.mubr.f32.mxu0 0.0
    %211 = vmatmul.mubr.f32.gmra.mxu0 %v87
    %v212 = vpop.f32.mrf.mxu0
    %v213 = vadd.f32 %v65, %v212
    %v214 = vpop.f32.mrf.mxu0
    %215 = vmatprep.mubr.f32.mxu0 0.0
    %216 = vmatmul.mubr.f32.gmra.mxu0 %v90
    %v217 = vpop.f32.mrf.mxu0
    %v218 = vadd.f32 %v65, %v217
    %v219 = vpop.f32.mrf.mxu0
    %220 = vmatprep.mubr.f32.mxu0 0.0
    %221 = vmatmul.mubr.f32.gmra.mxu0 %v93
    %v222 = vpop.f32.mrf.mxu0
    %v223 = vadd.f32 %v65, %v222
    %v224 = vpop.f32.mrf.mxu0
    %225 = vmatprep.mubr.f32.mxu0 0.0
    %226 = vmatmul.mubr.f32.gmra.mxu0 %v96
    %v227 = vpop.f32.mrf.mxu0
    %v228 = vadd.f32 %v65, %v227
    %v229 = vpop.f32.mrf.mxu0
    %230 = vmatprep.mubr.f32.mxu0 0.0
    %231 = vmatmul.mubr.f32.gmra.mxu0 %v99
    %v232 = vpop.f32.mrf.mxu0
    %v233 = vadd.f32 %v65, %v232
    %v234 = vpop.f32.mrf.mxu0
    %235 = vmatprep.mubr.f32.mxu0 0.0
    %236 = vmatmul.mubr.f32.gmra.mxu0 %v102
    %v237 = vpop.f32.mrf.mxu0
    %v238 = vadd.f32 %v65, %v237
    %v239 = vpop.f32.mrf.mxu0
    %240 = vmatprep.mubr.f32.mxu0 0.0
    %241 = vmatmul.mubr.f32.gmra.mxu0 %v105
    %v242 = vpop.f32.mrf.mxu0
    %v243 = vadd.f32 %v65, %v242
    %v244 = vpop.f32.mrf.mxu0
    %245 = vmatprep.mubr.f32.mxu0 0.0
    %246 = vmatmul.mubr.f32.gmra.mxu0 %v108
    %v247 = vpop.f32.mrf.mxu0
    %v248 = vadd.f32 %v65, %v247
    %v249 = vpop.f32.mrf.mxu0
    %250 = vmatprep.mubr.f32.mxu0 0.0
    %251 = vmatmul.mubr.f32.gmra.mxu0 %v111
    %v252 = vpop.f32.mrf.mxu0
    %v253 = vadd.f32 %v65, %v252
    %v254 = vpop.f32.mrf.mxu0
    %255 = vmatprep.mubr.f32.mxu0 0.0
    %256 = vmatmul.mubr.f32.gmra.mxu0 %v114
    %v257 = vpop.f32.mrf.mxu0
    %v258 = vadd.f32 %v65, %v257
    %v259 = vpop.f32.mrf.mxu0
    %260 = vdwg.mxu0
    %v261 = vadd.f32 %v183, %v188
    %v262 = vadd.f32 %v261, %v193
    %v263 = vadd.f32 %v262, %v198
    %v264 = vadd.f32 %v263, %v203
    %v265 = vadd.f32 %v264, %v208
    %v266 = vadd.f32 %v265, %v213
    %v267 = vadd.f32 %v266, %v218
    %v268 = vadd.f32 %v267, %v223
    %v269 = vadd.f32 %v268, %v228
    %v270 = vadd.f32 %v269, %v233
    %v271 = vadd.f32 %v270, %v238
    %v272 = vadd.f32 %v271, %v243
    %v273 = vadd.f32 %v272, %v248
    %v274 = vadd.f32 %v273, %v253
    %v275 = vadd.f32 %v274, %v258
    %v276 = vrot.slane %v275, 4
    %v277 = vadd.f32 %v275, %v276
    %v278 = vrot.slane %v277, 2
    %v279 = vadd.f32 %v277, %v278
    %v280 = vrot.slane %v279, 1
    %v281 = vadd.f32 %v279, %v280
    %v282 = vrcp.pop 128.0
    %v283 = vmul.f32 %v281, %v282
    %v284 = vmul.f32 %v183, %v183
    %v285 = vmul.f32 %v188, %v188
    %v286 = vmul.f32 %v193, %v193
    %v287 = vmul.f32 %v198, %v198
    %v288 = vmul.f32 %v203, %v203
    %v289 = vmul.f32 %v208, %v208
    %v290 = vmul.f32 %v213, %v213
    %v291 = vmul.f32 %v218, %v218
    %v292 = vmul.f32 %v223, %v223
    %v293 = vmul.f32 %v228, %v228
    %v294 = vmul.f32 %v233, %v233
    %v295 = vmul.f32 %v238, %v238
    %v296 = vmul.f32 %v243, %v243
    %v297 = vmul.f32 %v248, %v248
    %v298 = vmul.f32 %v253, %v253
    %v299 = vmul.f32 %v258, %v258
    %v300 = vadd.f32 %v284, %v285
    %v301 = vadd.f32 %v300, %v286
    %v302 = vadd.f32 %v301, %v287
    %v303 = vadd.f32 %v302, %v288
    %v304 = vadd.f32 %v303, %v289
    %v305 = vadd.f32 %v304, %v290
    %v306 = vadd.f32 %v305, %v291
    %v307 = vadd.f32 %v306, %v292
    %v308 = vadd.f32 %v307, %v293
    %v309 = vadd.f32 %v308, %v294
    %v310 = vadd.f32 %v309, %v295
    %v311 = vadd.f32 %v310, %v296
    %v312 = vadd.f32 %v311, %v297
    %v313 = vadd.f32 %v312, %v298
    %v314 = vadd.f32 %v313, %v299
    %v315 = vrot.slane %v314, 4
    %v316 = vadd.f32 %v314, %v315
    %v317 = vrot.slane %v316, 2
    %v318 = vadd.f32 %v316, %v317
    %v319 = vrot.slane %v318, 1
    %v320 = vadd.f32 %v318, %v319
    %v321 = vmul.f32 %v320, %v282
    %v322 = vmul.f32 %v283, %v283
    %v323 = vsub.f32 %v321, %v322
    %v324 = vsub.f32 %v183, %v283
    %v325 = vsub.f32 %v188, %v283
    %v326 = vsub.f32 %v193, %v283
    %v327 = vsub.f32 %v198, %v283
    %v328 = vsub.f32 %v203, %v283
    %v329 = vsub.f32 %v208, %v283
    %v330 = vsub.f32 %v213, %v283
    %v331 = vsub.f32 %v218, %v283
    %v332 = vsub.f32 %v223, %v283
    %v333 = vsub.f32 %v228, %v283
    %v334 = vsub.f32 %v233, %v283
    %v335 = vsub.f32 %v238, %v283
    %v336 = vsub.f32 %v243, %v283
    %v337 = vsub.f32 %v248, %v283
    %v338 = vsub.f32 %v253, %v283
    %v339 = vsub.f32 %v258, %v283
    %v340 = vadd.f32 %v323, 1e-05
    %v341 = vrsqrt.pop %v340
    %v342 = vmul.f32 %v324, %v341
    %v343 = vmul.f32 %v325, %v341
    %v344 = vmul.f32 %v326, %v341
    %v345 = vmul.f32 %v327, %v341
    %v346 = vmul.f32 %v328, %v341
    %v347 = vmul.f32 %v329, %v341
    %v348 = vmul.f32 %v330, %v341
    %v349 = vmul.f32 %v331, %v341
    %v350 = vmul.f32 %v332, %v341
    %v351 = vmul.f32 %v333, %v341
    %v352 = vmul.f32 %v334, %v341
    %v353 = vmul.f32 %v335, %v341
    %v354 = vmul.f32 %v336, %v341
    %v355 = vmul.f32 %v337, %v341
    %v356 = vmul.f32 %v338, %v341
    %v357 = vmul.f32 %v339, %v341
    %v358 = vmax.f32 %v342, 0.0
    %v359 = vmax.f32 %v343, 0.0
    %v360 = vmax.f32 %v344, 0.0
    %v361 = vmax.f32 %v345, 0.0
    %v362 = vmax.f32 %v346, 0.0
    %v363 = vmax.f32 %v347, 0.0
    %v364 = vmax.f32 %v348, 0.0
    %v365 = vmax.f32 %v349, 0.0
    %v366 = vmax.f32 %v350, 0.0
    %v367 = vmax.f32 %v351, 0.0
    %v368 = vmax.f32 %v352, 0.0
    %v369 = vmax.f32 %v353, 0.0
    %v370 = vmax.f32 %v354, 0.0
    %v371 = vmax.f32 %v355, 0.0
    %v372 = vmax.f32 %v356, 0.0
    %v373 = vmax.f32 %v357, 0.0
    %374 = vst [vmem:[#allocation2] sm:$0xff] 0.0
    %375 = vst [vmem:[#allocation2 + $0x8] sm:$0xff] 0.0
    %376 = vst [vmem:[#allocation2 + $0x10] sm:$0xff] 0.0
    %377 = vst [vmem:[#allocation2 + $0x18] sm:$0xff] 0.0
    %378 = vst [vmem:[#allocation2 + $0x20] sm:$0xff] 0.0
    %379 = vst [vmem:[#allocation2 + $0x28] sm:$0xff] 0.0
    %380 = vst [vmem:[#allocation2 + $0x30] sm:$0xff] 0.0
    %381 = vst [vmem:[#allocation2 + $0x38] sm:$0xff] 0.0
    %382 = vst [vmem:[#allocation2 + $0x40] sm:$0xff] 0.0
    %383 = vst [vmem:[#allocation2 + $0x48] sm:$0xff] 0.0
    %384 = vst [vmem:[#allocation2 + $0x50] sm:$0xff] 0.0
    %385 = vst [vmem:[#allocation2 + $0x58] sm:$0xff] 0.0
    %386 = vst [vmem:[#allocation2 + $0x60] sm:$0xff] 0.0
    %387 = vst [vmem:[#allocation2 + $0x68] sm:$0xff] 0.0
    %388 = vst [vmem:[#allocation2 + $0x70] sm:$0xff] 0.0
    %389 = vst [vmem:[#allocation2 + $0x78] sm:$0xff] 0.0
    %390 = vst [vmem:[#allocation2 + $0x80] sm:$0xff] 0.0
    %391 = vst [vmem:[#allocation2 + $0x88] sm:$0xff] 0.0
    %392 = vst [vmem:[#allocation2 + $0x8] sm:$0xff] %v358
    %393 = vst [vmem:[#allocation2 + $0x10] sm:$0xff] %v359
    %394 = vst [vmem:[#allocation2 + $0x18] sm:$0xff] %v360
    %395 = vst [vmem:[#allocation2 + $0x20] sm:$0xff] %v361
    %396 = vst [vmem:[#allocation2 + $0x28] sm:$0xff] %v362
    %397 = vst [vmem:[#allocation2 + $0x30] sm:$0xff] %v363
    %398 = vst [vmem:[#allocation2 + $0x38] sm:$0xff] %v364
    %399 = vst [vmem:[#allocation2 + $0x40] sm:$0xff] %v365
    %400 = vst [vmem:[#allocation2 + $0x48] sm:$0xff] %v366
    %401 = vst [vmem:[#allocation2 + $0x50] sm:$0xff] %v367
    %402 = vst [vmem:[#allocation2 + $0x58] sm:$0xff] %v368
    %403 = vst [vmem:[#allocation2 + $0x60] sm:$0xff] %v369
    %404 = vst [vmem:[#allocation2 + $0x68] sm:$0xff] %v370
    %405 = vst [vmem:[#allocation2 + $0x70] sm:$0xff] %v371
    %406 = vst [vmem:[#allocation2 + $0x78] sm:$0xff] %v372
    %407 = vst [vmem:[#allocation2 + $0x80] sm:$0xff] %v373
    %v408 = vlaneseq
    %v409 = vshrl.u32 %v408, 7
    %v410 = vadd.s32 %v409, 8
    %v411 = vadd.s32 %v409, 16
    %v412 = vadd.s32 %v409, 24
    %v413 = vshra.s32 %v409, 2
    %v414 = vshra.s32 %v410, 2
    %v415 = vshra.s32 %v411, 2
    %v416 = vshra.s32 %v412, 2
    %v417 = vand.u32 %v413, 3
    %v418 = vand.u32 %v414, 3
    %v419 = vand.u32 %v415, 3
    %v420 = vand.u32 %v416, 3
    %v421 = vand.u32 %v409, 3
    %v422 = vand.u32 %v410, 3
    %v423 = vand.u32 %v411, 3
    %v424 = vand.u32 %v412, 3
    %v425 = vld [vmem:[#allocation2 + $0x3] sm:$0xff]
    %v426 = vld [vmem:[#allocation2 + $0xb] sm:$0xff]
    %v427 = vld [vmem:[#allocation2 + $0x13] sm:$0xff]
    %v428 = vld [vmem:[#allocation2 + $0x1b] sm:$0xff]
    %v429 = vadd.s32 %v417, 4294967295
    %v430 = vadd.s32 %v418, 4294967295
    %v431 = vadd.s32 %v419, 4294967295
    %v432 = vadd.s32 %v420, 4294967295
    %vm433 = vcmp.ge.s32.totalorder %v429, 0
    %vm434 = vcmp.ge.s32.totalorder %v430, 0
    %vm435 = vcmp.ge.s32.totalorder %v431, 0
    %vm436 = vcmp.ge.s32.totalorder %v432, 0
    %vm437 = vcmp.le.s32.totalorder %v429, 3
    %vm438 = vcmp.le.s32.totalorder %v430, 3
    %vm439 = vcmp.le.s32.totalorder %v431, 3
    %vm440 = vcmp.le.s32.totalorder %v432, 3
    %vm441 = vmand %vm433, %vm437
    %vm442 = vmand %vm434, %vm438
    %vm443 = vmand %vm435, %vm439
    %vm444 = vmand %vm436, %vm440
    %v445 = vadd.s32 %v421, 4294967295
    %v446 = vadd.s32 %v422, 4294967295
    %v447 = vadd.s32 %v423, 4294967295
    %v448 = vadd.s32 %v424, 4294967295
    %vm449 = vcmp.ge.s32.totalorder %v445, 0
    %vm450 = vcmp.ge.s32.totalorder %v446, 0
    %vm451 = vcmp.ge.s32.totalorder %v447, 0
    %vm452 = vcmp.ge.s32.totalorder %v448, 0
    %vm453 = vmand %vm441, %vm449
    %vm454 = vmand %vm442, %vm450
    %vm455 = vmand %vm443, %vm451
    %vm456 = vmand %vm444, %vm452
    %vm457 = vcmp.le.s32.totalorder %v445, 3
    %vm458 = vcmp.le.s32.totalorder %v446, 3
    %vm459 = vcmp.le.s32.totalorder %v447, 3
    %vm460 = vcmp.le.s32.totalorder %v448, 3
    %vm461 = vmand %vm453, %vm457
    %vm462 = vmand %vm454, %vm458
    %vm463 = vmand %vm455, %vm459
    %vm464 = vmand %vm456, %vm460
    %v465 = vsel %vm461, 1, 0
    %v466 = vsel %vm462, 1, 0
    %v467 = vsel %vm463, 1, 0
    %v468 = vsel %vm464, 1, 0
    %vm469 = vcmp.eq.s32.totalorder %v465, 1
    %vm470 = vcmp.eq.s32.totalorder %v466, 1
    %vm471 = vcmp.eq.s32.totalorder %v467, 1
    %vm472 = vcmp.eq.s32.totalorder %v468, 1
    %v473 = vsel %vm469, %v425, 0.0
    %v474 = vsel %vm470, %v426, 0.0
    %v475 = vsel %vm471, %v427, 0.0
    %v476 = vsel %vm472, %v428, 0.0
    %v477 = vpack.c.bf16 %v474, %v473
    %v478 = vpack.c.bf16 %v476, %v475
    %v481 = vunpack.c.l.b16 %v477
    %v482 = vunpack.c.h.b16 %v477
    %v483 = vunpack.c.l.b16 %v478
    %v484 = vunpack.c.h.b16 %v478
    %v485 = vpack.c.b16 %v481, %v481
    %v486 = vpack.c.b16 %v482, %v482
    %v487 = vpack.c.b16 %v483, %v483
    %v488 = vpack.c.b16 %v484, %v484
    %493 = vst [vmem:[#allocation3] sm:$0xf] %v485
    %494 = vst [vmem:[#allocation3 + $0x40] sm:$0xf] %v486
    %495 = vst [vmem:[#allocation3 + $0x80] sm:$0xf] %v487
    %496 = vst [vmem:[#allocation3 + $0xc0] sm:$0xf] %v488
    %v497 = vld [vmem:[#allocation2 + $0x24] sm:$0xff]
    %v498 = vld [vmem:[#allocation2 + $0x2c] sm:$0xff]
    %v499 = vld [vmem:[#allocation2 + $0x34] sm:$0xff]
    %v500 = vld [vmem:[#allocation2 + $0x3c] sm:$0xff]
    %vm501 = vcmp.ge.s32.totalorder %v421, 0
    %vm502 = vcmp.ge.s32.totalorder %v422, 0
    %vm503 = vcmp.ge.s32.totalorder %v423, 0
    %vm504 = vcmp.ge.s32.totalorder %v424, 0
    %vm505 = vmand %vm441, %vm501
    %vm506 = vmand %vm442, %vm502
    %vm507 = vmand %vm443, %vm503
    %vm508 = vmand %vm444, %vm504
    %vm509 = vcmp.le.s32.totalorder %v421, 3
    %vm510 = vcmp.le.s32.totalorder %v422, 3
    %vm511 = vcmp.le.s32.totalorder %v423, 3
    %vm512 = vcmp.le.s32.totalorder %v424, 3
    %vm513 = vmand %vm505, %vm509
    %vm514 = vmand %vm506, %vm510
    %vm515 = vmand %vm507, %vm511
    %vm516 = vmand %vm508, %vm512
    %v517 = vsel %vm513, 1, 0
    %v518 = vsel %vm514, 1, 0
    %v519 = vsel %vm515, 1, 0
    %v520 = vsel %vm516, 1, 0
    %vm521 = vcmp.eq.s32.totalorder %v517, 1
    %vm522 = vcmp.eq.s32.totalorder %v518, 1
    %vm523 = vcmp.eq.s32.totalorder %v519, 1
    %vm524 = vcmp.eq.s32.totalorder %v520, 1
    %v525 = vsel %vm521, %v497, 0.0
    %v526 = vsel %vm522, %v498, 0.0
    %v527 = vsel %vm523, %v499, 0.0
    %v528 = vsel %vm524, %v500, 0.0
    %v529 = vpack.c.bf16 %v526, %v525
    %v530 = vpack.c.bf16 %v528, %v527
    %v533 = vunpack.c.l.b16 %v529
    %v534 = vunpack.c.h.b16 %v529
    %v535 = vunpack.c.l.b16 %v530
    %v536 = vunpack.c.h.b16 %v530
    %v537 = vpack.c.b16 %v533, %v533
    %v538 = vpack.c.b16 %v534, %v534
    %v539 = vpack.c.b16 %v535, %v535
    %v540 = vpack.c.b16 %v536, %v536
    %545 = vst [vmem:[#allocation3 + $0x4] sm:$0xf] %v537
    %546 = vst [vmem:[#allocation3 + $0x44] sm:$0xf] %v538
    %547 = vst [vmem:[#allocation3 + $0x84] sm:$0xf] %v539
    %548 = vst [vmem:[#allocation3 + $0xc4] sm:$0xf] %v540
    %v549 = vld [vmem:[#allocation2 + $0x4] sm:$0xff]
    %v550 = vld [vmem:[#allocation2 + $0xc] sm:$0xff]
    %v551 = vld [vmem:[#allocation2 + $0x14] sm:$0xff]
    %v552 = vld [vmem:[#allocation2 + $0x1c] sm:$0xff]
    %v553 = vsel %vm521, %v549, 0.0
    %v554 = vsel %vm522, %v550, 0.0
    %v555 = vsel %vm523, %v551, 0.0
    %v556 = vsel %vm524, %v552, 0.0
    %v557 = vpack.c.bf16 %v554, %v553
    %v558 = vpack.c.bf16 %v556, %v555
    %v561 = vunpack.c.l.b16 %v557
    %v562 = vunpack.c.h.b16 %v557
    %v563 = vunpack.c.l.b16 %v558
    %v564 = vunpack.c.h.b16 %v558
    %v565 = vpack.c.b16 %v561, %v561
    %v566 = vpack.c.b16 %v562, %v562
    %v567 = vpack.c.b16 %v563, %v563
    %v568 = vpack.c.b16 %v564, %v564
    %573 = vst [vmem:[#allocation3 + $0x8] sm:$0xf] %v565
    %574 = vst [vmem:[#allocation3 + $0x48] sm:$0xf] %v566
    %575 = vst [vmem:[#allocation3 + $0x88] sm:$0xf] %v567
    %576 = vst [vmem:[#allocation3 + $0xc8] sm:$0xf] %v568
    %v577 = vld [vmem:[#allocation2 + $0x25] sm:$0xff]
    %v578 = vld [vmem:[#allocation2 + $0x2d] sm:$0xff]
    %v579 = vld [vmem:[#allocation2 + $0x35] sm:$0xff]
    %v580 = vld [vmem:[#allocation2 + $0x3d] sm:$0xff]
    %v581 = vadd.s32 %v421, 1
    %v582 = vadd.s32 %v422, 1
    %v583 = vadd.s32 %v423, 1
    %v584 = vadd.s32 %v424, 1
    %vm585 = vcmp.ge.s32.totalorder %v581, 0
    %vm586 = vcmp.ge.s32.totalorder %v582, 0
    %vm587 = vcmp.ge.s32.totalorder %v583, 0
    %vm588 = vcmp.ge.s32.totalorder %v584, 0
    %vm589 = vmand %vm441, %vm585
    %vm590 = vmand %vm442, %vm586
    %vm591 = vmand %vm443, %vm587
    %vm592 = vmand %vm444, %vm588
    %vm593 = vcmp.le.s32.totalorder %v581, 3
    %vm594 = vcmp.le.s32.totalorder %v582, 3
    %vm595 = vcmp.le.s32.totalorder %v583, 3
    %vm596 = vcmp.le.s32.totalorder %v584, 3
    %vm597 = vmand %vm589, %vm593
    %vm598 = vmand %vm590, %vm594
    %vm599 = vmand %vm591, %vm595
    %vm600 = vmand %vm592, %vm596
    %v601 = vsel %vm597, 1, 0
    %v602 = vsel %vm598, 1, 0
    %v603 = vsel %vm599, 1, 0
    %v604 = vsel %vm600, 1, 0
    %vm605 = vcmp.eq.s32.totalorder %v601, 1
    %vm606 = vcmp.eq.s32.totalorder %v602, 1
    %vm607 = vcmp.eq.s32.totalorder %v603, 1
    %vm608 = vcmp.eq.s32.totalorder %v604, 1
    %v609 = vsel %vm605, %v577, 0.0
    %v610 = vsel %vm606, %v578, 0.0
    %v611 = vsel %vm607, %v579, 0.0
    %v612 = vsel %vm608, %v580, 0.0
    %v613 = vpack.c.bf16 %v610, %v609
    %v614 = vpack.c.bf16 %v612, %v611
    %v617 = vunpack.c.l.b16 %v613
    %v618 = vunpack.c.h.b16 %v613
    %v619 = vunpack.c.l.b16 %v614
    %v620 = vunpack.c.h.b16 %v614
    %v621 = vpack.c.b16 %v617, %v617
    %v622 = vpack.c.b16 %v618, %v618
    %v623 = vpack.c.b16 %v619, %v619
    %v624 = vpack.c.b16 %v620, %v620
    %629 = vst [vmem:[#allocation3 + $0xc] sm:$0xf] %v621
    %630 = vst [vmem:[#allocation3 + $0x4c] sm:$0xf] %v622
    %631 = vst [vmem:[#allocation3 + $0x8c] sm:$0xf] %v623
    %632 = vst [vmem:[#allocation3 + $0xcc] sm:$0xf] %v624
    %v633 = vld [vmem:[#allocation2 + $0x47] sm:$0xff]
    %v634 = vld [vmem:[#allocation2 + $0x4f] sm:$0xff]
    %v635 = vld [vmem:[#allocation2 + $0x57] sm:$0xff]
    %v636 = vld [vmem:[#allocation2 + $0x5f] sm:$0xff]
    %vm637 = vcmp.ge.s32.totalorder %v417, 0
    %vm638 = vcmp.ge.s32.totalorder %v418, 0
    %vm639 = vcmp.ge.s32.totalorder %v419, 0
    %vm640 = vcmp.ge.s32.totalorder %v420, 0
    %vm641 = vcmp.le.s32.totalorder %v417, 3
    %vm642 = vcmp.le.s32.totalorder %v418, 3
    %vm643 = vcmp.le.s32.totalorder %v419, 3
    %vm644 = vcmp.le.s32.totalorder %v420, 3
    %vm645 = vmand %vm637, %vm641
    %vm646 = vmand %vm638, %vm642
    %vm647 = vmand %vm639, %vm643
    %vm648 = vmand %vm640, %vm644
    %vm649 = vmand %vm645, %vm449
    %vm650 = vmand %vm646, %vm450
    %vm651 = vmand %vm647, %vm451
    %vm652 = vmand %vm648, %vm452
    %vm653 = vmand %vm649, %vm457
    %vm654 = vmand %vm650, %vm458
    %vm655 = vmand %vm651, %vm459
    %vm656 = vmand %vm652, %vm460
    %v657 = vsel %vm653, 1, 0
    %v658 = vsel %vm654, 1, 0
    %v659 = vsel %vm655, 1, 0
    %v660 = vsel %vm656, 1, 0
    %vm661 = vcmp.eq.s32.totalorder %v657, 1
    %vm662 = vcmp.eq.s32.totalorder %v658, 1
    %vm663 = vcmp.eq.s32.totalorder %v659, 1
    %vm664 = vcmp.eq.s32.totalorder %v660, 1
    %v665 = vsel %vm661, %v633, 0.0
    %v666 = vsel %vm662, %v634, 0.0
    %v667 = vsel %vm663, %v635, 0.0
    %v668 = vsel %vm664, %v636, 0.0
    %v669 = vpack.c.bf16 %v666, %v665
    %v670 = vpack.c.bf16 %v668, %v667
    %v673 = vunpack.c.l.b16 %v669
    %v674 = vunpack.c.h.b16 %v669
    %v675 = vunpack.c.l.b16 %v670
    %v676 = vunpack.c.h.b16 %v670
    %v677 = vpack.c.b16 %v673, %v673
    %v678 = vpack.c.b16 %v674, %v674
    %v679 = vpack.c.b16 %v675, %v675
    %v680 = vpack.c.b16 %v676, %v676
    %685 = vst [vmem:[#allocation3 + $0x10] sm:$0xf] %v677
    %686 = vst [vmem:[#allocation3 + $0x50] sm:$0xf] %v678
    %687 = vst [vmem:[#allocation3 + $0x90] sm:$0xf] %v679
    %688 = vst [vmem:[#allocation3 + $0xd0] sm:$0xf] %v680
    %v689 = vld [vmem:[#allocation2 + $0x68] sm:$0xff]
    %v690 = vld [vmem:[#allocation2 + $0x70] sm:$0xff]
    %v691 = vld [vmem:[#allocation2 + $0x78] sm:$0xff]
    %v692 = vld [vmem:[#allocation2 + $0x80] sm:$0xff]
    %vm693 = vmand %vm645, %vm501
    %vm694 = vmand %vm646, %vm502
    %vm695 = vmand %vm647, %vm503
    %vm696 = vmand %vm648, %vm504
    %vm697 = vmand %vm693, %vm509
    %vm698 = vmand %vm694, %vm510
    %vm699 = vmand %vm695, %vm511
    %vm700 = vmand %vm696, %vm512
    %v701 = vsel %vm697, 1, 0
    %v702 = vsel %vm698, 1, 0
    %v703 = vsel %vm699, 1, 0
    %v704 = vsel %vm700, 1, 0
    %vm705 = vcmp.eq.s32.totalorder %v701, 1
    %vm706 = vcmp.eq.s32.totalorder %v702, 1
    %vm707 = vcmp.eq.s32.totalorder %v703, 1
    %vm708 = vcmp.eq.s32.totalorder %v704, 1
    %v709 = vsel %vm705, %v689, 0.0
    %v710 = vsel %vm706, %v690, 0.0
    %v711 = vsel %vm707, %v691, 0.0
    %v712 = vsel %vm708, %v692, 0.0
    %v713 = vpack.c.bf16 %v710, %v709
    %v714 = vpack.c.bf16 %v712, %v711
    %v717 = vunpack.c.l.b16 %v713
    %v718 = vunpack.c.h.b16 %v713
    %v719 = vunpack.c.l.b16 %v714
    %v720 = vunpack.c.h.b16 %v714
    %v721 = vpack.c.b16 %v717, %v717
    %v722 = vpack.c.b16 %v718, %v718
    %v723 = vpack.c.b16 %v719, %v719
    %v724 = vpack.c.b16 %v720, %v720
    %729 = vst [vmem:[#allocation3 + $0x14] sm:$0xf] %v721
    %730 = vst [vmem:[#allocation3 + $0x54] sm:$0xf] %v722
    %731 = vst [vmem:[#allocation3 + $0x94] sm:$0xf] %v723
    %732 = vst [vmem:[#allocation3 + $0xd4] sm:$0xf] %v724
    %v733 = vld [vmem:[#allocation2 + $0x48] sm:$0xff]
    %v734 = vld [vmem:[#allocation2 + $0x50] sm:$0xff]
    %v735 = vld [vmem:[#allocation2 + $0x58] sm:$0xff]
    %v736 = vld [vmem:[#allocation2 + $0x60] sm:$0xff]
    %v737 = vsel %vm705, %v733, 0.0
    %v738 = vsel %vm706, %v734, 0.0
    %v739 = vsel %vm707, %v735, 0.0
    %v740 = vsel %vm708, %v736, 0.0
    %v741 = vpack.c.bf16 %v738, %v737
    %v742 = vpack.c.bf16 %v740, %v739
    %v745 = vunpack.c.l.b16 %v741
    %v746 = vunpack.c.h.b16 %v741
    %v747 = vunpack.c.l.b16 %v742
    %v748 = vunpack.c.h.b16 %v742
    %v749 = vpack.c.b16 %v745, %v745
    %v750 = vpack.c.b16 %v746, %v746
    %v751 = vpack.c.b16 %v747, %v747
    %v752 = vpack.c.b16 %v748, %v748
    %757 = vst [vmem:[#allocation3 + $0x18] sm:$0xf] %v749
    %758 = vst [vmem:[#allocation3 + $0x58] sm:$0xf] %v750
    %759 = vst [vmem:[#allocation3 + $0x98] sm:$0xf] %v751
    %760 = vst [vmem:[#allocation3 + $0xd8] sm:$0xf] %v752
    %v761 = vld [vmem:[#allocation2 + $0x69] sm:$0xff]
    %v762 = vld [vmem:[#allocation2 + $0x71] sm:$0xff]
    %v763 = vld [vmem:[#allocation2 + $0x79] sm:$0xff]
    %v764 = vld [vmem:[#allocation2 + $0x81] sm:$0xff]
    %vm765 = vmand %vm645, %vm585
    %vm766 = vmand %vm646, %vm586
    %vm767 = vmand %vm647, %vm587
    %vm768 = vmand %vm648, %vm588
    %vm769 = vmand %vm765, %vm593
    %vm770 = vmand %vm766, %vm594
    %vm771 = vmand %vm767, %vm595
    %vm772 = vmand %vm768, %vm596
    %v773 = vsel %vm769, 1, 0
    %v774 = vsel %vm770, 1, 0
    %v775 = vsel %vm771, 1, 0
    %v776 = vsel %vm772, 1, 0
    %vm777 = vcmp.eq.s32.totalorder %v773, 1
    %vm778 = vcmp.eq.s32.totalorder %v774, 1
    %vm779 = vcmp.eq.s32.totalorder %v775, 1
    %vm780 = vcmp.eq.s32.totalorder %v776, 1
    %v781 = vsel %vm777, %v761, 0.0
    %v782 = vsel %vm778, %v762, 0.0
    %v783 = vsel %vm779, %v763, 0.0
    %v784 = vsel %vm780, %v764, 0.0
    %v785 = vpack.c.bf16 %v782, %v781
    %v786 = vpack.c.bf16 %v784, %v783
    %v789 = vunpack.c.l.b16 %v785
    %v790 = vunpack.c.h.b16 %v785
    %v791 = vunpack.c.l.b16 %v786
    %v792 = vunpack.c.h.b16 %v786
    %v793 = vpack.c.b16 %v789, %v789
    %v794 = vpack.c.b16 %v790, %v790
    %v795 = vpack.c.b16 %v791, %v791
    %v796 = vpack.c.b16 %v792, %v792
    %801 = vst [vmem:[#allocation3 + $0x1c] sm:$0xf] %v793
    %802 = vst [vmem:[#allocation3 + $0x5c] sm:$0xf] %v794
    %803 = vst [vmem:[#allocation3 + $0x9c] sm:$0xf] %v795
    %804 = vst [vmem:[#allocation3 + $0xdc] sm:$0xf] %v796
    %v805 = vld [vmem:[#allocation2 + $0x7] sm:$0xff]
    %v806 = vld [vmem:[#allocation2 + $0xf] sm:$0xff]
    %v807 = vld [vmem:[#allocation2 + $0x17] sm:$0xff]
    %v808 = vld [vmem:[#allocation2 + $0x1f] sm:$0xff]
    %v809 = vsel %vm661, %v805, 0.0
    %v810 = vsel %vm662, %v806, 0.0
    %v811 = vsel %vm663, %v807, 0.0
    %v812 = vsel %vm664, %v808, 0.0
    %v813 = vpack.c.bf16 %v810, %v809
    %v814 = vpack.c.bf16 %v812, %v811
    %v817 = vunpack.c.l.b16 %v813
    %v818 = vunpack.c.h.b16 %v813
    %v819 = vunpack.c.l.b16 %v814
    %v820 = vunpack.c.h.b16 %v814
    %v821 = vpack.c.b16 %v817, %v817
    %v822 = vpack.c.b16 %v818, %v818
    %v823 = vpack.c.b16 %v819, %v819
    %v824 = vpack.c.b16 %v820, %v820
    %829 = vst [vmem:[#allocation3 + $0x20] sm:$0xf] %v821
    %830 = vst [vmem:[#allocation3 + $0x60] sm:$0xf] %v822
    %831 = vst [vmem:[#allocation3 + $0xa0] sm:$0xf] %v823
    %832 = vst [vmem:[#allocation3 + $0xe0] sm:$0xf] %v824
    %v833 = vld [vmem:[#allocation2 + $0x28] sm:$0xff]
    %v834 = vld [vmem:[#allocation2 + $0x30] sm:$0xff]
    %v835 = vld [vmem:[#allocation2 + $0x38] sm:$0xff]
    %v836 = vld [vmem:[#allocation2 + $0x40] sm:$0xff]
    %v837 = vsel %vm705, %v833, 0.0
    %v838 = vsel %vm706, %v834, 0.0
    %v839 = vsel %vm707, %v835, 0.0
    %v840 = vsel %vm708, %v836, 0.0
    %v841 = vpack.c.bf16 %v838, %v837
    %v842 = vpack.c.bf16 %v840, %v839
    %v845 = vunpack.c.l.b16 %v841
    %v846 = vunpack.c.h.b16 %v841
    %v847 = vunpack.c.l.b16 %v842
    %v848 = vunpack.c.h.b16 %v842
    %v849 = vpack.c.b16 %v845, %v845
    %v850 = vpack.c.b16 %v846, %v846
    %v851 = vpack.c.b16 %v847, %v847
    %v852 = vpack.c.b16 %v848, %v848
    %857 = vst [vmem:[#allocation3 + $0x24] sm:$0xf] %v849
    %858 = vst [vmem:[#allocation3 + $0x64] sm:$0xf] %v850
    %859 = vst [vmem:[#allocation3 + $0xa4] sm:$0xf] %v851
    %860 = vst [vmem:[#allocation3 + $0xe4] sm:$0xf] %v852
    %v861 = vld [vmem:[#allocation2 + $0x8] sm:$0xff]
    %v862 = vld [vmem:[#allocation2 + $0x10] sm:$0xff]
    %v863 = vld [vmem:[#allocation2 + $0x18] sm:$0xff]
    %v864 = vld [vmem:[#allocation2 + $0x20] sm:$0xff]
    %v865 = vsel %vm705, %v861, 0.0
    %v866 = vsel %vm706, %v862, 0.0
    %v867 = vsel %vm707, %v863, 0.0
    %v868 = vsel %vm708, %v864, 0.0
    %v869 = vpack.c.bf16 %v866, %v865
    %v870 = vpack.c.bf16 %v868, %v867
    %v873 = vunpack.c.l.b16 %v869
    %v874 = vunpack.c.h.b16 %v869
    %v875 = vunpack.c.l.b16 %v870
    %v876 = vunpack.c.h.b16 %v870
    %v877 = vpack.c.b16 %v873, %v873
    %v878 = vpack.c.b16 %v874, %v874
    %v879 = vpack.c.b16 %v875, %v875
    %v880 = vpack.c.b16 %v876, %v876
    %885 = vst [vmem:[#allocation3 + $0x28] sm:$0xf] %v877
    %886 = vst [vmem:[#allocation3 + $0x68] sm:$0xf] %v878
    %887 = vst [vmem:[#allocation3 + $0xa8] sm:$0xf] %v879
    %888 = vst [vmem:[#allocation3 + $0xe8] sm:$0xf] %v880
    %v889 = vld [vmem:[#allocation2 + $0x29] sm:$0xff]
    %v890 = vld [vmem:[#allocation2 + $0x31] sm:$0xff]
    %v891 = vld [vmem:[#allocation2 + $0x39] sm:$0xff]
    %v892 = vld [vmem:[#allocation2 + $0x41] sm:$0xff]
    %v893 = vsel %vm777, %v889, 0.0
    %v894 = vsel %vm778, %v890, 0.0
    %v895 = vsel %vm779, %v891, 0.0
    %v896 = vsel %vm780, %v892, 0.0
    %v897 = vpack.c.bf16 %v894, %v893
    %v898 = vpack.c.bf16 %v896, %v895
    %v901 = vunpack.c.l.b16 %v897
    %v902 = vunpack.c.h.b16 %v897
    %v903 = vunpack.c.l.b16 %v898
    %v904 = vunpack.c.h.b16 %v898
    %v905 = vpack.c.b16 %v901, %v901
    %v906 = vpack.c.b16 %v902, %v902
    %v907 = vpack.c.b16 %v903, %v903
    %v908 = vpack.c.b16 %v904, %v904
    %913 = vst [vmem:[#allocation3 + $0x2c] sm:$0xf] %v905
    %914 = vst [vmem:[#allocation3 + $0x6c] sm:$0xf] %v906
    %915 = vst [vmem:[#allocation3 + $0xac] sm:$0xf] %v907
    %916 = vst [vmem:[#allocation3 + $0xec] sm:$0xf] %v908
    %v917 = vld [vmem:[#allocation2 + $0x4b] sm:$0xff]
    %v918 = vld [vmem:[#allocation2 + $0x53] sm:$0xff]
    %v919 = vld [vmem:[#allocation2 + $0x5b] sm:$0xff]
    %v920 = vld [vmem:[#allocation2 + $0x63] sm:$0xff]
    %v921 = vadd.s32 %v417, 1
    %v922 = vadd.s32 %v418, 1
    %v923 = vadd.s32 %v419, 1
    %v924 = vadd.s32 %v420, 1
    %vm925 = vcmp.ge.s32.totalorder %v921, 0
    %vm926 = vcmp.ge.s32.totalorder %v922, 0
    %vm927 = vcmp.ge.s32.totalorder %v923, 0
    %vm928 = vcmp.ge.s32.totalorder %v924, 0
    %vm929 = vcmp.le.s32.totalorder %v921, 3
    %vm930 = vcmp.le.s32.totalorder %v922, 3
    %vm931 = vcmp.le.s32.totalorder %v923, 3
    %vm932 = vcmp.le.s32.totalorder %v924, 3
    %vm933 = vmand %vm925, %vm929
    %vm934 = vmand %vm926, %vm930
    %vm935 = vmand %vm927, %vm931
    %vm936 = vmand %vm928, %vm932
    %vm937 = vmand %vm933, %vm449
    %vm938 = vmand %vm934, %vm450
    %vm939 = vmand %vm935, %vm451
    %vm940 = vmand %vm936, %vm452
    %vm941 = vmand %vm937, %vm457
    %vm942 = vmand %vm938, %vm458
    %vm943 = vmand %vm939, %vm459
    %vm944 = vmand %vm940, %vm460
    %v945 = vsel %vm941, 1, 0
    %v946 = vsel %vm942, 1, 0
    %v947 = vsel %vm943, 1, 0
    %v948 = vsel %vm944, 1, 0
    %vm949 = vcmp.eq.s32.totalorder %v945, 1
    %vm950 = vcmp.eq.s32.totalorder %v946, 1
    %vm951 = vcmp.eq.s32.totalorder %v947, 1
    %vm952 = vcmp.eq.s32.totalorder %v948, 1
    %v953 = vsel %vm949, %v917, 0.0
    %v954 = vsel %vm950, %v918, 0.0
    %v955 = vsel %vm951, %v919, 0.0
    %v956 = vsel %vm952, %v920, 0.0
    %v957 = vpack.c.bf16 %v954, %v953
    %v958 = vpack.c.bf16 %v956, %v955
    %v961 = vunpack.c.l.b16 %v957
    %v962 = vunpack.c.h.b16 %v957
    %v963 = vunpack.c.l.b16 %v958
    %v964 = vunpack.c.h.b16 %v958
    %v965 = vpack.c.b16 %v961, %v961
    %v966 = vpack.c.b16 %v962, %v962
    %v967 = vpack.c.b16 %v963, %v963
    %v968 = vpack.c.b16 %v964, %v964
    %973 = vst [vmem:[#allocation3 + $0x30] sm:$0xf] %v965
    %974 = vst [vmem:[#allocation3 + $0x70] sm:$0xf] %v966
    %975 = vst [vmem:[#allocation3 + $0xb0] sm:$0xf] %v967
    %976 = vst [vmem:[#allocation3 + $0xf0] sm:$0xf] %v968
    %v977 = vld [vmem:[#allocation2 + $0x6c] sm:$0xff]
    %v978 = vld [vmem:[#allocation2 + $0x74] sm:$0xff]
    %v979 = vld [vmem:[#allocation2 + $0x7c] sm:$0xff]
    %v980 = vld [vmem:[#allocation2 + $0x84] sm:$0xff]
    %vm981 = vmand %vm933, %vm501
    %vm982 = vmand %vm934, %vm502
    %vm983 = vmand %vm935, %vm503
    %vm984 = vmand %vm936, %vm504
    %vm985 = vmand %vm981, %vm509
    %vm986 = vmand %vm982, %vm510
    %vm987 = vmand %vm983, %vm511
    %vm988 = vmand %vm984, %vm512
    %v989 = vsel %vm985, 1, 0
    %v990 = vsel %vm986, 1, 0
    %v991 = vsel %vm987, 1, 0
    %v992 = vsel %vm988, 1, 0
    %vm993 = vcmp.eq.s32.totalorder %v989, 1
    %vm994 = vcmp.eq.s32.totalorder %v990, 1
    %vm995 = vcmp.eq.s32.totalorder %v991, 1
    %vm996 = vcmp.eq.s32.totalorder %v992, 1
    %v997 = vsel %vm993, %v977, 0.0
    %v998 = vsel %vm994, %v978, 0.0
    %v999 = vsel %vm995, %v979, 0.0
    %v1000 = vsel %vm996, %v980, 0.0
    %v1001 = vpack.c.bf16 %v998, %v997
    %v1002 = vpack.c.bf16 %v1000, %v999
    %v1005 = vunpack.c.l.b16 %v1001
    %v1006 = vunpack.c.h.b16 %v1001
    %v1007 = vunpack.c.l.b16 %v1002
    %v1008 = vunpack.c.h.b16 %v1002
    %v1009 = vpack.c.b16 %v1005, %v1005
    %v1010 = vpack.c.b16 %v1006, %v1006
    %v1011 = vpack.c.b16 %v1007, %v1007
    %v1012 = vpack.c.b16 %v1008, %v1008
    %1017 = vst [vmem:[#allocation3 + $0x34] sm:$0xf] %v1009
    %1018 = vst [vmem:[#allocation3 + $0x74] sm:$0xf] %v1010
    %1019 = vst [vmem:[#allocation3 + $0xb4] sm:$0xf] %v1011
    %1020 = vst [vmem:[#allocation3 + $0xf4] sm:$0xf] %v1012
    %v1021 = vld [vmem:[#allocation2 + $0x4c] sm:$0xff]
    %v1022 = vld [vmem:[#allocation2 + $0x54] sm:$0xff]
    %v1023 = vld [vmem:[#allocation2 + $0x5c] sm:$0xff]
    %v1024 = vld [vmem:[#allocation2 + $0x64] sm:$0xff]
    %v1025 = vsel %vm993, %v1021, 0.0
    %v1026 = vsel %vm994, %v1022, 0.0
    %v1027 = vsel %vm995, %v1023, 0.0
    %v1028 = vsel %vm996, %v1024, 0.0
    %v1029 = vpack.c.bf16 %v1026, %v1025
    %v1030 = vpack.c.bf16 %v1028, %v1027
    %v1033 = vunpack.c.l.b16 %v1029
    %v1034 = vunpack.c.h.b16 %v1029
    %v1035 = vunpack.c.l.b16 %v1030
    %v1036 = vunpack.c.h.b16 %v1030
    %v1037 = vpack.c.b16 %v1033, %v1033
    %v1038 = vpack.c.b16 %v1034, %v1034
    %v1039 = vpack.c.b16 %v1035, %v1035
    %v1040 = vpack.c.b16 %v1036, %v1036
    %1045 = vst [vmem:[#allocation3 + $0x38] sm:$0xf] %v1037
    %1046 = vst [vmem:[#allocation3 + $0x78] sm:$0xf] %v1038
    %1047 = vst [vmem:[#allocation3 + $0xb8] sm:$0xf] %v1039
    %1048 = vst [vmem:[#allocation3 + $0xf8] sm:$0xf] %v1040
    %v1049 = vld [vmem:[#allocation2 + $0x6d] sm:$0xff]
    %v1050 = vld [vmem:[#allocation2 + $0x75] sm:$0xff]
    %v1051 = vld [vmem:[#allocation2 + $0x7d] sm:$0xff]
    %v1052 = vld [vmem:[#allocation2 + $0x85] sm:$0xff]
    %vm1053 = vmand %vm933, %vm585
    %vm1054 = vmand %vm934, %vm586
    %vm1055 = vmand %vm935, %vm587
    %vm1056 = vmand %vm936, %vm588
    %vm1057 = vmand %vm1053, %vm593
    %vm1058 = vmand %vm1054, %vm594
    %vm1059 = vmand %vm1055, %vm595
    %vm1060 = vmand %vm1056, %vm596
    %v1061 = vsel %vm1057, 1, 0
    %v1062 = vsel %vm1058, 1, 0
    %v1063 = vsel %vm1059, 1, 0
    %v1064 = vsel %vm1060, 1, 0
    %vm1065 = vcmp.eq.s32.totalorder %v1061, 1
    %vm1066 = vcmp.eq.s32.totalorder %v1062, 1
    %vm1067 = vcmp.eq.s32.totalorder %v1063, 1
    %vm1068 = vcmp.eq.s32.totalorder %v1064, 1
    %v1069 = vsel %vm1065, %v1049, 0.0
    %v1070 = vsel %vm1066, %v1050, 0.0
    %v1071 = vsel %vm1067, %v1051, 0.0
    %v1072 = vsel %vm1068, %v1052, 0.0
    %v1073 = vpack.c.bf16 %v1070, %v1069
    %v1074 = vpack.c.bf16 %v1072, %v1071
    %v1077 = vunpack.c.l.b16 %v1073
    %v1078 = vunpack.c.h.b16 %v1073
    %v1079 = vunpack.c.l.b16 %v1074
    %v1080 = vunpack.c.h.b16 %v1074
    %v1081 = vpack.c.b16 %v1077, %v1077
    %v1082 = vpack.c.b16 %v1078, %v1078
    %v1083 = vpack.c.b16 %v1079, %v1079
    %v1084 = vpack.c.b16 %v1080, %v1080
    %1089 = vst [vmem:[#allocation3 + $0x3c] sm:$0xf] %v1081
    %1090 = vst [vmem:[#allocation3 + $0x7c] sm:$0xf] %v1082
    %1091 = vst [vmem:[#allocation3 + $0xbc] sm:$0xf] %v1083
    %1092 = vst [vmem:[#allocation3 + $0xfc] sm:$0xf] %v1084
    %v1093 = vld [vmem:[#allocation3] sm:$0xff]
    %v1094 = vld [vmem:[#allocation3 + $0x8] sm:$0xff]
    %v1095 = vld [vmem:[#allocation3 + $0x10] sm:$0xff]
    %v1096 = vld [vmem:[#allocation3 + $0x18] sm:$0xff]
    %v1097 = vld [vmem:[#allocation3 + $0x20] sm:$0xff]
    %v1098 = vld [vmem:[#allocation3 + $0x28] sm:$0xff]
    %v1099 = vld [vmem:[#allocation3 + $0x30] sm:$0xff]
    %v1100 = vld [vmem:[#allocation3 + $0x38] sm:$0xff]
    %v1101 = vld [vmem:[#allocation3 + $0x40] sm:$0xff]
    %v1102 = vld [vmem:[#allocation3 + $0x48] sm:$0xff]
    %v1103 = vld [vmem:[#allocation3 + $0x50] sm:$0xff]
    %v1104 = vld [vmem:[#allocation3 + $0x58] sm:$0xff]
    %v1105 = vld [vmem:[#allocation3 + $0x60] sm:$0xff]
    %v1106 = vld [vmem:[#allocation3 + $0x68] sm:$0xff]
    %v1107 = vld [vmem:[#allocation3 + $0x70] sm:$0xff]
    %v1108 = vld [vmem:[#allocation3 + $0x78] sm:$0xff]
    %v1109 = vld [vmem:[#allocation3 + $0x80] sm:$0xff]
    %v1110 = vld [vmem:[#allocation3 + $0x88] sm:$0xff]
    %v1111 = vld [vmem:[#allocation3 + $0x90] sm:$0xff]
    %v1112 = vld [vmem:[#allocation3 + $0x98] sm:$0xff]
    %v1113 = vld [vmem:[#allocation3 + $0xa0] sm:$0xff]
    %v1114 = vld [vmem:[#allocation3 + $0xa8] sm:$0xff]
    %v1115 = vld [vmem:[#allocation3 + $0xb0] sm:$0xff]
    %v1116 = vld [vmem:[#allocation3 + $0xb8] sm:$0xff]
    %v1117 = vld [vmem:[#allocation3 + $0xc0] sm:$0xff]
    %v1118 = vld [vmem:[#allocation3 + $0xc8] sm:$0xff]
    %v1119 = vld [vmem:[#allocation3 + $0xd0] sm:$0xff]
    %v1120 = vld [vmem:[#allocation3 + $0xd8] sm:$0xff]
    %v1121 = vld [vmem:[#allocation3 + $0xe0] sm:$0xff]
    %v1122 = vld [vmem:[#allocation3 + $0xe8] sm:$0xff]
    %v1123 = vld [vmem:[#allocation3 + $0xf0] sm:$0xff]
    %v1124 = vld [vmem:[#allocation3 + $0xf8] sm:$0xff]
    %v1125 = vld [vmem:[#allocation5] sm:$0xff]
    %v1126 = vld [vmem:[#allocation5 + $0x8] sm:$0xff]
    %v1127 = vld [vmem:[#allocation5 + $0x10] sm:$0xff]
    %v1128 = vld [vmem:[#allocation5 + $0x18] sm:$0xff]
    %v1129 = vld [vmem:[#allocation5 + $0x20] sm:$0xff]
    %v1130 = vld [vmem:[#allocation5 + $0x28] sm:$0xff]
    %v1131 = vld [vmem:[#allocation5 + $0x30] sm:$0xff]
    %v1132 = vld [vmem:[#allocation5 + $0x38] sm:$0xff]
    %v1133 = vld [vmem:[#allocation5 + $0x40] sm:$0xff]
    %v1134 = vld [vmem:[#allocation5 + $0x48] sm:$0xff]
    %v1135 = vld [vmem:[#allocation5 + $0x50] sm:$0xff]
    %v1136 = vld [vmem:[#allocation5 + $0x58] sm:$0xff]
    %v1137 = vld [vmem:[#allocation5 + $0x60] sm:$0xff]
    %v1138 = vld [vmem:[#allocation5 + $0x68] sm:$0xff]
    %v1139 = vld [vmem:[#allocation5 + $0x70] sm:$0xff]
    %v1140 = vld [vmem:[#allocation5 + $0x78] sm:$0xff]
    %v1141 = vld [vmem:[#allocation5 + $0x80] sm:$0xff]
    %v1142 = vld [vmem:[#allocation5 + $0x88] sm:$0xff]
    %v1143 = vld [vmem:[#allocation5 + $0x90] sm:$0xff]
    %v1144 = vld [vmem:[#allocation5 + $0x98] sm:$0xff]
    %v1145 = vld [vmem:[#allocation5 + $0xa0] sm:$0xff]
    %v1146 = vld [vmem:[#allocation5 + $0xa8] sm:$0xff]
    %v1147 = vld [vmem:[#allocation5 + $0xb0] sm:$0xff]
    %v1148 = vld [vmem:[#allocation5 + $0xb8] sm:$0xff]
    %v1149 = vld [vmem:[#allocation5 + $0xc0] sm:$0xff]
    %v1150 = vld [vmem:[#allocation5 + $0xc8] sm:$0xff]
    %v1151 = vld [vmem:[#allocation5 + $0xd0] sm:$0xff]
    %v1152 = vld [vmem:[#allocation5 + $0xd8] sm:$0xff]
    %v1153 = vld [vmem:[#allocation5 + $0xe0] sm:$0xff]
    %v1154 = vld [vmem:[#allocation5 + $0xe8] sm:$0xff]
    %v1155 = vld [vmem:[#allocation5 + $0xf0] sm:$0xff]
    %v1156 = vld [vmem:[#allocation5 + $0xf8] sm:$0xff]
    %v1157 = vld [vmem:[#allocation5 + $0x100] sm:$0xff]
    %v1158 = vld [vmem:[#allocation5 + $0x108] sm:$0xff]
    %v1159 = vld [vmem:[#allocation5 + $0x110] sm:$0xff]
    %v1160 = vld [vmem:[#allocation5 + $0x118] sm:$0xff]
    %v1161 = vld [vmem:[#allocation5 + $0x120] sm:$0xff]
    %v1162 = vld [vmem:[#allocation5 + $0x128] sm:$0xff]
    %v1163 = vld [vmem:[#allocation5 + $0x130] sm:$0xff]
    %v1164 = vld [vmem:[#allocation5 + $0x138] sm:$0xff]
    %v1165 = vld [vmem:[#allocation5 + $0x140] sm:$0xff]
    %v1166 = vld [vmem:[#allocation5 + $0x148] sm:$0xff]
    %v1167 = vld [vmem:[#allocation5 + $0x150] sm:$0xff]
    %v1168 = vld [vmem:[#allocation5 + $0x158] sm:$0xff]
    %v1169 = vld [vmem:[#allocation5 + $0x160] sm:$0xff]
    %v1170 = vld [vmem:[#allocation5 + $0x168] sm:$0xff]
    %v1171 = vld [vmem:[#allocation5 + $0x170] sm:$0xff]
    %v1172 = vld [vmem:[#allocation5 + $0x178] sm:$0xff]
    %v1173 = vld [vmem:[#allocation5 + $0x180] sm:$0xff]
    %v1174 = vld [vmem:[#allocation5 + $0x188] sm:$0xff]
    %v1175 = vld [vmem:[#allocation5 + $0x190] sm:$0xff]
    %v1176 = vld [vmem:[#allocation5 + $0x198] sm:$0xff]
    %v1177 = vld [vmem:[#allocation5 + $0x1a0] sm:$0xff]
    %v1178 = vld [vmem:[#allocation5 + $0x1a8] sm:$0xff]
    %v1179 = vld [vmem:[#allocation5 + $0x1b0] sm:$0xff]
    %v1180 = vld [vmem:[#allocation5 + $0x1b8] sm:$0xff]
    %v1181 = vld [vmem:[#allocation5 + $0x1c0] sm:$0xff]
    %v1182 = vld [vmem:[#allocation5 + $0x1c8] sm:$0xff]
    %v1183 = vld [vmem:[#allocation5 + $0x1d0] sm:$0xff]
    %v1184 = vld [vmem:[#allocation5 + $0x1d8] sm:$0xff]
    %v1185 = vld [vmem:[#allocation5 + $0x1e0] sm:$0xff]
    %v1186 = vld [vmem:[#allocation5 + $0x1e8] sm:$0xff]
    %v1187 = vld [vmem:[#allocation5 + $0x1f0] sm:$0xff]
    %v1188 = vld [vmem:[#allocation5 + $0x1f8] sm:$0xff]
    %v1189 = vld [vmem:[#allocation5 + $0x200] sm:$0xff]
    %v1190 = vld [vmem:[#allocation5 + $0x208] sm:$0xff]
    %v1191 = vld [vmem:[#allocation5 + $0x210] sm:$0xff]
    %v1192 = vld [vmem:[#allocation5 + $0x218] sm:$0xff]
    %v1193 = vld [vmem:[#allocation5 + $0x220] sm:$0xff]
    %v1194 = vld [vmem:[#allocation5 + $0x228] sm:$0xff]
    %v1195 = vld [vmem:[#allocation5 + $0x230] sm:$0xff]
    %v1196 = vld [vmem:[#allocation5 + $0x238] sm:$0xff]
    %v1197 = vld [vmem:[#allocation5 + $0x240] sm:$0xff]
    %v1198 = vld [vmem:[#allocation5 + $0x248] sm:$0xff]
    %v1199 = vld [vmem:[#allocation5 + $0x250] sm:$0xff]
    %v1200 = vld [vmem:[#allocation5 + $0x258] sm:$0xff]
    %v1201 = vld [vmem:[#allocation5 + $0x260] sm:$0xff]
    %v1202 = vld [vmem:[#allocation5 + $0x268] sm:$0xff]
    %v1203 = vld [vmem:[#allocation5 + $0x270] sm:$0xff]
    %v1204 = vld [vmem:[#allocation5 + $0x278] sm:$0xff]
    %v1205 = vld [vmem:[#allocation5 + $0x280] sm:$0xff]
    %v1206 = vld [vmem:[#allocation5 + $0x288] sm:$0xff]
    %v1207 = vld [vmem:[#allocation5 + $0x290] sm:$0xff]
    %v1208 = vld [vmem:[#allocation5 + $0x298] sm:$0xff]
    %v1209 = vld [vmem:[#allocation5 + $0x2a0] sm:$0xff]
    %v1210 = vld [vmem:[#allocation5 + $0x2a8] sm:$0xff]
    %v1211 = vld [vmem:[#allocation5 + $0x2b0] sm:$0xff]
    %v1212 = vld [vmem:[#allocation5 + $0x2b8] sm:$0xff]
    %v1213 = vld [vmem:[#allocation5 + $0x2c0] sm:$0xff]
    %v1214 = vld [vmem:[#allocation5 + $0x2c8] sm:$0xff]
    %v1215 = vld [vmem:[#allocation5 + $0x2d0] sm:$0xff]
    %v1216 = vld [vmem:[#allocation5 + $0x2d8] sm:$0xff]
    %v1217 = vld [vmem:[#allocation5 + $0x2e0] sm:$0xff]
    %v1218 = vld [vmem:[#allocation5 + $0x2e8] sm:$0xff]
    %v1219 = vld [vmem:[#allocation5 + $0x2f0] sm:$0xff]
    %v1220 = vld [vmem:[#allocation5 + $0x2f8] sm:$0xff]
    %v1221 = vld [vmem:[#allocation5 + $0x300] sm:$0xff]
    %v1222 = vld [vmem:[#allocation5 + $0x308] sm:$0xff]
    %v1223 = vld [vmem:[#allocation5 + $0x310] sm:$0xff]
    %v1224 = vld [vmem:[#allocation5 + $0x318] sm:$0xff]
    %v1225 = vld [vmem:[#allocation5 + $0x320] sm:$0xff]
    %v1226 = vld [vmem:[#allocation5 + $0x328] sm:$0xff]
    %v1227 = vld [vmem:[#allocation5 + $0x330] sm:$0xff]
    %v1228 = vld [vmem:[#allocation5 + $0x338] sm:$0xff]
    %v1229 = vld [vmem:[#allocation5 + $0x340] sm:$0xff]
    %v1230 = vld [vmem:[#allocation5 + $0x348] sm:$0xff]
    %v1231 = vld [vmem:[#allocation5 + $0x350] sm:$0xff]
    %v1232 = vld [vmem:[#allocation5 + $0x358] sm:$0xff]
    %v1233 = vld [vmem:[#allocation5 + $0x360] sm:$0xff]
    %v1234 = vld [vmem:[#allocation5 + $0x368] sm:$0xff]
    %v1235 = vld [vmem:[#allocation5 + $0x370] sm:$0xff]
    %v1236 = vld [vmem:[#allocation5 + $0x378] sm:$0xff]
    %v1237 = vld [vmem:[#allocation5 + $0x380] sm:$0xff]
    %v1238 = vld [vmem:[#allocation5 + $0x388] sm:$0xff]
    %v1239 = vld [vmem:[#allocation5 + $0x390] sm:$0xff]
    %v1240 = vld [vmem:[#allocation5 + $0x398] sm:$0xff]
    %v1241 = vld [vmem:[#allocation5 + $0x3a0] sm:$0xff]
    %v1242 = vld [vmem:[#allocation5 + $0x3a8] sm:$0xff]
    %v1243 = vld [vmem:[#allocation5 + $0x3b0] sm:$0xff]
    %v1244 = vld [vmem:[#allocation5 + $0x3b8] sm:$0xff]
    %v1245 = vld [vmem:[#allocation5 + $0x3c0] sm:$0xff]
    %v1246 = vld [vmem:[#allocation5 + $0x3c8] sm:$0xff]
    %v1247 = vld [vmem:[#allocation5 + $0x3d0] sm:$0xff]
    %v1248 = vld [vmem:[#allocation5 + $0x3d8] sm:$0xff]
    %v1249 = vld [vmem:[#allocation5 + $0x3e0] sm:$0xff]
    %v1250 = vld [vmem:[#allocation5 + $0x3e8] sm:$0xff]
    %v1251 = vld [vmem:[#allocation5 + $0x3f0] sm:$0xff]
    %v1252 = vld [vmem:[#allocation5 + $0x3f8] sm:$0xff]
    %v1253 = vld [vmem:[#allocation5 + $0x400] sm:$0xff]
    %v1254 = vld [vmem:[#allocation5 + $0x408] sm:$0xff]
    %v1255 = vld [vmem:[#allocation5 + $0x410] sm:$0xff]
    %v1256 = vld [vmem:[#allocation5 + $0x418] sm:$0xff]
    %v1257 = vld [vmem:[#allocation5 + $0x420] sm:$0xff]
    %v1258 = vld [vmem:[#allocation5 + $0x428] sm:$0xff]
    %v1259 = vld [vmem:[#allocation5 + $0x430] sm:$0xff]
    %v1260 = vld [vmem:[#allocation5 + $0x438] sm:$0xff]
    %v1261 = vld [vmem:[#allocation5 + $0x440] sm:$0xff]
    %v1262 = vld [vmem:[#allocation5 + $0x448] sm:$0xff]
    %v1263 = vld [vmem:[#allocation5 + $0x450] sm:$0xff]
    %v1264 = vld [vmem:[#allocation5 + $0x458] sm:$0xff]
    %v1265 = vld [vmem:[#allocation5 + $0x460] sm:$0xff]
    %v1266 = vld [vmem:[#allocation5 + $0x468] sm:$0xff]
    %v1267 = vld [vmem:[#allocation5 + $0x470] sm:$0xff]
    %v1268 = vld [vmem:[#allocation5 + $0x478] sm:$0xff]
    %v1269 = vld [vmem:[#allocation5 + $0x480] sm:$0xff]
    %v1270 = vld [vmem:[#allocation5 + $0x488] sm:$0xff]
    %v1271 = vld [vmem:[#allocation5 + $0x490] sm:$0xff]
    %v1272 = vld [vmem:[#allocation5 + $0x498] sm:$0xff]
    %v1273 = vld [vmem:[#allocation5 + $0x4a0] sm:$0xff]
    %v1274 = vld [vmem:[#allocation5 + $0x4a8] sm:$0xff]
    %v1275 = vld [vmem:[#allocation5 + $0x4b0] sm:$0xff]
    %v1276 = vld [vmem:[#allocation5 + $0x4b8] sm:$0xff]
    %v1277 = vld [vmem:[#allocation5 + $0x4c0] sm:$0xff]
    %v1278 = vld [vmem:[#allocation5 + $0x4c8] sm:$0xff]
    %v1279 = vld [vmem:[#allocation5 + $0x4d0] sm:$0xff]
    %v1280 = vld [vmem:[#allocation5 + $0x4d8] sm:$0xff]
    %v1281 = vld [vmem:[#allocation5 + $0x4e0] sm:$0xff]
    %v1282 = vld [vmem:[#allocation5 + $0x4e8] sm:$0xff]
    %v1283 = vld [vmem:[#allocation5 + $0x4f0] sm:$0xff]
    %v1284 = vld [vmem:[#allocation5 + $0x4f8] sm:$0xff]
    %v1285 = vld [vmem:[#allocation5 + $0x500] sm:$0xff]
    %v1286 = vld [vmem:[#allocation5 + $0x508] sm:$0xff]
    %v1287 = vld [vmem:[#allocation5 + $0x510] sm:$0xff]
    %v1288 = vld [vmem:[#allocation5 + $0x518] sm:$0xff]
    %v1289 = vld [vmem:[#allocation5 + $0x520] sm:$0xff]
    %v1290 = vld [vmem:[#allocation5 + $0x528] sm:$0xff]
    %v1291 = vld [vmem:[#allocation5 + $0x530] sm:$0xff]
    %v1292 = vld [vmem:[#allocation5 + $0x538] sm:$0xff]
    %v1293 = vld [vmem:[#allocation5 + $0x540] sm:$0xff]
    %v1294 = vld [vmem:[#allocation5 + $0x548] sm:$0xff]
    %v1295 = vld [vmem:[#allocation5 + $0x550] sm:$0xff]
    %v1296 = vld [vmem:[#allocation5 + $0x558] sm:$0xff]
    %v1297 = vld [vmem:[#allocation5 + $0x560] sm:$0xff]
    %v1298 = vld [vmem:[#allocation5 + $0x568] sm:$0xff]
    %v1299 = vld [vmem:[#allocation5 + $0x570] sm:$0xff]
    %v1300 = vld [vmem:[#allocation5 + $0x578] sm:$0xff]
    %v1301 = vld [vmem:[#allocation5 + $0x580] sm:$0xff]
    %v1302 = vld [vmem:[#allocation5 + $0x588] sm:$0xff]
    %v1303 = vld [vmem:[#allocation5 + $0x590] sm:$0xff]
    %v1304 = vld [vmem:[#allocation5 + $0x598] sm:$0xff]
    %v1305 = vld [vmem:[#allocation5 + $0x5a0] sm:$0xff]
    %v1306 = vld [vmem:[#allocation5 + $0x5a8] sm:$0xff]
    %v1307 = vld [vmem:[#allocation5 + $0x5b0] sm:$0xff]
    %v1308 = vld [vmem:[#allocation5 + $0x5b8] sm:$0xff]
    %v1309 = vld [vmem:[#allocation5 + $0x5c0] sm:$0xff]
    %v1310 = vld [vmem:[#allocation5 + $0x5c8] sm:$0xff]
    %v1311 = vld [vmem:[#allocation5 + $0x5d0] sm:$0xff]
    %v1312 = vld [vmem:[#allocation5 + $0x5d8] sm:$0xff]
    %v1313 = vld [vmem:[#allocation5 + $0x5e0] sm:$0xff]
    %v1314 = vld [vmem:[#allocation5 + $0x5e8] sm:$0xff]
    %v1315 = vld [vmem:[#allocation5 + $0x5f0] sm:$0xff]
    %v1316 = vld [vmem:[#allocation5 + $0x5f8] sm:$0xff]
    %v1317 = vld [vmem:[#allocation5 + $0x600] sm:$0xff]
    %v1318 = vld [vmem:[#allocation5 + $0x608] sm:$0xff]
    %v1319 = vld [vmem:[#allocation5 + $0x610] sm:$0xff]
    %v1320 = vld [vmem:[#allocation5 + $0x618] sm:$0xff]
    %v1321 = vld [vmem:[#allocation5 + $0x620] sm:$0xff]
    %v1322 = vld [vmem:[#allocation5 + $0x628] sm:$0xff]
    %v1323 = vld [vmem:[#allocation5 + $0x630] sm:$0xff]
    %v1324 = vld [vmem:[#allocation5 + $0x638] sm:$0xff]
    %v1325 = vld [vmem:[#allocation5 + $0x640] sm:$0xff]
    %v1326 = vld [vmem:[#allocation5 + $0x648] sm:$0xff]
    %v1327 = vld [vmem:[#allocation5 + $0x650] sm:$0xff]
    %v1328 = vld [vmem:[#allocation5 + $0x658] sm:$0xff]
    %v1329 = vld [vmem:[#allocation5 + $0x660] sm:$0xff]
    %v1330 = vld [vmem:[#allocation5 + $0x668] sm:$0xff]
    %v1331 = vld [vmem:[#allocation5 + $0x670] sm:$0xff]
    %v1332 = vld [vmem:[#allocation5 + $0x678] sm:$0xff]
    %v1333 = vld [vmem:[#allocation5 + $0x680] sm:$0xff]
    %v1334 = vld [vmem:[#allocation5 + $0x688] sm:$0xff]
    %v1335 = vld [vmem:[#allocation5 + $0x690] sm:$0xff]
    %v1336 = vld [vmem:[#allocation5 + $0x698] sm:$0xff]
    %v1337 = vld [vmem:[#allocation5 + $0x6a0] sm:$0xff]
    %v1338 = vld [vmem:[#allocation5 + $0x6a8] sm:$0xff]
    %v1339 = vld [vmem:[#allocation5 + $0x6b0] sm:$0xff]
    %v1340 = vld [vmem:[#allocation5 + $0x6b8] sm:$0xff]
    %v1341 = vld [vmem:[#allocation5 + $0x6c0] sm:$0xff]
    %v1342 = vld [vmem:[#allocation5 + $0x6c8] sm:$0xff]
    %v1343 = vld [vmem:[#allocation5 + $0x6d0] sm:$0xff]
    %v1344 = vld [vmem:[#allocation5 + $0x6d8] sm:$0xff]
    %v1345 = vld [vmem:[#allocation5 + $0x6e0] sm:$0xff]
    %v1346 = vld [vmem:[#allocation5 + $0x6e8] sm:$0xff]
    %v1347 = vld [vmem:[#allocation5 + $0x6f0] sm:$0xff]
    %v1348 = vld [vmem:[#allocation5 + $0x6f8] sm:$0xff]
    %v1349 = vld [vmem:[#allocation5 + $0x700] sm:$0xff]
    %v1350 = vld [vmem:[#allocation5 + $0x708] sm:$0xff]
    %v1351 = vld [vmem:[#allocation5 + $0x710] sm:$0xff]
    %v1352 = vld [vmem:[#allocation5 + $0x718] sm:$0xff]
    %v1353 = vld [vmem:[#allocation5 + $0x720] sm:$0xff]
    %v1354 = vld [vmem:[#allocation5 + $0x728] sm:$0xff]
    %v1355 = vld [vmem:[#allocation5 + $0x730] sm:$0xff]
    %v1356 = vld [vmem:[#allocation5 + $0x738] sm:$0xff]
    %v1357 = vld [vmem:[#allocation5 + $0x740] sm:$0xff]
    %v1358 = vld [vmem:[#allocation5 + $0x748] sm:$0xff]
    %v1359 = vld [vmem:[#allocation5 + $0x750] sm:$0xff]
    %v1360 = vld [vmem:[#allocation5 + $0x758] sm:$0xff]
    %v1361 = vld [vmem:[#allocation5 + $0x760] sm:$0xff]
    %v1362 = vld [vmem:[#allocation5 + $0x768] sm:$0xff]
    %v1363 = vld [vmem:[#allocation5 + $0x770] sm:$0xff]
    %v1364 = vld [vmem:[#allocation5 + $0x778] sm:$0xff]
    %v1365 = vld [vmem:[#allocation5 + $0x780] sm:$0xff]
    %v1366 = vld [vmem:[#allocation5 + $0x788] sm:$0xff]
    %v1367 = vld [vmem:[#allocation5 + $0x790] sm:$0xff]
    %v1368 = vld [vmem:[#allocation5 + $0x798] sm:$0xff]
    %v1369 = vld [vmem:[#allocation5 + $0x7a0] sm:$0xff]
    %v1370 = vld [vmem:[#allocation5 + $0x7a8] sm:$0xff]
    %v1371 = vld [vmem:[#allocation5 + $0x7b0] sm:$0xff]
    %v1372 = vld [vmem:[#allocation5 + $0x7b8] sm:$0xff]
    %v1373 = vld [vmem:[#allocation5 + $0x7c0] sm:$0xff]
    %v1374 = vld [vmem:[#allocation5 + $0x7c8] sm:$0xff]
    %v1375 = vld [vmem:[#allocation5 + $0x7d0] sm:$0xff]
    %v1376 = vld [vmem:[#allocation5 + $0x7d8] sm:$0xff]
    %v1377 = vld [vmem:[#allocation5 + $0x7e0] sm:$0xff]
    %v1378 = vld [vmem:[#allocation5 + $0x7e8] sm:$0xff]
    %v1379 = vld [vmem:[#allocation5 + $0x7f0] sm:$0xff]
    %v1380 = vld [vmem:[#allocation5 + $0x7f8] sm:$0xff]
    %v1381 = vld [vmem:[%s4] sm:$0x3]
    %v1383 = vlaneseq
    %v1384 = vshrl.u32 %v1383, 7
    %v1385 = vsub.s32 0, %v1384
    %v1386 = vrot.slane %v1381, %v1385
    %v1387 = vlaneseq
    %v1388 = vshrl.u32 %v1387, 7
    %v1389 = vsub.s32 1, %v1388
    %v1390 = vrot.slane %v1381, %v1389
    %v1425 = vunpack.c.l.b16 %v1093
    %v1426 = vunpack.c.h.b16 %v1093
    %v1427 = vunpack.c.l.b16 %v1094
    %v1428 = vunpack.c.h.b16 %v1094
    %v1429 = vunpack.c.l.b16 %v1095
    %v1430 = vunpack.c.h.b16 %v1095
    %v1431 = vunpack.c.l.b16 %v1096
    %v1432 = vunpack.c.h.b16 %v1096
    %v1433 = vunpack.c.l.b16 %v1097
    %v1434 = vunpack.c.h.b16 %v1097
    %v1435 = vunpack.c.l.b16 %v1098
    %v1436 = vunpack.c.h.b16 %v1098
    %v1437 = vunpack.c.l.b16 %v1099
    %v1438 = vunpack.c.h.b16 %v1099
    %v1439 = vunpack.c.l.b16 %v1100
    %v1440 = vunpack.c.h.b16 %v1100
    %v1441 = vunpack.c.l.b16 %v1101
    %v1442 = vunpack.c.h.b16 %v1101
    %v1443 = vunpack.c.l.b16 %v1102
    %v1444 = vunpack.c.h.b16 %v1102
    %v1445 = vunpack.c.l.b16 %v1103
    %v1446 = vunpack.c.h.b16 %v1103
    %v1447 = vunpack.c.l.b16 %v1104
    %v1448 = vunpack.c.h.b16 %v1104
    %v1449 = vunpack.c.l.b16 %v1105
    %v1450 = vunpack.c.h.b16 %v1105
    %v1451 = vunpack.c.l.b16 %v1106
    %v1452 = vunpack.c.h.b16 %v1106
    %v1453 = vunpack.c.l.b16 %v1107
    %v1454 = vunpack.c.h.b16 %v1107
    %v1455 = vunpack.c.l.b16 %v1108
    %v1456 = vunpack.c.h.b16 %v1108
    %v1457 = vunpack.c.l.b16 %v1109
    %v1458 = vunpack.c.h.b16 %v1109
    %v1459 = vunpack.c.l.b16 %v1110
    %v1460 = vunpack.c.h.b16 %v1110
    %v1461 = vunpack.c.l.b16 %v1111
    %v1462 = vunpack.c.h.b16 %v1111
    %v1463 = vunpack.c.l.b16 %v1112
    %v1464 = vunpack.c.h.b16 %v1112
    %v1465 = vunpack.c.l.b16 %v1113
    %v1466 = vunpack.c.h.b16 %v1113
    %v1467 = vunpack.c.l.b16 %v1114
    %v1468 = vunpack.c.h.b16 %v1114
    %v1469 = vunpack.c.l.b16 %v1115
    %v1470 = vunpack.c.h.b16 %v1115
    %v1471 = vunpack.c.l.b16 %v1116
    %v1472 = vunpack.c.h.b16 %v1116
    %v1473 = vunpack.c.l.b16 %v1117
    %v1474 = vunpack.c.h.b16 %v1117
    %v1475 = vunpack.c.l.b16 %v1118
    %v1476 = vunpack.c.h.b16 %v1118
    %v1477 = vunpack.c.l.b16 %v1119
    %v1478 = vunpack.c.h.b16 %v1119
    %v1479 = vunpack.c.l.b16 %v1120
    %v1480 = vunpack.c.h.b16 %v1120
    %v1481 = vunpack.c.l.b16 %v1121
    %v1482 = vunpack.c.h.b16 %v1121
    %v1483 = vunpack.c.l.b16 %v1122
    %v1484 = vunpack.c.h.b16 %v1122
    %v1485 = vunpack.c.l.b16 %v1123
    %v1486 = vunpack.c.h.b16 %v1123
    %v1487 = vunpack.c.l.b16 %v1124
    %v1488 = vunpack.c.h.b16 %v1124
    %v1489 = vpack.c.b16 %v1441, %v1425
    %v1490 = vpack.c.b16 %v1442, %v1426
    %v1491 = vpack.c.b16 %v1443, %v1427
    %v1492 = vpack.c.b16 %v1444, %v1428
    %v1493 = vpack.c.b16 %v1445, %v1429
    %v1494 = vpack.c.b16 %v1446, %v1430
    %v1495 = vpack.c.b16 %v1447, %v1431
    %v1496 = vpack.c.b16 %v1448, %v1432
    %v1497 = vpack.c.b16 %v1449, %v1433
    %v1498 = vpack.c.b16 %v1450, %v1434
    %v1499 = vpack.c.b16 %v1451, %v1435
    %v1500 = vpack.c.b16 %v1452, %v1436
    %v1501 = vpack.c.b16 %v1453, %v1437
    %v1502 = vpack.c.b16 %v1454, %v1438
    %v1503 = vpack.c.b16 %v1455, %v1439
    %v1504 = vpack.c.b16 %v1456, %v1440
    %v1505 = vpack.c.b16 %v1473, %v1457
    %v1506 = vpack.c.b16 %v1474, %v1458
    %v1507 = vpack.c.b16 %v1475, %v1459
    %v1508 = vpack.c.b16 %v1476, %v1460
    %v1509 = vpack.c.b16 %v1477, %v1461
    %v1510 = vpack.c.b16 %v1478, %v1462
    %v1511 = vpack.c.b16 %v1479, %v1463
    %v1512 = vpack.c.b16 %v1480, %v1464
    %v1513 = vpack.c.b16 %v1481, %v1465
    %v1514 = vpack.c.b16 %v1482, %v1466
    %v1515 = vpack.c.b16 %v1483, %v1467
    %v1516 = vpack.c.b16 %v1484, %v1468
    %v1517 = vpack.c.b16 %v1485, %v1469
    %v1518 = vpack.c.b16 %v1486, %v1470
    %v1519 = vpack.c.b16 %v1487, %v1471
    %v1520 = vpack.c.b16 %v1488, %v1472
    %v1809 = vunpack.c.l.b16 %v1125
    %v1810 = vunpack.c.h.b16 %v1125
    %v1811 = vunpack.c.l.b16 %v1126
    %v1812 = vunpack.c.h.b16 %v1126
    %v1813 = vunpack.c.l.b16 %v1127
    %v1814 = vunpack.c.h.b16 %v1127
    %v1815 = vunpack.c.l.b16 %v1128
    %v1816 = vunpack.c.h.b16 %v1128
    %v1817 = vunpack.c.l.b16 %v1129
    %v1818 = vunpack.c.h.b16 %v1129
    %v1819 = vunpack.c.l.b16 %v1130
    %v1820 = vunpack.c.h.b16 %v1130
    %v1821 = vunpack.c.l.b16 %v1131
    %v1822 = vunpack.c.h.b16 %v1131
    %v1823 = vunpack.c.l.b16 %v1132
    %v1824 = vunpack.c.h.b16 %v1132
    %v1825 = vunpack.c.l.b16 %v1133
    %v1826 = vunpack.c.h.b16 %v1133
    %v1827 = vunpack.c.l.b16 %v1134
    %v1828 = vunpack.c.h.b16 %v1134
    %v1829 = vunpack.c.l.b16 %v1135
    %v1830 = vunpack.c.h.b16 %v1135
    %v1831 = vunpack.c.l.b16 %v1136
    %v1832 = vunpack.c.h.b16 %v1136
    %v1833 = vunpack.c.l.b16 %v1137
    %v1834 = vunpack.c.h.b16 %v1137
    %v1835 = vunpack.c.l.b16 %v1138
    %v1836 = vunpack.c.h.b16 %v1138
    %v1837 = vunpack.c.l.b16 %v1139
    %v1838 = vunpack.c.h.b16 %v1139
    %v1839 = vunpack.c.l.b16 %v1140
    %v1840 = vunpack.c.h.b16 %v1140
    %v1841 = vunpack.c.l.b16 %v1141
    %v1842 = vunpack.c.h.b16 %v1141
    %v1843 = vunpack.c.l.b16 %v1142
    %v1844 = vunpack.c.h.b16 %v1142
    %v1845 = vunpack.c.l.b16 %v1143
    %v1846 = vunpack.c.h.b16 %v1143
    %v1847 = vunpack.c.l.b16 %v1144
    %v1848 = vunpack.c.h.b16 %v1144
    %v1849 = vunpack.c.l.b16 %v1145
    %v1850 = vunpack.c.h.b16 %v1145
    %v1851 = vunpack.c.l.b16 %v1146
    %v1852 = vunpack.c.h.b16 %v1146
    %v1853 = vunpack.c.l.b16 %v1147
    %v1854 = vunpack.c.h.b16 %v1147
    %v1855 = vunpack.c.l.b16 %v1148
    %v1856 = vunpack.c.h.b16 %v1148
    %v1857 = vunpack.c.l.b16 %v1149
    %v1858 = vunpack.c.h.b16 %v1149
    %v1859 = vunpack.c.l.b16 %v1150
    %v1860 = vunpack.c.h.b16 %v1150
    %v1861 = vunpack.c.l.b16 %v1151
    %v1862 = vunpack.c.h.b16 %v1151
    %v1863 = vunpack.c.l.b16 %v1152
    %v1864 = vunpack.c.h.b16 %v1152
    %v1865 = vunpack.c.l.b16 %v1153
    %v1866 = vunpack.c.h.b16 %v1153
    %v1867 = vunpack.c.l.b16 %v1154
    %v1868 = vunpack.c.h.b16 %v1154
    %v1869 = vunpack.c.l.b16 %v1155
    %v1870 = vunpack.c.h.b16 %v1155
    %v1871 = vunpack.c.l.b16 %v1156
    %v1872 = vunpack.c.h.b16 %v1156
    %v1873 = vunpack.c.l.b16 %v1157
    %v1874 = vunpack.c.h.b16 %v1157
    %v1875 = vunpack.c.l.b16 %v1158
    %v1876 = vunpack.c.h.b16 %v1158
    %v1877 = vunpack.c.l.b16 %v1159
    %v1878 = vunpack.c.h.b16 %v1159
    %v1879 = vunpack.c.l.b16 %v1160
    %v1880 = vunpack.c.h.b16 %v1160
    %v1881 = vunpack.c.l.b16 %v1161
    %v1882 = vunpack.c.h.b16 %v1161
    %v1883 = vunpack.c.l.b16 %v1162
    %v1884 = vunpack.c.h.b16 %v1162
    %v1885 = vunpack.c.l.b16 %v1163
    %v1886 = vunpack.c.h.b16 %v1163
    %v1887 = vunpack.c.l.b16 %v1164
    %v1888 = vunpack.c.h.b16 %v1164
    %v1889 = vunpack.c.l.b16 %v1165
    %v1890 = vunpack.c.h.b16 %v1165
    %v1891 = vunpack.c.l.b16 %v1166
    %v1892 = vunpack.c.h.b16 %v1166
    %v1893 = vunpack.c.l.b16 %v1167
    %v1894 = vunpack.c.h.b16 %v1167
    %v1895 = vunpack.c.l.b16 %v1168
    %v1896 = vunpack.c.h.b16 %v1168
    %v1897 = vunpack.c.l.b16 %v1169
    %v1898 = vunpack.c.h.b16 %v1169
    %v1899 = vunpack.c.l.b16 %v1170
    %v1900 = vunpack.c.h.b16 %v1170
    %v1901 = vunpack.c.l.b16 %v1171
    %v1902 = vunpack.c.h.b16 %v1171
    %v1903 = vunpack.c.l.b16 %v1172
    %v1904 = vunpack.c.h.b16 %v1172
    %v1905 = vunpack.c.l.b16 %v1173
    %v1906 = vunpack.c.h.b16 %v1173
    %v1907 = vunpack.c.l.b16 %v1174
    %v1908 = vunpack.c.h.b16 %v1174
    %v1909 = vunpack.c.l.b16 %v1175
    %v1910 = vunpack.c.h.b16 %v1175
    %v1911 = vunpack.c.l.b16 %v1176
    %v1912 = vunpack.c.h.b16 %v1176
    %v1913 = vunpack.c.l.b16 %v1177
    %v1914 = vunpack.c.h.b16 %v1177
    %v1915 = vunpack.c.l.b16 %v1178
    %v1916 = vunpack.c.h.b16 %v1178
    %v1917 = vunpack.c.l.b16 %v1179
    %v1918 = vunpack.c.h.b16 %v1179
    %v1919 = vunpack.c.l.b16 %v1180
    %v1920 = vunpack.c.h.b16 %v1180
    %v1921 = vunpack.c.l.b16 %v1181
    %v1922 = vunpack.c.h.b16 %v1181
    %v1923 = vunpack.c.l.b16 %v1182
    %v1924 = vunpack.c.h.b16 %v1182
    %v1925 = vunpack.c.l.b16 %v1183
    %v1926 = vunpack.c.h.b16 %v1183
    %v1927 = vunpack.c.l.b16 %v1184
    %v1928 = vunpack.c.h.b16 %v1184
    %v1929 = vunpack.c.l.b16 %v1185
    %v1930 = vunpack.c.h.b16 %v1185
    %v1931 = vunpack.c.l.b16 %v1186
    %v1932 = vunpack.c.h.b16 %v1186
    %v1933 = vunpack.c.l.b16 %v1187
    %v1934 = vunpack.c.h.b16 %v1187
    %v1935 = vunpack.c.l.b16 %v1188
    %v1936 = vunpack.c.h.b16 %v1188
    %v1937 = vunpack.c.l.b16 %v1189
    %v1938 = vunpack.c.h.b16 %v1189
    %v1939 = vunpack.c.l.b16 %v1190
    %v1940 = vunpack.c.h.b16 %v1190
    %v1941 = vunpack.c.l.b16 %v1191
    %v1942 = vunpack.c.h.b16 %v1191
    %v1943 = vunpack.c.l.b16 %v1192
    %v1944 = vunpack.c.h.b16 %v1192
    %v1945 = vunpack.c.l.b16 %v1193
    %v1946 = vunpack.c.h.b16 %v1193
    %v1947 = vunpack.c.l.b16 %v1194
    %v1948 = vunpack.c.h.b16 %v1194
    %v1949 = vunpack.c.l.b16 %v1195
    %v1950 = vunpack.c.h.b16 %v1195
    %v1951 = vunpack.c.l.b16 %v1196
    %v1952 = vunpack.c.h.b16 %v1196
    %v1953 = vunpack.c.l.b16 %v1197
    %v1954 = vunpack.c.h.b16 %v1197
    %v1955 = vunpack.c.l.b16 %v1198
    %v1956 = vunpack.c.h.b16 %v1198
    %v1957 = vunpack.c.l.b16 %v1199
    %v1958 = vunpack.c.h.b16 %v1199
    %v1959 = vunpack.c.l.b16 %v1200
    %v1960 = vunpack.c.h.b16 %v1200
    %v1961 = vunpack.c.l.b16 %v1201
    %v1962 = vunpack.c.h.b16 %v1201
    %v1963 = vunpack.c.l.b16 %v1202
    %v1964 = vunpack.c.h.b16 %v1202
    %v1965 = vunpack.c.l.b16 %v1203
    %v1966 = vunpack.c.h.b16 %v1203
    %v1967 = vunpack.c.l.b16 %v1204
    %v1968 = vunpack.c.h.b16 %v1204
    %v1969 = vunpack.c.l.b16 %v1205
    %v1970 = vunpack.c.h.b16 %v1205
    %v1971 = vunpack.c.l.b16 %v1206
    %v1972 = vunpack.c.h.b16 %v1206
    %v1973 = vunpack.c.l.b16 %v1207
    %v1974 = vunpack.c.h.b16 %v1207
    %v1975 = vunpack.c.l.b16 %v1208
    %v1976 = vunpack.c.h.b16 %v1208
    %v1977 = vunpack.c.l.b16 %v1209
    %v1978 = vunpack.c.h.b16 %v1209
    %v1979 = vunpack.c.l.b16 %v1210
    %v1980 = vunpack.c.h.b16 %v1210
    %v1981 = vunpack.c.l.b16 %v1211
    %v1982 = vunpack.c.h.b16 %v1211
    %v1983 = vunpack.c.l.b16 %v1212
    %v1984 = vunpack.c.h.b16 %v1212
    %v1985 = vunpack.c.l.b16 %v1213
    %v1986 = vunpack.c.h.b16 %v1213
    %v1987 = vunpack.c.l.b16 %v1214
    %v1988 = vunpack.c.h.b16 %v1214
    %v1989 = vunpack.c.l.b16 %v1215
    %v1990 = vunpack.c.h.b16 %v1215
    %v1991 = vunpack.c.l.b16 %v1216
    %v1992 = vunpack.c.h.b16 %v1216
    %v1993 = vunpack.c.l.b16 %v1217
    %v1994 = vunpack.c.h.b16 %v1217
    %v1995 = vunpack.c.l.b16 %v1218
    %v1996 = vunpack.c.h.b16 %v1218
    %v1997 = vunpack.c.l.b16 %v1219
    %v1998 = vunpack.c.h.b16 %v1219
    %v1999 = vunpack.c.l.b16 %v1220
    %v2000 = vunpack.c.h.b16 %v1220
    %v2001 = vunpack.c.l.b16 %v1221
    %v2002 = vunpack.c.h.b16 %v1221
    %v2003 = vunpack.c.l.b16 %v1222
    %v2004 = vunpack.c.h.b16 %v1222
    %v2005 = vunpack.c.l.b16 %v1223
    %v2006 = vunpack.c.h.b16 %v1223
    %v2007 = vunpack.c.l.b16 %v1224
    %v2008 = vunpack.c.h.b16 %v1224
    %v2009 = vunpack.c.l.b16 %v1225
    %v2010 = vunpack.c.h.b16 %v1225
    %v2011 = vunpack.c.l.b16 %v1226
    %v2012 = vunpack.c.h.b16 %v1226
    %v2013 = vunpack.c.l.b16 %v1227
    %v2014 = vunpack.c.h.b16 %v1227
    %v2015 = vunpack.c.l.b16 %v1228
    %v2016 = vunpack.c.h.b16 %v1228
    %v2017 = vunpack.c.l.b16 %v1229
    %v2018 = vunpack.c.h.b16 %v1229
    %v2019 = vunpack.c.l.b16 %v1230
    %v2020 = vunpack.c.h.b16 %v1230
    %v2021 = vunpack.c.l.b16 %v1231
    %v2022 = vunpack.c.h.b16 %v1231
    %v2023 = vunpack.c.l.b16 %v1232
    %v2024 = vunpack.c.h.b16 %v1232
    %v2025 = vunpack.c.l.b16 %v1233
    %v2026 = vunpack.c.h.b16 %v1233
    %v2027 = vunpack.c.l.b16 %v1234
    %v2028 = vunpack.c.h.b16 %v1234
    %v2029 = vunpack.c.l.b16 %v1235
    %v2030 = vunpack.c.h.b16 %v1235
    %v2031 = vunpack.c.l.b16 %v1236
    %v2032 = vunpack.c.h.b16 %v1236
    %v2033 = vunpack.c.l.b16 %v1237
    %v2034 = vunpack.c.h.b16 %v1237
    %v2035 = vunpack.c.l.b16 %v1238
    %v2036 = vunpack.c.h.b16 %v1238
    %v2037 = vunpack.c.l.b16 %v1239
    %v2038 = vunpack.c.h.b16 %v1239
    %v2039 = vunpack.c.l.b16 %v1240
    %v2040 = vunpack.c.h.b16 %v1240
    %v2041 = vunpack.c.l.b16 %v1241
    %v2042 = vunpack.c.h.b16 %v1241
    %v2043 = vunpack.c.l.b16 %v1242
    %v2044 = vunpack.c.h.b16 %v1242
    %v2045 = vunpack.c.l.b16 %v1243
    %v2046 = vunpack.c.h.b16 %v1243
    %v2047 = vunpack.c.l.b16 %v1244
    %v2048 = vunpack.c.h.b16 %v1244
    %v2049 = vunpack.c.l.b16 %v1245
    %v2050 = vunpack.c.h.b16 %v1245
    %v2051 = vunpack.c.l.b16 %v1246
    %v2052 = vunpack.c.h.b16 %v1246
    %v2053 = vunpack.c.l.b16 %v1247
    %v2054 = vunpack.c.h.b16 %v1247
    %v2055 = vunpack.c.l.b16 %v1248
    %v2056 = vunpack.c.h.b16 %v1248
    %v2057 = vunpack.c.l.b16 %v1249
    %v2058 = vunpack.c.h.b16 %v1249
    %v2059 = vunpack.c.l.b16 %v1250
    %v2060 = vunpack.c.h.b16 %v1250
    %v2061 = vunpack.c.l.b16 %v1251
    %v2062 = vunpack.c.h.b16 %v1251
    %v2063 = vunpack.c.l.b16 %v1252
    %v2064 = vunpack.c.h.b16 %v1252
    %v2065 = vunpack.c.l.b16 %v1253
    %v2066 = vunpack.c.h.b16 %v1253
    %v2067 = vunpack.c.l.b16 %v1254
    %v2068 = vunpack.c.h.b16 %v1254
    %v2069 = vunpack.c.l.b16 %v1255
    %v2070 = vunpack.c.h.b16 %v1255
    %v2071 = vunpack.c.l.b16 %v1256
    %v2072 = vunpack.c.h.b16 %v1256
    %v2073 = vunpack.c.l.b16 %v1257
    %v2074 = vunpack.c.h.b16 %v1257
    %v2075 = vunpack.c.l.b16 %v1258
    %v2076 = vunpack.c.h.b16 %v1258
    %v2077 = vunpack.c.l.b16 %v1259
    %v2078 = vunpack.c.h.b16 %v1259
    %v2079 = vunpack.c.l.b16 %v1260
    %v2080 = vunpack.c.h.b16 %v1260
    %v2081 = vunpack.c.l.b16 %v1261
    %v2082 = vunpack.c.h.b16 %v1261
    %v2083 = vunpack.c.l.b16 %v1262
    %v2084 = vunpack.c.h.b16 %v1262
    %v2085 = vunpack.c.l.b16 %v1263
    %v2086 = vunpack.c.h.b16 %v1263
    %v2087 = vunpack.c.l.b16 %v1264
    %v2088 = vunpack.c.h.b16 %v1264
    %v2089 = vunpack.c.l.b16 %v1265
    %v2090 = vunpack.c.h.b16 %v1265
    %v2091 = vunpack.c.l.b16 %v1266
    %v2092 = vunpack.c.h.b16 %v1266
    %v2093 = vunpack.c.l.b16 %v1267
    %v2094 = vunpack.c.h.b16 %v1267
    %v2095 = vunpack.c.l.b16 %v1268
    %v2096 = vunpack.c.h.b16 %v1268
    %v2097 = vunpack.c.l.b16 %v1269
    %v2098 = vunpack.c.h.b16 %v1269
    %v2099 = vunpack.c.l.b16 %v1270
    %v2100 = vunpack.c.h.b16 %v1270
    %v2101 = vunpack.c.l.b16 %v1271
    %v2102 = vunpack.c.h.b16 %v1271
    %v2103 = vunpack.c.l.b16 %v1272
    %v2104 = vunpack.c.h.b16 %v1272
    %v2105 = vunpack.c.l.b16 %v1273
    %v2106 = vunpack.c.h.b16 %v1273
    %v2107 = vunpack.c.l.b16 %v1274
    %v2108 = vunpack.c.h.b16 %v1274
    %v2109 = vunpack.c.l.b16 %v1275
    %v2110 = vunpack.c.h.b16 %v1275
    %v2111 = vunpack.c.l.b16 %v1276
    %v2112 = vunpack.c.h.b16 %v1276
    %v2113 = vunpack.c.l.b16 %v1277
    %v2114 = vunpack.c.h.b16 %v1277
    %v2115 = vunpack.c.l.b16 %v1278
    %v2116 = vunpack.c.h.b16 %v1278
    %v2117 = vunpack.c.l.b16 %v1279
    %v2118 = vunpack.c.h.b16 %v1279
    %v2119 = vunpack.c.l.b16 %v1280
    %v2120 = vunpack.c.h.b16 %v1280
    %v2121 = vunpack.c.l.b16 %v1281
    %v2122 = vunpack.c.h.b16 %v1281
    %v2123 = vunpack.c.l.b16 %v1282
    %v2124 = vunpack.c.h.b16 %v1282
    %v2125 = vunpack.c.l.b16 %v1283
    %v2126 = vunpack.c.h.b16 %v1283
    %v2127 = vunpack.c.l.b16 %v1284
    %v2128 = vunpack.c.h.b16 %v1284
    %v2129 = vunpack.c.l.b16 %v1285
    %v2130 = vunpack.c.h.b16 %v1285
    %v2131 = vunpack.c.l.b16 %v1286
    %v2132 = vunpack.c.h.b16 %v1286
    %v2133 = vunpack.c.l.b16 %v1287
    %v2134 = vunpack.c.h.b16 %v1287
    %v2135 = vunpack.c.l.b16 %v1288
    %v2136 = vunpack.c.h.b16 %v1288
    %v2137 = vunpack.c.l.b16 %v1289
    %v2138 = vunpack.c.h.b16 %v1289
    %v2139 = vunpack.c.l.b16 %v1290
    %v2140 = vunpack.c.h.b16 %v1290
    %v2141 = vunpack.c.l.b16 %v1291
    %v2142 = vunpack.c.h.b16 %v1291
    %v2143 = vunpack.c.l.b16 %v1292
    %v2144 = vunpack.c.h.b16 %v1292
    %v2145 = vunpack.c.l.b16 %v1293
    %v2146 = vunpack.c.h.b16 %v1293
    %v2147 = vunpack.c.l.b16 %v1294
    %v2148 = vunpack.c.h.b16 %v1294
    %v2149 = vunpack.c.l.b16 %v1295
    %v2150 = vunpack.c.h.b16 %v1295
    %v2151 = vunpack.c.l.b16 %v1296
    %v2152 = vunpack.c.h.b16 %v1296
    %v2153 = vunpack.c.l.b16 %v1297
    %v2154 = vunpack.c.h.b16 %v1297
    %v2155 = vunpack.c.l.b16 %v1298
    %v2156 = vunpack.c.h.b16 %v1298
    %v2157 = vunpack.c.l.b16 %v1299
    %v2158 = vunpack.c.h.b16 %v1299
    %v2159 = vunpack.c.l.b16 %v1300
    %v2160 = vunpack.c.h.b16 %v1300
    %v2161 = vunpack.c.l.b16 %v1301
    %v2162 = vunpack.c.h.b16 %v1301
    %v2163 = vunpack.c.l.b16 %v1302
    %v2164 = vunpack.c.h.b16 %v1302
    %v2165 = vunpack.c.l.b16 %v1303
    %v2166 = vunpack.c.h.b16 %v1303
    %v2167 = vunpack.c.l.b16 %v1304
    %v2168 = vunpack.c.h.b16 %v1304
    %v2169 = vunpack.c.l.b16 %v1305
    %v2170 = vunpack.c.h.b16 %v1305
    %v2171 = vunpack.c.l.b16 %v1306
    %v2172 = vunpack.c.h.b16 %v1306
    %v2173 = vunpack.c.l.b16 %v1307
    %v2174 = vunpack.c.h.b16 %v1307
    %v2175 = vunpack.c.l.b16 %v1308
    %v2176 = vunpack.c.h.b16 %v1308
    %v2177 = vunpack.c.l.b16 %v1309
    %v2178 = vunpack.c.h.b16 %v1309
    %v2179 = vunpack.c.l.b16 %v1310
    %v2180 = vunpack.c.h.b16 %v1310
    %v2181 = vunpack.c.l.b16 %v1311
    %v2182 = vunpack.c.h.b16 %v1311
    %v2183 = vunpack.c.l.b16 %v1312
    %v2184 = vunpack.c.h.b16 %v1312
    %v2185 = vunpack.c.l.b16 %v1313
    %v2186 = vunpack.c.h.b16 %v1313
    %v2187 = vunpack.c.l.b16 %v1314
    %v2188 = vunpack.c.h.b16 %v1314
    %v2189 = vunpack.c.l.b16 %v1315
    %v2190 = vunpack.c.h.b16 %v1315
    %v2191 = vunpack.c.l.b16 %v1316
    %v2192 = vunpack.c.h.b16 %v1316
    %v2193 = vunpack.c.l.b16 %v1317
    %v2194 = vunpack.c.h.b16 %v1317
    %v2195 = vunpack.c.l.b16 %v1318
    %v2196 = vunpack.c.h.b16 %v1318
    %v2197 = vunpack.c.l.b16 %v1319
    %v2198 = vunpack.c.h.b16 %v1319
    %v2199 = vunpack.c.l.b16 %v1320
    %v2200 = vunpack.c.h.b16 %v1320
    %v2201 = vunpack.c.l.b16 %v1321
    %v2202 = vunpack.c.h.b16 %v1321
    %v2203 = vunpack.c.l.b16 %v1322
    %v2204 = vunpack.c.h.b16 %v1322
    %v2205 = vunpack.c.l.b16 %v1323
    %v2206 = vunpack.c.h.b16 %v1323
    %v2207 = vunpack.c.l.b16 %v1324
    %v2208 = vunpack.c.h.b16 %v1324
    %v2209 = vunpack.c.l.b16 %v1325
    %v2210 = vunpack.c.h.b16 %v1325
    %v2211 = vunpack.c.l.b16 %v1326
    %v2212 = vunpack.c.h.b16 %v1326
    %v2213 = vunpack.c.l.b16 %v1327
    %v2214 = vunpack.c.h.b16 %v1327
    %v2215 = vunpack.c.l.b16 %v1328
    %v2216 = vunpack.c.h.b16 %v1328
    %v2217 = vunpack.c.l.b16 %v1329
    %v2218 = vunpack.c.h.b16 %v1329
    %v2219 = vunpack.c.l.b16 %v1330
    %v2220 = vunpack.c.h.b16 %v1330
    %v2221 = vunpack.c.l.b16 %v1331
    %v2222 = vunpack.c.h.b16 %v1331
    %v2223 = vunpack.c.l.b16 %v1332
    %v2224 = vunpack.c.h.b16 %v1332
    %v2225 = vunpack.c.l.b16 %v1333
    %v2226 = vunpack.c.h.b16 %v1333
    %v2227 = vunpack.c.l.b16 %v1334
    %v2228 = vunpack.c.h.b16 %v1334
    %v2229 = vunpack.c.l.b16 %v1335
    %v2230 = vunpack.c.h.b16 %v1335
    %v2231 = vunpack.c.l.b16 %v1336
    %v2232 = vunpack.c.h.b16 %v1336
    %v2233 = vunpack.c.l.b16 %v1337
    %v2234 = vunpack.c.h.b16 %v1337
    %v2235 = vunpack.c.l.b16 %v1338
    %v2236 = vunpack.c.h.b16 %v1338
    %v2237 = vunpack.c.l.b16 %v1339
    %v2238 = vunpack.c.h.b16 %v1339
    %v2239 = vunpack.c.l.b16 %v1340
    %v2240 = vunpack.c.h.b16 %v1340
    %v2241 = vunpack.c.l.b16 %v1341
    %v2242 = vunpack.c.h.b16 %v1341
    %v2243 = vunpack.c.l.b16 %v1342
    %v2244 = vunpack.c.h.b16 %v1342
    %v2245 = vunpack.c.l.b16 %v1343
    %v2246 = vunpack.c.h.b16 %v1343
    %v2247 = vunpack.c.l.b16 %v1344
    %v2248 = vunpack.c.h.b16 %v1344
    %v2249 = vunpack.c.l.b16 %v1345
    %v2250 = vunpack.c.h.b16 %v1345
    %v2251 = vunpack.c.l.b16 %v1346
    %v2252 = vunpack.c.h.b16 %v1346
    %v2253 = vunpack.c.l.b16 %v1347
    %v2254 = vunpack.c.h.b16 %v1347
    %v2255 = vunpack.c.l.b16 %v1348
    %v2256 = vunpack.c.h.b16 %v1348
    %v2257 = vunpack.c.l.b16 %v1349
    %v2258 = vunpack.c.h.b16 %v1349
    %v2259 = vunpack.c.l.b16 %v1350
    %v2260 = vunpack.c.h.b16 %v1350
    %v2261 = vunpack.c.l.b16 %v1351
    %v2262 = vunpack.c.h.b16 %v1351
    %v2263 = vunpack.c.l.b16 %v1352
    %v2264 = vunpack.c.h.b16 %v1352
    %v2265 = vunpack.c.l.b16 %v1353
    %v2266 = vunpack.c.h.b16 %v1353
    %v2267 = vunpack.c.l.b16 %v1354
    %v2268 = vunpack.c.h.b16 %v1354
    %v2269 = vunpack.c.l.b16 %v1355
    %v2270 = vunpack.c.h.b16 %v1355
    %v2271 = vunpack.c.l.b16 %v1356
    %v2272 = vunpack.c.h.b16 %v1356
    %v2273 = vunpack.c.l.b16 %v1357
    %v2274 = vunpack.c.h.b16 %v1357
    %v2275 = vunpack.c.l.b16 %v1358
    %v2276 = vunpack.c.h.b16 %v1358
    %v2277 = vunpack.c.l.b16 %v1359
    %v2278 = vunpack.c.h.b16 %v1359
    %v2279 = vunpack.c.l.b16 %v1360
    %v2280 = vunpack.c.h.b16 %v1360
    %v2281 = vunpack.c.l.b16 %v1361
    %v2282 = vunpack.c.h.b16 %v1361
    %v2283 = vunpack.c.l.b16 %v1362
    %v2284 = vunpack.c.h.b16 %v1362
    %v2285 = vunpack.c.l.b16 %v1363
    %v2286 = vunpack.c.h.b16 %v1363
    %v2287 = vunpack.c.l.b16 %v1364
    %v2288 = vunpack.c.h.b16 %v1364
    %v2289 = vunpack.c.l.b16 %v1365
    %v2290 = vunpack.c.h.b16 %v1365
    %v2291 = vunpack.c.l.b16 %v1366
    %v2292 = vunpack.c.h.b16 %v1366
    %v2293 = vunpack.c.l.b16 %v1367
    %v2294 = vunpack.c.h.b16 %v1367
    %v2295 = vunpack.c.l.b16 %v1368
    %v2296 = vunpack.c.h.b16 %v1368
    %v2297 = vunpack.c.l.b16 %v1369
    %v2298 = vunpack.c.h.b16 %v1369
    %v2299 = vunpack.c.l.b16 %v1370
    %v2300 = vunpack.c.h.b16 %v1370
    %v2301 = vunpack.c.l.b16 %v1371
    %v2302 = vunpack.c.h.b16 %v1371
    %v2303 = vunpack.c.l.b16 %v1372
    %v2304 = vunpack.c.h.b16 %v1372
    %v2305 = vunpack.c.l.b16 %v1373
    %v2306 = vunpack.c.h.b16 %v1373
    %v2307 = vunpack.c.l.b16 %v1374
    %v2308 = vunpack.c.h.b16 %v1374
    %v2309 = vunpack.c.l.b16 %v1375
    %v2310 = vunpack.c.h.b16 %v1375
    %v2311 = vunpack.c.l.b16 %v1376
    %v2312 = vunpack.c.h.b16 %v1376
    %v2313 = vunpack.c.l.b16 %v1377
    %v2314 = vunpack.c.h.b16 %v1377
    %v2315 = vunpack.c.l.b16 %v1378
    %v2316 = vunpack.c.h.b16 %v1378
    %v2317 = vunpack.c.l.b16 %v1379
    %v2318 = vunpack.c.h.b16 %v1379
    %v2319 = vunpack.c.l.b16 %v1380
    %v2320 = vunpack.c.h.b16 %v1380
    %v2321 = vpack.c.b16 %v1811, %v1809
    %v2322 = vpack.c.b16 %v1812, %v1810
    %v2323 = vpack.c.b16 %v1815, %v1813
    %v2324 = vpack.c.b16 %v1816, %v1814
    %v2325 = vpack.c.b16 %v1819, %v1817
    %v2326 = vpack.c.b16 %v1820, %v1818
    %v2327 = vpack.c.b16 %v1823, %v1821
    %v2328 = vpack.c.b16 %v1824, %v1822
    %v2329 = vpack.c.b16 %v1827, %v1825
    %v2330 = vpack.c.b16 %v1828, %v1826
    %v2331 = vpack.c.b16 %v1831, %v1829
    %v2332 = vpack.c.b16 %v1832, %v1830
    %v2333 = vpack.c.b16 %v1835, %v1833
    %v2334 = vpack.c.b16 %v1836, %v1834
    %v2335 = vpack.c.b16 %v1839, %v1837
    %v2336 = vpack.c.b16 %v1840, %v1838
    %v2337 = vpack.c.b16 %v1843, %v1841
    %v2338 = vpack.c.b16 %v1844, %v1842
    %v2339 = vpack.c.b16 %v1847, %v1845
    %v2340 = vpack.c.b16 %v1848, %v1846
    %v2341 = vpack.c.b16 %v1851, %v1849
    %v2342 = vpack.c.b16 %v1852, %v1850
    %v2343 = vpack.c.b16 %v1855, %v1853
    %v2344 = vpack.c.b16 %v1856, %v1854
    %v2345 = vpack.c.b16 %v1859, %v1857
    %v2346 = vpack.c.b16 %v1860, %v1858
    %v2347 = vpack.c.b16 %v1863, %v1861
    %v2348 = vpack.c.b16 %v1864, %v1862
    %v2349 = vpack.c.b16 %v1867, %v1865
    %v2350 = vpack.c.b16 %v1868, %v1866
    %v2351 = vpack.c.b16 %v1871, %v1869
    %v2352 = vpack.c.b16 %v1872, %v1870
    %v2353 = vpack.c.b16 %v1875, %v1873
    %v2354 = vpack.c.b16 %v1876, %v1874
    %v2355 = vpack.c.b16 %v1879, %v1877
    %v2356 = vpack.c.b16 %v1880, %v1878
    %v2357 = vpack.c.b16 %v1883, %v1881
    %v2358 = vpack.c.b16 %v1884, %v1882
    %v2359 = vpack.c.b16 %v1887, %v1885
    %v2360 = vpack.c.b16 %v1888, %v1886
    %v2361 = vpack.c.b16 %v1891, %v1889
    %v2362 = vpack.c.b16 %v1892, %v1890
    %v2363 = vpack.c.b16 %v1895, %v1893
    %v2364 = vpack.c.b16 %v1896, %v1894
    %v2365 = vpack.c.b16 %v1899, %v1897
    %v2366 = vpack.c.b16 %v1900, %v1898
    %v2367 = vpack.c.b16 %v1903, %v1901
    %v2368 = vpack.c.b16 %v1904, %v1902
    %v2369 = vpack.c.b16 %v1907, %v1905
    %v2370 = vpack.c.b16 %v1908, %v1906
    %v2371 = vpack.c.b16 %v1911, %v1909
    %v2372 = vpack.c.b16 %v1912, %v1910
    %v2373 = vpack.c.b16 %v1915, %v1913
    %v2374 = vpack.c.b16 %v1916, %v1914
    %v2375 = vpack.c.b16 %v1919, %v1917
    %v2376 = vpack.c.b16 %v1920, %v1918
    %v2377 = vpack.c.b16 %v1923, %v1921
    %v2378 = vpack.c.b16 %v1924, %v1922
    %v2379 = vpack.c.b16 %v1927, %v1925
    %v2380 = vpack.c.b16 %v1928, %v1926
    %v2381 = vpack.c.b16 %v1931, %v1929
    %v2382 = vpack.c.b16 %v1932, %v1930
    %v2383 = vpack.c.b16 %v1935, %v1933
    %v2384 = vpack.c.b16 %v1936, %v1934
    %v2385 = vpack.c.b16 %v1939, %v1937
    %v2386 = vpack.c.b16 %v1940, %v1938
    %v2387 = vpack.c.b16 %v1943, %v1941
    %v2388 = vpack.c.b16 %v1944, %v1942
    %v2389 = vpack.c.b16 %v1947, %v1945
    %v2390 = vpack.c.b16 %v1948, %v1946
    %v2391 = vpack.c.b16 %v1951, %v1949
    %v2392 = vpack.c.b16 %v1952, %v1950
    %v2393 = vpack.c.b16 %v1955, %v1953
    %v2394 = vpack.c.b16 %v1956, %v1954
    %v2395 = vpack.c.b16 %v1959, %v1957
    %v2396 = vpack.c.b16 %v1960, %v1958
    %v2397 = vpack.c.b16 %v1963, %v1961
    %v2398 = vpack.c.b16 %v1964, %v1962
    %v2399 = vpack.c.b16 %v1967, %v1965
    %v2400 = vpack.c.b16 %v1968, %v1966
    %v2401 = vpack.c.b16 %v1971, %v1969
    %v2402 = vpack.c.b16 %v1972, %v1970
    %v2403 = vpack.c.b16 %v1975, %v1973
    %v2404 = vpack.c.b16 %v1976, %v1974
    %v2405 = vpack.c.b16 %v1979, %v1977
    %v2406 = vpack.c.b16 %v1980, %v1978
    %v2407 = vpack.c.b16 %v1983, %v1981
    %v2408 = vpack.c.b16 %v1984, %v1982
    %v2409 = vpack.c.b16 %v1987, %v1985
    %v2410 = vpack.c.b16 %v1988, %v1986
    %v2411 = vpack.c.b16 %v1991, %v1989
    %v2412 = vpack.c.b16 %v1992, %v1990
    %v2413 = vpack.c.b16 %v1995, %v1993
    %v2414 = vpack.c.b16 %v1996, %v1994
    %v2415 = vpack.c.b16 %v1999, %v1997
    %v2416 = vpack.c.b16 %v2000, %v1998
    %v2417 = vpack.c.b16 %v2003, %v2001
    %v2418 = vpack.c.b16 %v2004, %v2002
    %v2419 = vpack.c.b16 %v2007, %v2005
    %v2420 = vpack.c.b16 %v2008, %v2006
    %v2421 = vpack.c.b16 %v2011, %v2009
    %v2422 = vpack.c.b16 %v2012, %v2010
    %v2423 = vpack.c.b16 %v2015, %v2013
    %v2424 = vpack.c.b16 %v2016, %v2014
    %v2425 = vpack.c.b16 %v2019, %v2017
    %v2426 = vpack.c.b16 %v2020, %v2018
    %v2427 = vpack.c.b16 %v2023, %v2021
    %v2428 = vpack.c.b16 %v2024, %v2022
    %v2429 = vpack.c.b16 %v2027, %v2025
    %v2430 = vpack.c.b16 %v2028, %v2026
    %v2431 = vpack.c.b16 %v2031, %v2029
    %v2432 = vpack.c.b16 %v2032, %v2030
    %v2433 = vpack.c.b16 %v2035, %v2033
    %v2434 = vpack.c.b16 %v2036, %v2034
    %v2435 = vpack.c.b16 %v2039, %v2037
    %v2436 = vpack.c.b16 %v2040, %v2038
    %v2437 = vpack.c.b16 %v2043, %v2041
    %v2438 = vpack.c.b16 %v2044, %v2042
    %v2439 = vpack.c.b16 %v2047, %v2045
    %v2440 = vpack.c.b16 %v2048, %v2046
    %v2441 = vpack.c.b16 %v2051, %v2049
    %v2442 = vpack.c.b16 %v2052, %v2050
    %v2443 = vpack.c.b16 %v2055, %v2053
    %v2444 = vpack.c.b16 %v2056, %v2054
    %v2445 = vpack.c.b16 %v2059, %v2057
    %v2446 = vpack.c.b16 %v2060, %v2058
    %v2447 = vpack.c.b16 %v2063, %v2061
    %v2448 = vpack.c.b16 %v2064, %v2062
    %v2449 = vpack.c.b16 %v2067, %v2065
    %v2450 = vpack.c.b16 %v2068, %v2066
    %v2451 = vpack.c.b16 %v2071, %v2069
    %v2452 = vpack.c.b16 %v2072, %v2070
    %v2453 = vpack.c.b16 %v2075, %v2073
    %v2454 = vpack.c.b16 %v2076, %v2074
    %v2455 = vpack.c.b16 %v2079, %v2077
    %v2456 = vpack.c.b16 %v2080, %v2078
    %v2457 = vpack.c.b16 %v2083, %v2081
    %v2458 = vpack.c.b16 %v2084, %v2082
    %v2459 = vpack.c.b16 %v2087, %v2085
    %v2460 = vpack.c.b16 %v2088, %v2086
    %v2461 = vpack.c.b16 %v2091, %v2089
    %v2462 = vpack.c.b16 %v2092, %v2090
    %v2463 = vpack.c.b16 %v2095, %v2093
    %v2464 = vpack.c.b16 %v2096, %v2094
    %v2465 = vpack.c.b16 %v2099, %v2097
    %v2466 = vpack.c.b16 %v2100, %v2098
    %v2467 = vpack.c.b16 %v2103, %v2101
    %v2468 = vpack.c.b16 %v2104, %v2102
    %v2469 = vpack.c.b16 %v2107, %v2105
    %v2470 = vpack.c.b16 %v2108, %v2106
    %v2471 = vpack.c.b16 %v2111, %v2109
    %v2472 = vpack.c.b16 %v2112, %v2110
    %v2473 = vpack.c.b16 %v2115, %v2113
    %v2474 = vpack.c.b16 %v2116, %v2114
    %v2475 = vpack.c.b16 %v2119, %v2117
    %v2476 = vpack.c.b16 %v2120, %v2118
    %v2477 = vpack.c.b16 %v2123, %v2121
    %v2478 = vpack.c.b16 %v2124, %v2122
    %v2479 = vpack.c.b16 %v2127, %v2125
    %v2480 = vpack.c.b16 %v2128, %v2126
    %v2481 = vpack.c.b16 %v2131, %v2129
    %v2482 = vpack.c.b16 %v2132, %v2130
    %v2483 = vpack.c.b16 %v2135, %v2133
    %v2484 = vpack.c.b16 %v2136, %v2134
    %v2485 = vpack.c.b16 %v2139, %v2137
    %v2486 = vpack.c.b16 %v2140, %v2138
    %v2487 = vpack.c.b16 %v2143, %v2141
    %v2488 = vpack.c.b16 %v2144, %v2142
    %v2489 = vpack.c.b16 %v2147, %v2145
    %v2490 = vpack.c.b16 %v2148, %v2146
    %v2491 = vpack.c.b16 %v2151, %v2149
    %v2492 = vpack.c.b16 %v2152, %v2150
    %v2493 = vpack.c.b16 %v2155, %v2153
    %v2494 = vpack.c.b16 %v2156, %v2154
    %v2495 = vpack.c.b16 %v2159, %v2157
    %v2496 = vpack.c.b16 %v2160, %v2158
    %v2497 = vpack.c.b16 %v2163, %v2161
    %v2498 = vpack.c.b16 %v2164, %v2162
    %v2499 = vpack.c.b16 %v2167, %v2165
    %v2500 = vpack.c.b16 %v2168, %v2166
    %v2501 = vpack.c.b16 %v2171, %v2169
    %v2502 = vpack.c.b16 %v2172, %v2170
    %v2503 = vpack.c.b16 %v2175, %v2173
    %v2504 = vpack.c.b16 %v2176, %v2174
    %v2505 = vpack.c.b16 %v2179, %v2177
    %v2506 = vpack.c.b16 %v2180, %v2178
    %v2507 = vpack.c.b16 %v2183, %v2181
    %v2508 = vpack.c.b16 %v2184, %v2182
    %v2509 = vpack.c.b16 %v2187, %v2185
    %v2510 = vpack.c.b16 %v2188, %v2186
    %v2511 = vpack.c.b16 %v2191, %v2189
    %v2512 = vpack.c.b16 %v2192, %v2190
    %v2513 = vpack.c.b16 %v2195, %v2193
    %v2514 = vpack.c.b16 %v2196, %v2194
    %v2515 = vpack.c.b16 %v2199, %v2197
    %v2516 = vpack.c.b16 %v2200, %v2198
    %v2517 = vpack.c.b16 %v2203, %v2201
    %v2518 = vpack.c.b16 %v2204, %v2202
    %v2519 = vpack.c.b16 %v2207, %v2205
    %v2520 = vpack.c.b16 %v2208, %v2206
    %v2521 = vpack.c.b16 %v2211, %v2209
    %v2522 = vpack.c.b16 %v2212, %v2210
    %v2523 = vpack.c.b16 %v2215, %v2213
    %v2524 = vpack.c.b16 %v2216, %v2214
    %v2525 = vpack.c.b16 %v2219, %v2217
    %v2526 = vpack.c.b16 %v2220, %v2218
    %v2527 = vpack.c.b16 %v2223, %v2221
    %v2528 = vpack.c.b16 %v2224, %v2222
    %v2529 = vpack.c.b16 %v2227, %v2225
    %v2530 = vpack.c.b16 %v2228, %v2226
    %v2531 = vpack.c.b16 %v2231, %v2229
    %v2532 = vpack.c.b16 %v2232, %v2230
    %v2533 = vpack.c.b16 %v2235, %v2233
    %v2534 = vpack.c.b16 %v2236, %v2234
    %v2535 = vpack.c.b16 %v2239, %v2237
    %v2536 = vpack.c.b16 %v2240, %v2238
    %v2537 = vpack.c.b16 %v2243, %v2241
    %v2538 = vpack.c.b16 %v2244, %v2242
    %v2539 = vpack.c.b16 %v2247, %v2245
    %v2540 = vpack.c.b16 %v2248, %v2246
    %v2541 = vpack.c.b16 %v2251, %v2249
    %v2542 = vpack.c.b16 %v2252, %v2250
    %v2543 = vpack.c.b16 %v2255, %v2253
    %v2544 = vpack.c.b16 %v2256, %v2254
    %v2545 = vpack.c.b16 %v2259, %v2257
    %v2546 = vpack.c.b16 %v2260, %v2258
    %v2547 = vpack.c.b16 %v2263, %v2261
    %v2548 = vpack.c.b16 %v2264, %v2262
    %v2549 = vpack.c.b16 %v2267, %v2265
    %v2550 = vpack.c.b16 %v2268, %v2266
    %v2551 = vpack.c.b16 %v2271, %v2269
    %v2552 = vpack.c.b16 %v2272, %v2270
    %v2553 = vpack.c.b16 %v2275, %v2273
    %v2554 = vpack.c.b16 %v2276, %v2274
    %v2555 = vpack.c.b16 %v2279, %v2277
    %v2556 = vpack.c.b16 %v2280, %v2278
    %v2557 = vpack.c.b16 %v2283, %v2281
    %v2558 = vpack.c.b16 %v2284, %v2282
    %v2559 = vpack.c.b16 %v2287, %v2285
    %v2560 = vpack.c.b16 %v2288, %v2286
    %v2561 = vpack.c.b16 %v2291, %v2289
    %v2562 = vpack.c.b16 %v2292, %v2290
    %v2563 = vpack.c.b16 %v2295, %v2293
    %v2564 = vpack.c.b16 %v2296, %v2294
    %v2565 = vpack.c.b16 %v2299, %v2297
    %v2566 = vpack.c.b16 %v2300, %v2298
    %v2567 = vpack.c.b16 %v2303, %v2301
    %v2568 = vpack.c.b16 %v2304, %v2302
    %v2569 = vpack.c.b16 %v2307, %v2305
    %v2570 = vpack.c.b16 %v2308, %v2306
    %v2571 = vpack.c.b16 %v2311, %v2309
    %v2572 = vpack.c.b16 %v2312, %v2310
    %v2573 = vpack.c.b16 %v2315, %v2313
    %v2574 = vpack.c.b16 %v2316, %v2314
    %v2575 = vpack.c.b16 %v2319, %v2317
    %v2576 = vpack.c.b16 %v2320, %v2318
    %2833 = vmatprep.subr.bf16.mxu0 %v2336
    %2834 = vmatpush1.bf16.msra.mxu0 %v2335
    %2835 = vmatprep.subr.bf16.mxu0 %v2334
    %2836 = vmatpush1.bf16.msra.mxu0 %v2333
    %2837 = vmatprep.subr.bf16.mxu0 %v2332
    %2838 = vmatpush1.bf16.msra.mxu0 %v2331
    %2839 = vmatprep.subr.bf16.mxu0 %v2330
    %2840 = vmatpush1.bf16.msra.mxu0 %v2329
    %2841 = vmatprep.subr.bf16.mxu0 %v2328
    %2842 = vmatpush1.bf16.msra.mxu0 %v2327
    %2843 = vmatprep.subr.bf16.mxu0 %v2326
    %2844 = vmatpush1.bf16.msra.mxu0 %v2325
    %2845 = vmatprep.subr.bf16.mxu0 %v2324
    %2846 = vmatpush1.bf16.msra.mxu0 %v2323
    %2847 = vmatprep.subr.bf16.mxu0 %v2322
    %2848 = vmatpush1.bf16.msra.mxu0 %v2321
    %2849 = vmatprep.subr.bf16.mxu0 %v2352
    %2850 = vmatpush2.bf16.msra.mxu0 %v2351
    %2851 = vmatprep.subr.bf16.mxu0 %v2350
    %2852 = vmatpush2.bf16.msra.mxu0 %v2349
    %2853 = vmatprep.subr.bf16.mxu0 %v2348
    %2854 = vmatpush2.bf16.msra.mxu0 %v2347
    %2855 = vmatprep.subr.bf16.mxu0 %v2346
    %2856 = vmatpush2.bf16.msra.mxu0 %v2345
    %2857 = vmatprep.subr.bf16.mxu0 %v2344
    %2858 = vmatpush2.bf16.msra.mxu0 %v2343
    %2859 = vmatprep.subr.bf16.mxu0 %v2342
    %2860 = vmatpush2.bf16.msra.mxu0 %v2341
    %2861 = vmatprep.subr.bf16.mxu0 %v2340
    %2862 = vmatpush2.bf16.msra.mxu0 %v2339
    %2863 = vmatprep.subr.bf16.mxu0 %v2338
    %2864 = vmatpush2.bf16.msra.mxu0 %v2337
    %2865 = vmatprep.mubr.bf16.mxu0 %v1490
    %2866 = vmatmul.mubr.bf16.gmra.mxu0 %v1489
    %v2867 = vpop.f32.mrf.mxu0
    %v2868 = vadd.f32 %v1386, %v2867
    %v2869 = vpop.f32.mrf.mxu0
    %v2870 = vadd.f32 %v1390, %v2869
    %v2871 = vpop.f32.mrf.mxu0
    %v2872 = vadd.f32 %v1386, %v2871
    %v2873 = vpop.f32.mrf.mxu0
    %v2874 = vadd.f32 %v1390, %v2873
    %2875 = vmatprep.mubr.bf16.mxu0 %v1506
    %2876 = vmatmul.mubr.bf16.gmra.mxu0 %v1505
    %v2877 = vpop.f32.mrf.mxu0
    %v2878 = vadd.f32 %v1386, %v2877
    %v2879 = vpop.f32.mrf.mxu0
    %v2880 = vadd.f32 %v1390, %v2879
    %v2881 = vpop.f32.mrf.mxu0
    %v2882 = vadd.f32 %v1386, %v2881
    %v2883 = vpop.f32.mrf.mxu0
    %v2884 = vadd.f32 %v1390, %v2883
    %2885 = vdwg.mxu0
    %2886 = vmatprep.subr.bf16.mxu0 %v2368
    %2887 = vmatpush1.bf16.msra.mxu0 %v2367
    %2888 = vmatprep.subr.bf16.mxu0 %v2366
    %2889 = vmatpush1.bf16.msra.mxu0 %v2365
    %2890 = vmatprep.subr.bf16.mxu0 %v2364
    %2891 = vmatpush1.bf16.msra.mxu0 %v2363
    %2892 = vmatprep.subr.bf16.mxu0 %v2362
    %2893 = vmatpush1.bf16.msra.mxu0 %v2361
    %2894 = vmatprep.subr.bf16.mxu0 %v2360
    %2895 = vmatpush1.bf16.msra.mxu0 %v2359
    %2896 = vmatprep.subr.bf16.mxu0 %v2358
    %2897 = vmatpush1.bf16.msra.mxu0 %v2357
    %2898 = vmatprep.subr.bf16.mxu0 %v2356
    %2899 = vmatpush1.bf16.msra.mxu0 %v2355
    %2900 = vmatprep.subr.bf16.mxu0 %v2354
    %2901 = vmatpush1.bf16.msra.mxu0 %v2353
    %2902 = vmatprep.subr.bf16.mxu0 %v2384
    %2903 = vmatpush2.bf16.msra.mxu0 %v2383
    %2904 = vmatprep.subr.bf16.mxu0 %v2382
    %2905 = vmatpush2.bf16.msra.mxu0 %v2381
    %2906 = vmatprep.subr.bf16.mxu0 %v2380
    %2907 = vmatpush2.bf16.msra.mxu0 %v2379
    %2908 = vmatprep.subr.bf16.mxu0 %v2378
    %2909 = vmatpush2.bf16.msra.mxu0 %v2377
    %2910 = vmatprep.subr.bf16.mxu0 %v2376
    %2911 = vmatpush2.bf16.msra.mxu0 %v2375
    %2912 = vmatprep.subr.bf16.mxu0 %v2374
    %2913 = vmatpush2.bf16.msra.mxu0 %v2373
    %2914 = vmatprep.subr.bf16.mxu0 %v2372
    %2915 = vmatpush2.bf16.msra.mxu0 %v2371
    %2916 = vmatprep.subr.bf16.mxu0 %v2370
    %2917 = vmatpush2.bf16.msra.mxu0 %v2369
    %2918 = vmatprep.mubr.bf16.mxu0 %v1492
    %2919 = vmatmul.mubr.bf16.gmra.mxu0 %v1491
    %v2920 = vpop.f32.mrf.mxu0
    %v2921 = vadd.f32 %v2868, %v2920
    %v2922 = vpop.f32.mrf.mxu0
    %v2923 = vadd.f32 %v2870, %v2922
    %v2924 = vpop.f32.mrf.mxu0
    %v2925 = vadd.f32 %v2872, %v2924
    %v2926 = vpop.f32.mrf.mxu0
    %v2927 = vadd.f32 %v2874, %v2926
    %2928 = vmatprep.mubr.bf16.mxu0 %v1508
    %2929 = vmatmul.mubr.bf16.gmra.mxu0 %v1507
    %v2930 = vpop.f32.mrf.mxu0
    %v2931 = vadd.f32 %v2878, %v2930
    %v2932 = vpop.f32.mrf.mxu0
    %v2933 = vadd.f32 %v2880, %v2932
    %v2934 = vpop.f32.mrf.mxu0
    %v2935 = vadd.f32 %v2882, %v2934
    %v2936 = vpop.f32.mrf.mxu0
    %v2937 = vadd.f32 %v2884, %v2936
    %2938 = vdwg.mxu0
    %2939 = vmatprep.subr.bf16.mxu0 %v2400
    %2940 = vmatpush1.bf16.msra.mxu0 %v2399
    %2941 = vmatprep.subr.bf16.mxu0 %v2398
    %2942 = vmatpush1.bf16.msra.mxu0 %v2397
    %2943 = vmatprep.subr.bf16.mxu0 %v2396
    %2944 = vmatpush1.bf16.msra.mxu0 %v2395
    %2945 = vmatprep.subr.bf16.mxu0 %v2394
    %2946 = vmatpush1.bf16.msra.mxu0 %v2393
    %2947 = vmatprep.subr.bf16.mxu0 %v2392
    %2948 = vmatpush1.bf16.msra.mxu0 %v2391
    %2949 = vmatprep.subr.bf16.mxu0 %v2390
    %2950 = vmatpush1.bf16.msra.mxu0 %v2389
    %2951 = vmatprep.subr.bf16.mxu0 %v2388
    %2952 = vmatpush1.bf16.msra.mxu0 %v2387
    %2953 = vmatprep.subr.bf16.mxu0 %v2386
    %2954 = vmatpush1.bf16.msra.mxu0 %v2385
    %2955 = vmatprep.subr.bf16.mxu0 %v2416
    %2956 = vmatpush2.bf16.msra.mxu0 %v2415
    %2957 = vmatprep.subr.bf16.mxu0 %v2414
    %2958 = vmatpush2.bf16.msra.mxu0 %v2413
    %2959 = vmatprep.subr.bf16.mxu0 %v2412
    %2960 = vmatpush2.bf16.msra.mxu0 %v2411
    %2961 = vmatprep.subr.bf16.mxu0 %v2410
    %2962 = vmatpush2.bf16.msra.mxu0 %v2409
    %2963 = vmatprep.subr.bf16.mxu0 %v2408
    %2964 = vmatpush2.bf16.msra.mxu0 %v2407
    %2965 = vmatprep.subr.bf16.mxu0 %v2406
    %2966 = vmatpush2.bf16.msra.mxu0 %v2405
    %2967 = vmatprep.subr.bf16.mxu0 %v2404
    %2968 = vmatpush2.bf16.msra.mxu0 %v2403
    %2969 = vmatprep.subr.bf16.mxu0 %v2402
    %2970 = vmatpush2.bf16.msra.mxu0 %v2401
    %2971 = vmatprep.mubr.bf16.mxu0 %v1494
    %2972 = vmatmul.mubr.bf16.gmra.mxu0 %v1493
    %v2973 = vpop.f32.mrf.mxu0
    %v2974 = vadd.f32 %v2921, %v2973
    %v2975 = vpop.f32.mrf.mxu0
    %v2976 = vadd.f32 %v2923, %v2975
    %v2977 = vpop.f32.mrf.mxu0
    %v2978 = vadd.f32 %v2925, %v2977
    %v2979 = vpop.f32.mrf.mxu0
    %v2980 = vadd.f32 %v2927, %v2979
    %2981 = vmatprep.mubr.bf16.mxu0 %v1510
    %2982 = vmatmul.mubr.bf16.gmra.mxu0 %v1509
    %v2983 = vpop.f32.mrf.mxu0
    %v2984 = vadd.f32 %v2931, %v2983
    %v2985 = vpop.f32.mrf.mxu0
    %v2986 = vadd.f32 %v2933, %v2985
    %v2987 = vpop.f32.mrf.mxu0
    %v2988 = vadd.f32 %v2935, %v2987
    %v2989 = vpop.f32.mrf.mxu0
    %v2990 = vadd.f32 %v2937, %v2989
    %2991 = vdwg.mxu0
    %2992 = vmatprep.subr.bf16.mxu0 %v2432
    %2993 = vmatpush1.bf16.msra.mxu0 %v2431
    %2994 = vmatprep.subr.bf16.mxu0 %v2430
    %2995 = vmatpush1.bf16.msra.mxu0 %v2429
    %2996 = vmatprep.subr.bf16.mxu0 %v2428
    %2997 = vmatpush1.bf16.msra.mxu0 %v2427
    %2998 = vmatprep.subr.bf16.mxu0 %v2426
    %2999 = vmatpush1.bf16.msra.mxu0 %v2425
    %3000 = vmatprep.subr.bf16.mxu0 %v2424
    %3001 = vmatpush1.bf16.msra.mxu0 %v2423
    %3002 = vmatprep.subr.bf16.mxu0 %v2422
    %3003 = vmatpush1.bf16.msra.mxu0 %v2421
    %3004 = vmatprep.subr.bf16.mxu0 %v2420
    %3005 = vmatpush1.bf16.msra.mxu0 %v2419
    %3006 = vmatprep.subr.bf16.mxu0 %v2418
    %3007 = vmatpush1.bf16.msra.mxu0 %v2417
    %3008 = vmatprep.subr.bf16.mxu0 %v2448
    %3009 = vmatpush2.bf16.msra.mxu0 %v2447
    %3010 = vmatprep.subr.bf16.mxu0 %v2446
    %3011 = vmatpush2.bf16.msra.mxu0 %v2445
    %3012 = vmatprep.subr.bf16.mxu0 %v2444
    %3013 = vmatpush2.bf16.msra.mxu0 %v2443
    %3014 = vmatprep.subr.bf16.mxu0 %v2442
    %3015 = vmatpush2.bf16.msra.mxu0 %v2441
    %3016 = vmatprep.subr.bf16.mxu0 %v2440
    %3017 = vmatpush2.bf16.msra.mxu0 %v2439
    %3018 = vmatprep.subr.bf16.mxu0 %v2438
    %3019 = vmatpush2.bf16.msra.mxu0 %v2437
    %3020 = vmatprep.subr.bf16.mxu0 %v2436
    %3021 = vmatpush2.bf16.msra.mxu0 %v2435
    %3022 = vmatprep.subr.bf16.mxu0 %v2434
    %3023 = vmatpush2.bf16.msra.mxu0 %v2433
    %3024 = vmatprep.mubr.bf16.mxu0 %v1496
    %3025 = vmatmul.mubr.bf16.gmra.mxu0 %v1495
    %v3026 = vpop.f32.mrf.mxu0
    %v3027 = vadd.f32 %v2974, %v3026
    %v3028 = vpop.f32.mrf.mxu0
    %v3029 = vadd.f32 %v2976, %v3028
    %v3030 = vpop.f32.mrf.mxu0
    %v3031 = vadd.f32 %v2978, %v3030
    %v3032 = vpop.f32.mrf.mxu0
    %v3033 = vadd.f32 %v2980, %v3032
    %3034 = vmatprep.mubr.bf16.mxu0 %v1512
    %3035 = vmatmul.mubr.bf16.gmra.mxu0 %v1511
    %v3036 = vpop.f32.mrf.mxu0
    %v3037 = vadd.f32 %v2984, %v3036
    %v3038 = vpop.f32.mrf.mxu0
    %v3039 = vadd.f32 %v2986, %v3038
    %v3040 = vpop.f32.mrf.mxu0
    %v3041 = vadd.f32 %v2988, %v3040
    %v3042 = vpop.f32.mrf.mxu0
    %v3043 = vadd.f32 %v2990, %v3042
    %3044 = vdwg.mxu0
    %3045 = vmatprep.subr.bf16.mxu0 %v2464
    %3046 = vmatpush1.bf16.msra.mxu0 %v2463
    %3047 = vmatprep.subr.bf16.mxu0 %v2462
    %3048 = vmatpush1.bf16.msra.mxu0 %v2461
    %3049 = vmatprep.subr.bf16.mxu0 %v2460
    %3050 = vmatpush1.bf16.msra.mxu0 %v2459
    %3051 = vmatprep.subr.bf16.mxu0 %v2458
    %3052 = vmatpush1.bf16.msra.mxu0 %v2457
    %3053 = vmatprep.subr.bf16.mxu0 %v2456
    %3054 = vmatpush1.bf16.msra.mxu0 %v2455
    %3055 = vmatprep.subr.bf16.mxu0 %v2454
    %3056 = vmatpush1.bf16.msra.mxu0 %v2453
    %3057 = vmatprep.subr.bf16.mxu0 %v2452
    %3058 = vmatpush1.bf16.msra.mxu0 %v2451
    %3059 = vmatprep.subr.bf16.mxu0 %v2450
    %3060 = vmatpush1.bf16.msra.mxu0 %v2449
    %3061 = vmatprep.subr.bf16.mxu0 %v2480
    %3062 = vmatpush2.bf16.msra.mxu0 %v2479
    %3063 = vmatprep.subr.bf16.mxu0 %v2478
    %3064 = vmatpush2.bf16.msra.mxu0 %v2477
    %3065 = vmatprep.subr.bf16.mxu0 %v2476
    %3066 = vmatpush2.bf16.msra.mxu0 %v2475
    %3067 = vmatprep.subr.bf16.mxu0 %v2474
    %3068 = vmatpush2.bf16.msra.mxu0 %v2473
    %3069 = vmatprep.subr.bf16.mxu0 %v2472
    %3070 = vmatpush2.bf16.msra.mxu0 %v2471
    %3071 = vmatprep.subr.bf16.mxu0 %v2470
    %3072 = vmatpush2.bf16.msra.mxu0 %v2469
    %3073 = vmatprep.subr.bf16.mxu0 %v2468
    %3074 = vmatpush2.bf16.msra.mxu0 %v2467
    %3075 = vmatprep.subr.bf16.mxu0 %v2466
    %3076 = vmatpush2.bf16.msra.mxu0 %v2465
    %3077 = vmatprep.mubr.bf16.mxu0 %v1498
    %3078 = vmatmul.mubr.bf16.gmra.mxu0 %v1497
    %v3079 = vpop.f32.mrf.mxu0
    %v3080 = vadd.f32 %v3027, %v3079
    %v3081 = vpop.f32.mrf.mxu0
    %v3082 = vadd.f32 %v3029, %v3081
    %v3083 = vpop.f32.mrf.mxu0
    %v3084 = vadd.f32 %v3031, %v3083
    %v3085 = vpop.f32.mrf.mxu0
    %v3086 = vadd.f32 %v3033, %v3085
    %3087 = vmatprep.mubr.bf16.mxu0 %v1514
    %3088 = vmatmul.mubr.bf16.gmra.mxu0 %v1513
    %v3089 = vpop.f32.mrf.mxu0
    %v3090 = vadd.f32 %v3037, %v3089
    %v3091 = vpop.f32.mrf.mxu0
    %v3092 = vadd.f32 %v3039, %v3091
    %v3093 = vpop.f32.mrf.mxu0
    %v3094 = vadd.f32 %v3041, %v3093
    %v3095 = vpop.f32.mrf.mxu0
    %v3096 = vadd.f32 %v3043, %v3095
    %3097 = vdwg.mxu0
    %3098 = vmatprep.subr.bf16.mxu0 %v2496
    %3099 = vmatpush1.bf16.msra.mxu0 %v2495
    %3100 = vmatprep.subr.bf16.mxu0 %v2494
    %3101 = vmatpush1.bf16.msra.mxu0 %v2493
    %3102 = vmatprep.subr.bf16.mxu0 %v2492
    %3103 = vmatpush1.bf16.msra.mxu0 %v2491
    %3104 = vmatprep.subr.bf16.mxu0 %v2490
    %3105 = vmatpush1.bf16.msra.mxu0 %v2489
    %3106 = vmatprep.subr.bf16.mxu0 %v2488
    %3107 = vmatpush1.bf16.msra.mxu0 %v2487
    %3108 = vmatprep.subr.bf16.mxu0 %v2486
    %3109 = vmatpush1.bf16.msra.mxu0 %v2485
    %3110 = vmatprep.subr.bf16.mxu0 %v2484
    %3111 = vmatpush1.bf16.msra.mxu0 %v2483
    %3112 = vmatprep.subr.bf16.mxu0 %v2482
    %3113 = vmatpush1.bf16.msra.mxu0 %v2481
    %3114 = vmatprep.subr.bf16.mxu0 %v2512
    %3115 = vmatpush2.bf16.msra.mxu0 %v2511
    %3116 = vmatprep.subr.bf16.mxu0 %v2510
    %3117 = vmatpush2.bf16.msra.mxu0 %v2509
    %3118 = vmatprep.subr.bf16.mxu0 %v2508
    %3119 = vmatpush2.bf16.msra.mxu0 %v2507
    %3120 = vmatprep.subr.bf16.mxu0 %v2506
    %3121 = vmatpush2.bf16.msra.mxu0 %v2505
    %3122 = vmatprep.subr.bf16.mxu0 %v2504
    %3123 = vmatpush2.bf16.msra.mxu0 %v2503
    %3124 = vmatprep.subr.bf16.mxu0 %v2502
    %3125 = vmatpush2.bf16.msra.mxu0 %v2501
    %3126 = vmatprep.subr.bf16.mxu0 %v2500
    %3127 = vmatpush2.bf16.msra.mxu0 %v2499
    %3128 = vmatprep.subr.bf16.mxu0 %v2498
    %3129 = vmatpush2.bf16.msra.mxu0 %v2497
    %3130 = vmatprep.mubr.bf16.mxu0 %v1500
    %3131 = vmatmul.mubr.bf16.gmra.mxu0 %v1499
    %v3132 = vpop.f32.mrf.mxu0
    %v3133 = vadd.f32 %v3080, %v3132
    %v3134 = vpop.f32.mrf.mxu0
    %v3135 = vadd.f32 %v3082, %v3134
    %v3136 = vpop.f32.mrf.mxu0
    %v3137 = vadd.f32 %v3084, %v3136
    %v3138 = vpop.f32.mrf.mxu0
    %v3139 = vadd.f32 %v3086, %v3138
    %3140 = vmatprep.mubr.bf16.mxu0 %v1516
    %3141 = vmatmul.mubr.bf16.gmra.mxu0 %v1515
    %v3142 = vpop.f32.mrf.mxu0
    %v3143 = vadd.f32 %v3090, %v3142
    %v3144 = vpop.f32.mrf.mxu0
    %v3145 = vadd.f32 %v3092, %v3144
    %v3146 = vpop.f32.mrf.mxu0
    %v3147 = vadd.f32 %v3094, %v3146
    %v3148 = vpop.f32.mrf.mxu0
    %v3149 = vadd.f32 %v3096, %v3148
    %3150 = vdwg.mxu0
    %3151 = vmatprep.subr.bf16.mxu0 %v2528
    %3152 = vmatpush1.bf16.msra.mxu0 %v2527
    %3153 = vmatprep.subr.bf16.mxu0 %v2526
    %3154 = vmatpush1.bf16.msra.mxu0 %v2525
    %3155 = vmatprep.subr.bf16.mxu0 %v2524
    %3156 = vmatpush1.bf16.msra.mxu0 %v2523
    %3157 = vmatprep.subr.bf16.mxu0 %v2522
    %3158 = vmatpush1.bf16.msra.mxu0 %v2521
    %3159 = vmatprep.subr.bf16.mxu0 %v2520
    %3160 = vmatpush1.bf16.msra.mxu0 %v2519
    %3161 = vmatprep.subr.bf16.mxu0 %v2518
    %3162 = vmatpush1.bf16.msra.mxu0 %v2517
    %3163 = vmatprep.subr.bf16.mxu0 %v2516
    %3164 = vmatpush1.bf16.msra.mxu0 %v2515
    %3165 = vmatprep.subr.bf16.mxu0 %v2514
    %3166 = vmatpush1.bf16.msra.mxu0 %v2513
    %3167 = vmatprep.subr.bf16.mxu0 %v2544
    %3168 = vmatpush2.bf16.msra.mxu0 %v2543
    %3169 = vmatprep.subr.bf16.mxu0 %v2542
    %3170 = vmatpush2.bf16.msra.mxu0 %v2541
    %3171 = vmatprep.subr.bf16.mxu0 %v2540
    %3172 = vmatpush2.bf16.msra.mxu0 %v2539
    %3173 = vmatprep.subr.bf16.mxu0 %v2538
    %3174 = vmatpush2.bf16.msra.mxu0 %v2537
    %3175 = vmatprep.subr.bf16.mxu0 %v2536
    %3176 = vmatpush2.bf16.msra.mxu0 %v2535
    %3177 = vmatprep.subr.bf16.mxu0 %v2534
    %3178 = vmatpush2.bf16.msra.mxu0 %v2533
    %3179 = vmatprep.subr.bf16.mxu0 %v2532
    %3180 = vmatpush2.bf16.msra.mxu0 %v2531
    %3181 = vmatprep.subr.bf16.mxu0 %v2530
    %3182 = vmatpush2.bf16.msra.mxu0 %v2529
    %3183 = vmatprep.mubr.bf16.mxu0 %v1502
    %3184 = vmatmul.mubr.bf16.gmra.mxu0 %v1501
    %v3185 = vpop.f32.mrf.mxu0
    %v3186 = vadd.f32 %v3133, %v3185
    %v3187 = vpop.f32.mrf.mxu0
    %v3188 = vadd.f32 %v3135, %v3187
    %v3189 = vpop.f32.mrf.mxu0
    %v3190 = vadd.f32 %v3137, %v3189
    %v3191 = vpop.f32.mrf.mxu0
    %v3192 = vadd.f32 %v3139, %v3191
    %3193 = vmatprep.mubr.bf16.mxu0 %v1518
    %3194 = vmatmul.mubr.bf16.gmra.mxu0 %v1517
    %v3195 = vpop.f32.mrf.mxu0
    %v3196 = vadd.f32 %v3143, %v3195
    %v3197 = vpop.f32.mrf.mxu0
    %v3198 = vadd.f32 %v3145, %v3197
    %v3199 = vpop.f32.mrf.mxu0
    %v3200 = vadd.f32 %v3147, %v3199
    %v3201 = vpop.f32.mrf.mxu0
    %v3202 = vadd.f32 %v3149, %v3201
    %3203 = vdwg.mxu0
    %3204 = vmatprep.subr.bf16.mxu0 %v2560
    %3205 = vmatpush1.bf16.msra.mxu0 %v2559
    %3206 = vmatprep.subr.bf16.mxu0 %v2558
    %3207 = vmatpush1.bf16.msra.mxu0 %v2557
    %3208 = vmatprep.subr.bf16.mxu0 %v2556
    %3209 = vmatpush1.bf16.msra.mxu0 %v2555
    %3210 = vmatprep.subr.bf16.mxu0 %v2554
    %3211 = vmatpush1.bf16.msra.mxu0 %v2553
    %3212 = vmatprep.subr.bf16.mxu0 %v2552
    %3213 = vmatpush1.bf16.msra.mxu0 %v2551
    %3214 = vmatprep.subr.bf16.mxu0 %v2550
    %3215 = vmatpush1.bf16.msra.mxu0 %v2549
    %3216 = vmatprep.subr.bf16.mxu0 %v2548
    %3217 = vmatpush1.bf16.msra.mxu0 %v2547
    %3218 = vmatprep.subr.bf16.mxu0 %v2546
    %3219 = vmatpush1.bf16.msra.mxu0 %v2545
    %3220 = vmatprep.subr.bf16.mxu0 %v2576
    %3221 = vmatpush2.bf16.msra.mxu0 %v2575
    %3222 = vmatprep.subr.bf16.mxu0 %v2574
    %3223 = vmatpush2.bf16.msra.mxu0 %v2573
    %3224 = vmatprep.subr.bf16.mxu0 %v2572
    %3225 = vmatpush2.bf16.msra.mxu0 %v2571
    %3226 = vmatprep.subr.bf16.mxu0 %v2570
    %3227 = vmatpush2.bf16.msra.mxu0 %v2569
    %3228 = vmatprep.subr.bf16.mxu0 %v2568
    %3229 = vmatpush2.bf16.msra.mxu0 %v2567
    %3230 = vmatprep.subr.bf16.mxu0 %v2566
    %3231 = vmatpush2.bf16.msra.mxu0 %v2565
    %3232 = vmatprep.subr.bf16.mxu0 %v2564
    %3233 = vmatpush2.bf16.msra.mxu0 %v2563
    %3234 = vmatprep.subr.bf16.mxu0 %v2562
    %3235 = vmatpush2.bf16.msra.mxu0 %v2561
    %3236 = vmatprep.mubr.bf16.mxu0 %v1504
    %3237 = vmatmul.mubr.bf16.gmra.mxu0 %v1503
    %v3238 = vpop.f32.mrf.mxu0
    %v3239 = vadd.f32 %v3186, %v3238
    %v3240 = vpop.f32.mrf.mxu0
    %v3241 = vadd.f32 %v3188, %v3240
    %v3242 = vpop.f32.mrf.mxu0
    %v3243 = vadd.f32 %v3190, %v3242
    %v3244 = vpop.f32.mrf.mxu0
    %v3245 = vadd.f32 %v3192, %v3244
    %3246 = vmatprep.mubr.bf16.mxu0 %v1520
    %3247 = vmatmul.mubr.bf16.gmra.mxu0 %v1519
    %v3248 = vpop.f32.mrf.mxu0
    %v3249 = vadd.f32 %v3196, %v3248
    %v3250 = vpop.f32.mrf.mxu0
    %v3251 = vadd.f32 %v3198, %v3250
    %v3252 = vpop.f32.mrf.mxu0
    %v3253 = vadd.f32 %v3200, %v3252
    %v3254 = vpop.f32.mrf.mxu0
    %v3255 = vadd.f32 %v3202, %v3254
    %3256 = vdwg.mxu0
    %v3257 = vadd.f32 %v3239, %v3243
    %v3258 = vadd.f32 %v3257, %v3249
    %v3259 = vadd.f32 %v3258, %v3253
    %v3260 = vrot.slane %v3259, 4
    %v3261 = vadd.f32 %v3259, %v3260
    %v3262 = vrot.slane %v3261, 2
    %v3263 = vadd.f32 %v3261, %v3262
    %v3264 = vrot.slane %v3263, 1
    %v3265 = vadd.f32 %v3263, %v3264
    %v3266 = vadd.f32 %v3241, %v3245
    %v3267 = vadd.f32 %v3266, %v3251
    %v3268 = vadd.f32 %v3267, %v3255
    %v3269 = vrot.slane %v3268, 4
    %v3270 = vadd.f32 %v3268, %v3269
    %v3271 = vrot.slane %v3270, 2
    %v3272 = vadd.f32 %v3270, %v3271
    %v3273 = vrot.slane %v3272, 1
    %v3274 = vadd.f32 %v3272, %v3273
    %v3275 = vrcp.pop 32.0
    %v3276 = vmul.f32 %v3265, %v3275
    %v3277 = vmul.f32 %v3274, %v3275
    %v3278 = vmul.f32 %v3239, %v3239
    %v3279 = vmul.f32 %v3241, %v3241
    %v3280 = vmul.f32 %v3243, %v3243
    %v3281 = vmul.f32 %v3245, %v3245
    %v3282 = vmul.f32 %v3249, %v3249
    %v3283 = vmul.f32 %v3251, %v3251
    %v3284 = vmul.f32 %v3253, %v3253
    %v3285 = vmul.f32 %v3255, %v3255
    %v3286 = vadd.f32 %v3278, %v3280
    %v3287 = vadd.f32 %v3286, %v3282
    %v3288 = vadd.f32 %v3287, %v3284
    %v3289 = vrot.slane %v3288, 4
    %v3290 = vadd.f32 %v3288, %v3289
    %v3291 = vrot.slane %v3290, 2
    %v3292 = vadd.f32 %v3290, %v3291
    %v3293 = vrot.slane %v3292, 1
    %v3294 = vadd.f32 %v3292, %v3293
    %v3295 = vadd.f32 %v3279, %v3281
    %v3296 = vadd.f32 %v3295, %v3283
    %v3297 = vadd.f32 %v3296, %v3285
    %v3298 = vrot.slane %v3297, 4
    %v3299 = vadd.f32 %v3297, %v3298
    %v3300 = vrot.slane %v3299, 2
    %v3301 = vadd.f32 %v3299, %v3300
    %v3302 = vrot.slane %v3301, 1
    %v3303 = vadd.f32 %v3301, %v3302
    %v3304 = vmul.f32 %v3294, %v3275
    %v3305 = vmul.f32 %v3303, %v3275
    %v3306 = vmul.f32 %v3276, %v3276
    %v3307 = vmul.f32 %v3277, %v3277
    %v3308 = vsub.f32 %v3304, %v3306
    %v3309 = vsub.f32 %v3305, %v3307
    %v3310 = vsub.f32 %v3239, %v3276
    %v3311 = vsub.f32 %v3241, %v3277
    %v3312 = vsub.f32 %v3243, %v3276
    %v3313 = vsub.f32 %v3245, %v3277
    %v3314 = vsub.f32 %v3249, %v3276
    %v3315 = vsub.f32 %v3251, %v3277
    %v3316 = vsub.f32 %v3253, %v3276
    %v3317 = vsub.f32 %v3255, %v3277
    %v3318 = vadd.f32 %v3308, 1e-05
    %v3319 = vadd.f32 %v3309, 1e-05
    %v3320 = vrsqrt.pop %v3318
    %v3321 = vrsqrt.pop %v3319
    %v3322 = vmul.f32 %v3310, %v3320
    %v3323 = vmul.f32 %v3311, %v3321
    %v3324 = vmul.f32 %v3312, %v3320
    %v3325 = vmul.f32 %v3313, %v3321
    %v3326 = vmul.f32 %v3314, %v3320
    %v3327 = vmul.f32 %v3315, %v3321
    %v3328 = vmul.f32 %v3316, %v3320
    %v3329 = vmul.f32 %v3317, %v3321
    %v3330 = vmax.f32 %v3322, 0.0
    %v3331 = vmax.f32 %v3323, 0.0
    %v3332 = vmax.f32 %v3324, 0.0
    %v3333 = vmax.f32 %v3325, 0.0
    %v3334 = vmax.f32 %v3326, 0.0
    %v3335 = vmax.f32 %v3327, 0.0
    %v3336 = vmax.f32 %v3328, 0.0
    %v3337 = vmax.f32 %v3329, 0.0
    %v3338 = vld [vmem:[%s5] sm:$0xff]
    %v3339 = vld [vmem:[%s5 + $0x8] sm:$0xff]
    %v3340 = vld [vmem:[%s5 + $0x10] sm:$0xff]
    %v3341 = vld [vmem:[%s5 + $0x18] sm:$0xff]
    %v3342 = vmul.f32 %v3330, %v3338
    %v3343 = vmul.f32 %v3331, %v3339
    %v3344 = vmul.f32 %v3332, %v3340
    %v3345 = vmul.f32 %v3333, %v3341
    %v3346 = vmul.f32 %v3334, %v3338
    %v3347 = vmul.f32 %v3335, %v3339
    %v3348 = vmul.f32 %v3336, %v3340
    %v3349 = vmul.f32 %v3337, %v3341
    %v3350 = vadd.f32 %v3342, %v3344
    %v3351 = vrot.slane %v3350, 4
    %v3352 = vadd.f32 %v3350, %v3351
    %v3353 = vrot.slane %v3352, 2
    %v3354 = vadd.f32 %v3352, %v3353
    %v3355 = vrot.slane %v3354, 1
    %v3356 = vadd.f32 %v3354, %v3355
    %v3357 = vadd.f32 %v3343, %v3345
    %v3358 = vrot.slane %v3357, 4
    %v3359 = vadd.f32 %v3357, %v3358
    %v3360 = vrot.slane %v3359, 2
    %v3361 = vadd.f32 %v3359, %v3360
    %v3362 = vrot.slane %v3361, 1
    %v3363 = vadd.f32 %v3361, %v3362
    %v3364 = vadd.f32 %v3346, %v3348
    %v3365 = vrot.slane %v3364, 4
    %v3366 = vadd.f32 %v3364, %v3365
    %v3367 = vrot.slane %v3366, 2
    %v3368 = vadd.f32 %v3366, %v3367
    %v3369 = vrot.slane %v3368, 1
    %v3370 = vadd.f32 %v3368, %v3369
    %v3371 = vadd.f32 %v3347, %v3349
    %v3372 = vrot.slane %v3371, 4
    %v3373 = vadd.f32 %v3371, %v3372
    %v3374 = vrot.slane %v3373, 2
    %v3375 = vadd.f32 %v3373, %v3374
    %v3376 = vrot.slane %v3375, 1
    %v3377 = vadd.f32 %v3375, %v3376
    %vm3382 = vcmask 1041409
    %v3383 = vsel %vm3382, %v3370, %v3356
    %v3384 = vsel %vm3382, %v3377, %v3363
    %vm3387 = vcmask 1041408
    %v3388 = vsel %vm3387, %v3383, 0.0
    %v3389 = vsel %vm3387, %v3384, 0.0
    %v3390 = vadd.f32 %v3388, %v3389
    %3391 = vadd.xlane.f32.xlu0 %v3390
    %v3392 = vpop.xlane.xlu0 %3391
    %v3393 = vld [vmem:[#allocation4] sm:$0x1]
    %v3395 = vlaneseq
    %v3396 = vshrl.u32 %v3395, 7
    %v3397 = vsub.s32 0, %v3396
    %v3398 = vrot.slane %v3393, %v3397
    %v3400 = vadd.f32 %v3392, %v3398
    %vm3401 = vcmask 1024
    %3402 = vst.msk [vmem:[%s7] sm:$0x3] %vm3401, %v3400
    // Predicated region
    $region34: #{pressure_decoder.1} parent=1 // pred_check
      _
    $region35: #{pressure_decoder.1} parent=1 // pred_check_branch
      %3404 = sbr.rel (0) target = $region37
    $region36: #{pressure_decoder.1} parent=1 // pred_region
      _
    $region37: #{pressure_decoder.1} parent=1 // pred_fallthru
      _
    // Predicated region
    $region38: #{pressure_decoder.1} parent=1 // pred_check
      _
    $region39: #{pressure_decoder.1} parent=1 // pred_check_branch
      %3406 = sbr.rel (0) target = $region41
    $region40: #{pressure_decoder.1} parent=1 // pred_region
      _
    $region41: #{pressure_decoder.1} parent=1 // pred_fallthru
      _
    %3407 = vsyncpa [#allocation6], 1

</llo_original>
